<compile_context>
chip_gen: v6e
topology: v6e:2x2x1
jax: 0.10.0
libtpu: 0.0.40
codegen_flags: <defaults>
</compile_context>

<pallas_src>
import functools

import jax
import jax.numpy as jnp
from jax import lax
from jax.experimental import pallas as pl
from jax.experimental.pallas import tpu as pltpu


def _round_up(x, m):
    return (x + m - 1) // m * m


def _pick_row_tile(rows, row_bytes, target_bytes):
    """Largest multiple-of-8 divisor of `rows` whose tile stays <= target_bytes.
    Falls back to `rows` itself for tiny / indivisible sizes (still correct)."""
    max_rows = max(8, target_bytes // max(1, row_bytes))
    best = None
    cand = 8
    while cand <= min(rows, max_rows):
        if rows % cand == 0:
            best = cand
        cand += 8
    return best if best is not None else rows


def _vmem_limit_bytes():
    # Per-generation scoped-VMEM limit: raise on 128 MiB chips (v5e/v6e), stay
    # conservative on v7x's 64 MiB.  Falls back to 64 MiB if the query is unavailable.
    try:
        cap = int(getattr(pltpu.get_tpu_info(), "vmem_capacity_bytes"))
    except Exception:  # noqa: BLE001 - query is best-effort
        return 64 * 1024 * 1024
    return int(min(100 * 1024 * 1024, max(32 * 1024 * 1024, (cap * 3) // 4)))


# ----------------------------------------------------------------------------- #
# Kernel A: (optional fused MaxPool2d(2)) + Conv2d(3x3, pad=1) + bias
#           + per-tile per-channel sum / sum-of-squares for BatchNorm batch stats.
#           Row-tiled over the output; the source image is resident across tiles.
# ----------------------------------------------------------------------------- #
def _conv_stats_kernel(x_ref, w_ref, b_ref, y_ref, sum_ref, sq_ref, *, pool):
    # x_ref   : (1, Hin, Win, Cin)   bf16  whole (pre-pool) image, resident across t
    # w_ref   : (9, Cin, Coutp)      bf16  HWIO weights, tap-major (k = 3*dy + dx)
    # b_ref   : (1, Coutp)           f32
    # y_ref   : (1, TH, W, Coutp)    bf16  conv+bias activation tile
    # sum_ref : (1, 1, 1, Coutp)     f32   per-tile BN partial sum
    # sq_ref  : (1, 1, 1, Coutp)     f32   per-tile BN partial sum of squares
    t = pl.program_id(1)
    num_t = pl.num_programs(1)
    TH, W, coutp = y_ref.shape[1], y_ref.shape[2], y_ref.shape[3]
    cin = x_ref.shape[3]
    hin = x_ref.shape[1]
    r0 = t * TH                      # first output row of this tile

    def pool2(v):                    # (2r, 2c, Cin) -> (r, c, Cin), all bf16
        vh = jnp.maximum(v[0::2], v[1::2])
        return jnp.maximum(vh[:, 0::2, :], vh[:, 1::2, :])

    # Tile interior + 1-row halos, built from the resident image in bf16.  Halo loads
    # are clamped into range and zeroed when the tile touches the image border.
    if pool:
        center = pool2(x_ref[0, pl.ds(2 * r0, 2 * TH)])
        top = pool2(x_ref[0, pl.ds(jnp.maximum(2 * r0 - 2, 0), 2)])
        bot = pool2(x_ref[0, pl.ds(jnp.minimum(2 * (r0 + TH), hin - 2), 2)])
    else:
        center = x_ref[0, pl.ds(r0, TH)]
        top = x_ref[0, pl.ds(jnp.maximum(r0 - 1, 0), 1)]
        bot = x_ref[0, pl.ds(jnp.minimum(r0 + TH, hin - 1), 1)]

    top = jnp.where(t == 0, jnp.zeros_like(top), top)
    bot = jnp.where(t == num_t - 1, jnp.zeros_like(bot), bot)

    # (TH+2, W+16, Cin) bf16 halo window: rows via a leading-axis concat, columns via
    # 8-wide zero blocks (original column c lives at window column 8 + c).
    win = jnp.concatenate([top, center, bot], axis=0)
    zc = jnp.zeros((TH + 2, 8, cin), win.dtype)
    win = jnp.concatenate([zc, win, zc], axis=1)

    # 9 accumulating MXU dots (no im2col materialization).  dy row-shifts are free
    # leading-axis slices; dx column-shifts are small sublane-offset slices.
    acc = jnp.zeros((TH * W, coutp), jnp.float32)
    for dy in range(3):
        rows = win[dy:dy + TH]
        for dx in range(3):
            tap = rows[:, 7 + dx:7 + dx + W, :].reshape(TH * W, cin)
            acc = acc + jnp.dot(tap, w_ref[3 * dy + dx],
                                preferred_element_type=jnp.float32)
    acc = acc + b_ref[...]

    y_ref[0] = acc.reshape(TH, W, coutp).astype(y_ref.dtype)

    # Fused BatchNorm partial statistics (reduced across (N, tiles) in the wrapper),
    # so the activation is never re-read from HBM just to compute mean/var.
    sum_ref[0, 0] = jnp.sum(acc, axis=0, keepdims=True)
    sq_ref[0, 0] = jnp.sum(acc * acc, axis=0, keepdims=True)


# ----------------------------------------------------------------------------- #
# Kernel B: folded BatchNorm affine + ReLU, large row tiles, un-padded channel out.
# ----------------------------------------------------------------------------- #
def _bn_relu_kernel(y_ref, scale_ref, shift_ref, o_ref):
    # y_ref: (1, TB, W, Coutp) bf16   scale/shift: (1, out_c) f32   o_ref: (1, TB, W, out_c) f32
    out_c = o_ref.shape[3]
    y = y_ref[0][:, :, :out_c].astype(jnp.float32)
    o_ref[0] = jnp.maximum(y * scale_ref[...] + shift_ref[...], 0.0)


# ----------------------------------------------------------------------------- #
# Wrapper
# ----------------------------------------------------------------------------- #
def init_conv_block_params(key, in_c, out_c, size=3):
    # PyTorch-style fan_in uniform init for Conv2d; gamma=1 / beta=0 for BatchNorm2d.
    kw, kb = jax.random.split(key)
    fan_in = in_c * size * size
    bound = 1.0 / jnp.sqrt(fan_in)
    w_oihw = jax.random.uniform(kw, (out_c, in_c, size, size),
                                jnp.float32, -bound, bound)
    b = jax.random.uniform(kb, (out_c,), jnp.float32, -bound, bound)
    return {"w": w_oihw, "b": b,
            "gamma": jnp.ones((out_c,), jnp.float32),
            "beta": jnp.zeros((out_c,), jnp.float32)}


@functools.partial(jax.jit, static_argnames=("pool",))
def conv_block_forward(x_nchw, params, pool=False):
    # x_nchw: (N, C_in, H, W) f32  ->  (N, C_out, H', W') f32
    w_oihw, b = params["w"], params["b"]
    gamma, beta = params["gamma"], params["beta"]
    out_c, in_c = w_oihw.shape[0], w_oihw.shape[1]
    N, _, H0, W0 = x_nchw.shape

    cout_p = _round_up(out_c, 128)   # lane-dense MXU N / intermediate activation
    vmem_limit = _vmem_limit_bytes()

    # NCHW -> NHWC bf16; real Cin is kept (no channel-pad pass in HBM).
    x = jnp.transpose(x_nchw, (0, 2, 3, 1)).astype(jnp.bfloat16)
    if pool and (H0 % 2 or W0 % 2):  # MaxPool2d(2) floors odd spatial dims
        x = x[:, :(H0 // 2) * 2, :(W0 // 2) * 2, :]
    Hin, Win = x.shape[1], x.shape[2]
    H, W = (Hin // 2, Win // 2) if pool else (Hin, Win)

    # Weight prep (one-time per-parameter work): OIHW -> HWIO -> pad Cout -> (9, Cin, Coutp).
    w = jnp.transpose(w_oihw, (2, 3, 1, 0)).astype(jnp.bfloat16)
    w = jnp.pad(w, ((0, 0), (0, 0), (0, 0), (0, cout_p - out_c)))
    w2 = w.reshape(9, in_c, cout_p)
    b2 = jnp.pad(b.astype(jnp.float32), (0, cout_p - out_c)).reshape(1, cout_p)

    # Row tile for kernel A: bounds the f32 accumulator / taps to a few MiB.
    # NOTE: the (pre-pool) image itself stays VMEM-resident across row tiles; for
    # extremely large images it would additionally need input tiling with a manual
    # halo DMA (memory_space=pl.ANY + make_async_copy).
    th = _pick_row_tile(H, W * cout_p * 4, 4 * 1024 * 1024)
    num_t = H // th

    # ---- Kernel A: fused (pool) + conv3x3 + bias + BN partial stats -------------- #
    y, ysum, ysq = pl.pallas_call(
        functools.partial(_conv_stats_kernel, pool=pool),
        out_shape=(jax.ShapeDtypeStruct((N, H, W, cout_p), jnp.bfloat16),
                   jax.ShapeDtypeStruct((N, num_t, 1, cout_p), jnp.float32),
                   jax.ShapeDtypeStruct((N, num_t, 1, cout_p), jnp.float32)),
        grid=(N, num_t),
        in_specs=[
            pl.BlockSpec((1, Hin, Win, in_c), lambda n, t: (n, 0, 0, 0)),  # resident per n
            pl.BlockSpec((9, in_c, cout_p), lambda n, t: (0, 0, 0)),
            pl.BlockSpec((1, cout_p), lambda n, t: (0, 0)),
        ],
        out_specs=(
            pl.BlockSpec((1, th, W, cout_p), lambda n, t: (n, t, 0, 0)),
            pl.BlockSpec((1, 1, 1, cout_p), lambda n, t: (n, t, 0, 0)),
            pl.BlockSpec((1, 1, 1, cout_p), lambda n, t: (n, t, 0, 0)),
        ),
        compiler_params=pltpu.CompilerParams(
            dimension_semantics=("parallel", "parallel"),
            vmem_limit_bytes=vmem_limit),
    )(x, w2, b2)

    # ---- BatchNorm2d training-mode batch statistics (tiny f32 math in XLA) ------ #
    # Stats come from the f32 accumulator; the normalization is applied to the
    # bf16-rounded activation read back from HBM (intentional, within tolerance).
    count = float(N * H * W)
    mean = jnp.sum(ysum, axis=(0, 1, 2))[:out_c] / count
    var = jnp.maximum(jnp.sum(ysq, axis=(0, 1, 2))[:out_c] / count - mean * mean, 0.0)
    scale = gamma.astype(jnp.float32) * lax.rsqrt(var + 1e-5)     # folded BN affine
    shift = beta.astype(jnp.float32) - mean * scale
    # TODO(synk): nn.BatchNorm2d in train mode also updates running_mean/running_var
    # buffers; forward output uses batch stats (reproduced here), buffers not emitted.

    # ---- Kernel B: BN-apply + ReLU, large lane-dense tiles, un-padded channels --- #
    tb = _pick_row_tile(H, W * cout_p * 4, 8 * 1024 * 1024)
    out_nhwc = pl.pallas_call(
        _bn_relu_kernel,
        out_shape=jax.ShapeDtypeStruct((N, H, W, out_c), jnp.float32),
        grid=(N, H // tb),
        in_specs=[
            pl.BlockSpec((1, tb, W, cout_p), lambda n, t: (n, t, 0, 0)),
            pl.BlockSpec((1, out_c), lambda n, t: (0, 0)),
            pl.BlockSpec((1, out_c), lambda n, t: (0, 0)),
        ],
        out_specs=pl.BlockSpec((1, tb, W, out_c), lambda n, t: (n, t, 0, 0)),
        compiler_params=pltpu.CompilerParams(
            dimension_semantics=("parallel", "parallel"),
            vmem_limit_bytes=vmem_limit),
    )(y, scale.reshape(1, out_c), shift.reshape(1, out_c))

    # Final NHWC -> NCHW to preserve the PyTorch module's output layout.  This is the
    # one remaining XLA HBM pass on the output; return NHWC here if the consumer allows.
    return jnp.transpose(out_nhwc, (0, 3, 1, 2))


# ----------------------------------------------------------------------------- #
# Pure-JAX reference (matches the kernel's bf16 input/weight rounding).
# ----------------------------------------------------------------------------- #
def _reference_forward(x_nchw, params, pool):
    x = x_nchw.astype(jnp.bfloat16).astype(jnp.float32)
    if pool:
        n, c, h, w = x.shape
        h2, w2 = (h // 2) * 2, (w // 2) * 2
        x = x[:, :, :h2, :w2].reshape(n, c, h2 // 2, 2, w2 // 2, 2).max(axis=(3, 5))
    w_ = params["w"].astype(jnp.bfloat16).astype(jnp.float32)
    y = lax.conv_general_dilated(
        x, w_, window_strides=(1, 1), padding=((1, 1), (1, 1)),
        dimension_numbers=("NCHW", "OIHW", "NCHW"))
    y = y + params["b"][None, :, None, None]
    mean = jnp.mean(y, axis=(0, 2, 3), keepdims=True)
    var = jnp.mean((y - mean) ** 2, axis=(0, 2, 3), keepdims=True)
    out = (y - mean) * lax.rsqrt(var + 1e-5)
    out = out * params["gamma"][None, :, None, None] + params["beta"][None, :, None, None]
    return jnp.maximum(out, 0.0)


if __name__ == "__main__":
    key = jax.random.PRNGKey(0)
    k_x, k_p = jax.random.split(key)

    N, in_c, H, W = 2, 4, 16, 16
    out_c = 8
    x = jax.random.normal(k_x, (N, in_c, H, W), jnp.float32)
    params = init_conv_block_params(k_p, in_c, out_c, size=3)

    out = jax.block_until_ready(conv_block_forward(x, params, pool=False))
    assert out.shape == (N, out_c, H, W)
    ref = _reference_forward(x, params, False)
    err = float(jnp.max(jnp.abs(out - ref)))
    assert err < 5e-2, f"pool=False max abs err {err}"   # bf16 activation storage tolerance

    out_pool = jax.block_until_ready(conv_block_forward(x, params, pool=True))
    assert out_pool.shape == (N, out_c, H // 2, W // 2)
    ref_pool = _reference_forward(x, params, True)
    err_pool = float(jnp.max(jnp.abs(out_pool - ref_pool)))
    assert err_pool < 5e-2, f"pool=True max abs err {err_pool}"

    print("KERNEL_OK")
</pallas_src>

<mosaic_0001>
module attributes {stable_mosaic.version = 11 : i64} {
  func.func @_conv_stats_kernel(%arg0: i32, %arg1: i32, %arg2: memref<1x16x16x4xbf16, #tpu.memory_space<vmem>>, %arg3: memref<9x4x128xbf16, #tpu.memory_space<vmem>>, %arg4: memref<1x128xf32, #tpu.memory_space<vmem>>, %arg5: memref<1x16x16x128xbf16, #tpu.memory_space<vmem>>, %arg6: memref<1x1x1x128xf32, #tpu.memory_space<vmem>>, %arg7: memref<1x1x1x128xf32, #tpu.memory_space<vmem>>) attributes {dimension_semantics = [#tpu.dimension_semantics<parallel>, #tpu.dimension_semantics<parallel>], iteration_bounds = array<i64: 2, 1>, scalar_prefetch = 0 : i64, scratch_operands = 0 : i64, tpu.core_type = #tpu.core_type<tc>, window_params = [{transform_indices = @transform_0, window_bounds = array<i64: 1, 16, 16, 4>}, {pipeline_mode = #tpu.pipeline_mode<synchronous>, transform_indices = @transform_1, window_bounds = array<i64: 9, 4, 128>}, {pipeline_mode = #tpu.pipeline_mode<synchronous>, transform_indices = @transform_2, window_bounds = array<i64: 1, 128>}, {transform_indices = @transform_3, window_bounds = array<i64: 1, 16, 16, 128>}, {transform_indices = @transform_4, window_bounds = array<i64: 1, 1, 1, 128>}, {transform_indices = @transform_5, window_bounds = array<i64: 1, 1, 1, 128>}]} {
    %c16_i32 = arith.constant 16 : i32
    %0 = arith.muli %arg1, %c16_i32 : i32
    %c0 = arith.constant 0 : index
    %1 = arith.index_cast %0 : i32 to index
    %c0_0 = arith.constant 0 : index
    %c0_1 = arith.constant 0 : index
    %2 = vector.load %arg2[%c0, %1, %c0_0, %c0_1] : memref<1x16x16x4xbf16, #tpu.memory_space<vmem>>, vector<1x16x16x4xbf16>
    %3 = vector.shape_cast %2 : vector<1x16x16x4xbf16> to vector<16x16x4xbf16>
    %c1_i32 = arith.constant 1 : i32
    %4 = arith.subi %0, %c1_i32 : i32
    %c0_i32 = arith.constant 0 : i32
    %5 = arith.maxsi %4, %c0_i32 : i32
    %c0_2 = arith.constant 0 : index
    %6 = arith.index_cast %5 : i32 to index
    %c0_3 = arith.constant 0 : index
    %c0_4 = arith.constant 0 : index
    %7 = vector.load %arg2[%c0_2, %6, %c0_3, %c0_4] : memref<1x16x16x4xbf16, #tpu.memory_space<vmem>>, vector<1x1x16x4xbf16>
    %8 = vector.shape_cast %7 : vector<1x1x16x4xbf16> to vector<1x16x4xbf16>
    %c16_i32_5 = arith.constant 16 : i32
    %9 = arith.addi %0, %c16_i32_5 : i32
    %c15_i32 = arith.constant 15 : i32
    %10 = arith.minsi %9, %c15_i32 : i32
    %c0_6 = arith.constant 0 : index
    %11 = arith.index_cast %10 : i32 to index
    %c0_7 = arith.constant 0 : index
    %c0_8 = arith.constant 0 : index
    %12 = vector.load %arg2[%c0_6, %11, %c0_7, %c0_8] : memref<1x16x16x4xbf16, #tpu.memory_space<vmem>>, vector<1x1x16x4xbf16>
    %13 = vector.shape_cast %12 : vector<1x1x16x4xbf16> to vector<1x16x4xbf16>
    %c0_i32_9 = arith.constant 0 : i32
    %14 = arith.cmpi eq, %arg1, %c0_i32_9 : i32
    %cst = arith.constant 0.000000e+00 : bf16
    %15 = vector.broadcast %cst : bf16 to vector<1x16x4xbf16>
    %16 = arith.select %14, %15, %8 : vector<1x16x4xbf16>
    %c0_i32_10 = arith.constant 0 : i32
    %17 = arith.cmpi eq, %arg1, %c0_i32_10 : i32
    %cst_11 = arith.constant 0.000000e+00 : bf16
    %18 = vector.broadcast %cst_11 : bf16 to vector<1x16x4xbf16>
    %19 = arith.select %17, %18, %13 : vector<1x16x4xbf16>
    %20 = tpu.concatenate %16, %3, %19 in 0 : vector<1x16x4xbf16>, vector<16x16x4xbf16>, vector<1x16x4xbf16> -> vector<18x16x4xbf16>
    %cst_12 = arith.constant 0.000000e+00 : bf16
    %21 = vector.broadcast %cst_12 : bf16 to vector<18x8x4xbf16>
    %22 = tpu.concatenate %21, %20, %21 in 1 : vector<18x8x4xbf16>, vector<18x16x4xbf16>, vector<18x8x4xbf16> -> vector<18x32x4xbf16>
    %cst_13 = arith.constant 0.000000e+00 : f32
    %23 = vector.broadcast %cst_13 : f32 to vector<256x128xf32>
    %24 = vector.extract_strided_slice %22 {offsets = [0, 0, 0], sizes = [16, 32, 4], strides = [1, 1, 1]} : vector<18x32x4xbf16> to vector<16x32x4xbf16>
    %25 = vector.extract_strided_slice %24 {offsets = [0, 7, 0], sizes = [16, 16, 4], strides = [1, 1, 1]} : vector<16x32x4xbf16> to vector<16x16x4xbf16>
    %26 = vector.shape_cast %25 : vector<16x16x4xbf16> to vector<256x4xbf16>
    %c0_14 = arith.constant 0 : index
    %c0_15 = arith.constant 0 : index
    %c0_16 = arith.constant 0 : index
    %27 = vector.load %arg3[%c0_14, %c0_15, %c0_16] : memref<9x4x128xbf16, #tpu.memory_space<vmem>>, vector<1x4x128xbf16>
    %28 = vector.shape_cast %27 : vector<1x4x128xbf16> to vector<4x128xbf16>
    %cst_17 = arith.constant dense<0.000000e+00> : vector<256x128xf32>
    %29 = tpu.matmul %26, %28, %cst_17 {dimension_numbers = #tpu.dot_dimension_numbers<[1], [0], [0], [1], [0, 0, 1, 1], [], []>} : vector<256x4xbf16>, vector<4x128xbf16>, vector<256x128xf32> -> vector<256x128xf32>
    %30 = arith.addf %23, %29 : vector<256x128xf32>
    %31 = vector.extract_strided_slice %24 {offsets = [0, 8, 0], sizes = [16, 16, 4], strides = [1, 1, 1]} : vector<16x32x4xbf16> to vector<16x16x4xbf16>
    %32 = vector.shape_cast %31 : vector<16x16x4xbf16> to vector<256x4xbf16>
    %c1 = arith.constant 1 : index
    %c0_18 = arith.constant 0 : index
    %c0_19 = arith.constant 0 : index
    %33 = vector.load %arg3[%c1, %c0_18, %c0_19] : memref<9x4x128xbf16, #tpu.memory_space<vmem>>, vector<1x4x128xbf16>
    %34 = vector.shape_cast %33 : vector<1x4x128xbf16> to vector<4x128xbf16>
    %cst_20 = arith.constant dense<0.000000e+00> : vector<256x128xf32>
    %35 = tpu.matmul %32, %34, %cst_20 {dimension_numbers = #tpu.dot_dimension_numbers<[1], [0], [0], [1], [0, 0, 1, 1], [], []>} : vector<256x4xbf16>, vector<4x128xbf16>, vector<256x128xf32> -> vector<256x128xf32>
    %36 = arith.addf %30, %35 : vector<256x128xf32>
    %37 = vector.extract_strided_slice %24 {offsets = [0, 9, 0], sizes = [16, 16, 4], strides = [1, 1, 1]} : vector<16x32x4xbf16> to vector<16x16x4xbf16>
    %38 = vector.shape_cast %37 : vector<16x16x4xbf16> to vector<256x4xbf16>
    %c2 = arith.constant 2 : index
    %c0_21 = arith.constant 0 : index
    %c0_22 = arith.constant 0 : index
    %39 = vector.load %arg3[%c2, %c0_21, %c0_22] : memref<9x4x128xbf16, #tpu.memory_space<vmem>>, vector<1x4x128xbf16>
    %40 = vector.shape_cast %39 : vector<1x4x128xbf16> to vector<4x128xbf16>
    %cst_23 = arith.constant dense<0.000000e+00> : vector<256x128xf32>
    %41 = tpu.matmul %38, %40, %cst_23 {dimension_numbers = #tpu.dot_dimension_numbers<[1], [0], [0], [1], [0, 0, 1, 1], [], []>} : vector<256x4xbf16>, vector<4x128xbf16>, vector<256x128xf32> -> vector<256x128xf32>
    %42 = arith.addf %36, %41 : vector<256x128xf32>
    %43 = vector.extract_strided_slice %22 {offsets = [1, 0, 0], sizes = [16, 32, 4], strides = [1, 1, 1]} : vector<18x32x4xbf16> to vector<16x32x4xbf16>
    %44 = vector.extract_strided_slice %43 {offsets = [0, 7, 0], sizes = [16, 16, 4], strides = [1, 1, 1]} : vector<16x32x4xbf16> to vector<16x16x4xbf16>
    %45 = vector.shape_cast %44 : vector<16x16x4xbf16> to vector<256x4xbf16>
    %c3 = arith.constant 3 : index
    %c0_24 = arith.constant 0 : index
    %c0_25 = arith.constant 0 : index
    %46 = vector.load %arg3[%c3, %c0_24, %c0_25] : memref<9x4x128xbf16, #tpu.memory_space<vmem>>, vector<1x4x128xbf16>
    %47 = vector.shape_cast %46 : vector<1x4x128xbf16> to vector<4x128xbf16>
    %cst_26 = arith.constant dense<0.000000e+00> : vector<256x128xf32>
    %48 = tpu.matmul %45, %47, %cst_26 {dimension_numbers = #tpu.dot_dimension_numbers<[1], [0], [0], [1], [0, 0, 1, 1], [], []>} : vector<256x4xbf16>, vector<4x128xbf16>, vector<256x128xf32> -> vector<256x128xf32>
    %49 = arith.addf %42, %48 : vector<256x128xf32>
    %50 = vector.extract_strided_slice %43 {offsets = [0, 8, 0], sizes = [16, 16, 4], strides = [1, 1, 1]} : vector<16x32x4xbf16> to vector<16x16x4xbf16>
    %51 = vector.shape_cast %50 : vector<16x16x4xbf16> to vector<256x4xbf16>
    %c4 = arith.constant 4 : index
    %c0_27 = arith.constant 0 : index
    %c0_28 = arith.constant 0 : index
    %52 = vector.load %arg3[%c4, %c0_27, %c0_28] : memref<9x4x128xbf16, #tpu.memory_space<vmem>>, vector<1x4x128xbf16>
    %53 = vector.shape_cast %52 : vector<1x4x128xbf16> to vector<4x128xbf16>
    %cst_29 = arith.constant dense<0.000000e+00> : vector<256x128xf32>
    %54 = tpu.matmul %51, %53, %cst_29 {dimension_numbers = #tpu.dot_dimension_numbers<[1], [0], [0], [1], [0, 0, 1, 1], [], []>} : vector<256x4xbf16>, vector<4x128xbf16>, vector<256x128xf32> -> vector<256x128xf32>
    %55 = arith.addf %49, %54 : vector<256x128xf32>
    %56 = vector.extract_strided_slice %43 {offsets = [0, 9, 0], sizes = [16, 16, 4], strides = [1, 1, 1]} : vector<16x32x4xbf16> to vector<16x16x4xbf16>
    %57 = vector.shape_cast %56 : vector<16x16x4xbf16> to vector<256x4xbf16>
    %c5 = arith.constant 5 : index
    %c0_30 = arith.constant 0 : index
    %c0_31 = arith.constant 0 : index
    %58 = vector.load %arg3[%c5, %c0_30, %c0_31] : memref<9x4x128xbf16, #tpu.memory_space<vmem>>, vector<1x4x128xbf16>
    %59 = vector.shape_cast %58 : vector<1x4x128xbf16> to vector<4x128xbf16>
    %cst_32 = arith.constant dense<0.000000e+00> : vector<256x128xf32>
    %60 = tpu.matmul %57, %59, %cst_32 {dimension_numbers = #tpu.dot_dimension_numbers<[1], [0], [0], [1], [0, 0, 1, 1], [], []>} : vector<256x4xbf16>, vector<4x128xbf16>, vector<256x128xf32> -> vector<256x128xf32>
    %61 = arith.addf %55, %60 : vector<256x128xf32>
    %62 = vector.extract_strided_slice %22 {offsets = [2, 0, 0], sizes = [16, 32, 4], strides = [1, 1, 1]} : vector<18x32x4xbf16> to vector<16x32x4xbf16>
    %63 = vector.extract_strided_slice %62 {offsets = [0, 7, 0], sizes = [16, 16, 4], strides = [1, 1, 1]} : vector<16x32x4xbf16> to vector<16x16x4xbf16>
    %64 = vector.shape_cast %63 : vector<16x16x4xbf16> to vector<256x4xbf16>
    %c6 = arith.constant 6 : index
    %c0_33 = arith.constant 0 : index
    %c0_34 = arith.constant 0 : index
    %65 = vector.load %arg3[%c6, %c0_33, %c0_34] : memref<9x4x128xbf16, #tpu.memory_space<vmem>>, vector<1x4x128xbf16>
    %66 = vector.shape_cast %65 : vector<1x4x128xbf16> to vector<4x128xbf16>
    %cst_35 = arith.constant dense<0.000000e+00> : vector<256x128xf32>
    %67 = tpu.matmul %64, %66, %cst_35 {dimension_numbers = #tpu.dot_dimension_numbers<[1], [0], [0], [1], [0, 0, 1, 1], [], []>} : vector<256x4xbf16>, vector<4x128xbf16>, vector<256x128xf32> -> vector<256x128xf32>
    %68 = arith.addf %61, %67 : vector<256x128xf32>
    %69 = vector.extract_strided_slice %62 {offsets = [0, 8, 0], sizes = [16, 16, 4], strides = [1, 1, 1]} : vector<16x32x4xbf16> to vector<16x16x4xbf16>
    %70 = vector.shape_cast %69 : vector<16x16x4xbf16> to vector<256x4xbf16>
    %c7 = arith.constant 7 : index
    %c0_36 = arith.constant 0 : index
    %c0_37 = arith.constant 0 : index
    %71 = vector.load %arg3[%c7, %c0_36, %c0_37] : memref<9x4x128xbf16, #tpu.memory_space<vmem>>, vector<1x4x128xbf16>
    %72 = vector.shape_cast %71 : vector<1x4x128xbf16> to vector<4x128xbf16>
    %cst_38 = arith.constant dense<0.000000e+00> : vector<256x128xf32>
    %73 = tpu.matmul %70, %72, %cst_38 {dimension_numbers = #tpu.dot_dimension_numbers<[1], [0], [0], [1], [0, 0, 1, 1], [], []>} : vector<256x4xbf16>, vector<4x128xbf16>, vector<256x128xf32> -> vector<256x128xf32>
    %74 = arith.addf %68, %73 : vector<256x128xf32>
    %75 = vector.extract_strided_slice %62 {offsets = [0, 9, 0], sizes = [16, 16, 4], strides = [1, 1, 1]} : vector<16x32x4xbf16> to vector<16x16x4xbf16>
    %76 = vector.shape_cast %75 : vector<16x16x4xbf16> to vector<256x4xbf16>
    %c8 = arith.constant 8 : index
    %c0_39 = arith.constant 0 : index
    %c0_40 = arith.constant 0 : index
    %77 = vector.load %arg3[%c8, %c0_39, %c0_40] : memref<9x4x128xbf16, #tpu.memory_space<vmem>>, vector<1x4x128xbf16>
    %78 = vector.shape_cast %77 : vector<1x4x128xbf16> to vector<4x128xbf16>
    %cst_41 = arith.constant dense<0.000000e+00> : vector<256x128xf32>
    %79 = tpu.matmul %76, %78, %cst_41 {dimension_numbers = #tpu.dot_dimension_numbers<[1], [0], [0], [1], [0, 0, 1, 1], [], []>} : vector<256x4xbf16>, vector<4x128xbf16>, vector<256x128xf32> -> vector<256x128xf32>
    %80 = arith.addf %74, %79 : vector<256x128xf32>
    %c0_42 = arith.constant 0 : index
    %c0_43 = arith.constant 0 : index
    %81 = vector.load %arg4[%c0_42, %c0_43] : memref<1x128xf32, #tpu.memory_space<vmem>>, vector<1x128xf32>
    %82 = vector.broadcast %81 : vector<1x128xf32> to vector<256x128xf32>
    %83 = arith.addf %80, %82 : vector<256x128xf32>
    %84 = vector.shape_cast %83 : vector<256x128xf32> to vector<16x16x128xf32>
    %85 = arith.truncf %84 : vector<16x16x128xf32> to vector<16x16x128xbf16>
    %c0_44 = arith.constant 0 : index
    %c0_45 = arith.constant 0 : index
    %c0_46 = arith.constant 0 : index
    %c0_47 = arith.constant 0 : index
    %86 = vector.load %arg5[%c0_44, %c0_45, %c0_46, %c0_47] : memref<1x16x16x128xbf16, #tpu.memory_space<vmem>>, vector<1x16x16x128xbf16>
    %87 = vector.shape_cast %86 : vector<1x16x16x128xbf16> to vector<16x16x128xbf16>
    %88 = vector.shape_cast %85 : vector<16x16x128xbf16> to vector<1x16x16x128xbf16>
    tpu.vector_store %arg5[%c0_44, %c0_45, %c0_46, %c0_47], %88 {strides = array<i32>} : memref<1x16x16x128xbf16, #tpu.memory_space<vmem>>, vector<1x16x16x128xbf16>,
    %cst_48 = arith.constant dense<0.000000e+00> : vector<128xf32>
    %89 = vector.multi_reduction <add>, %83, %cst_48 [0] : vector<256x128xf32> to vector<128xf32>
    %90 = vector.shape_cast %89 : vector<128xf32> to vector<1x128xf32>
    %c0_49 = arith.constant 0 : index
    %c0_50 = arith.constant 0 : index
    %c0_51 = arith.constant 0 : index
    %c0_52 = arith.constant 0 : index
    %91 = vector.load %arg6[%c0_49, %c0_50, %c0_51, %c0_52] : memref<1x1x1x128xf32, #tpu.memory_space<vmem>>, vector<1x1x1x128xf32>
    %92 = vector.shape_cast %91 : vector<1x1x1x128xf32> to vector<1x128xf32>
    %93 = vector.shape_cast %90 : vector<1x128xf32> to vector<1x1x1x128xf32>
    tpu.vector_store %arg6[%c0_49, %c0_50, %c0_51, %c0_52], %93 {strides = array<i32>} : memref<1x1x1x128xf32, #tpu.memory_space<vmem>>, vector<1x1x1x128xf32>,
    %94 = arith.mulf %83, %83 : vector<256x128xf32>
    %cst_53 = arith.constant dense<0.000000e+00> : vector<128xf32>
    %95 = vector.multi_reduction <add>, %94, %cst_53 [0] : vector<256x128xf32> to vector<128xf32>
    %96 = vector.shape_cast %95 : vector<128xf32> to vector<1x128xf32>
    %c0_54 = arith.constant 0 : index
    %c0_55 = arith.constant 0 : index
    %c0_56 = arith.constant 0 : index
    %c0_57 = arith.constant 0 : index
    %97 = vector.load %arg7[%c0_54, %c0_55, %c0_56, %c0_57] : memref<1x1x1x128xf32, #tpu.memory_space<vmem>>, vector<1x1x1x128xf32>
    %98 = vector.shape_cast %97 : vector<1x1x1x128xf32> to vector<1x128xf32>
    %99 = vector.shape_cast %96 : vector<1x128xf32> to vector<1x1x1x128xf32>
    tpu.vector_store %arg7[%c0_54, %c0_55, %c0_56, %c0_57], %99 {strides = array<i32>} : memref<1x1x1x128xf32, #tpu.memory_space<vmem>>, vector<1x1x1x128xf32>,
    return
  }
  func.func @transform_0(%arg0: i32, %arg1: i32) -> (i32, i32, i32, i32) {
    %c0_i32 = arith.constant 0 : i32
    %c0_i32_0 = arith.constant 0 : i32
    %c0_i32_1 = arith.constant 0 : i32
    %c0_i32_2 = arith.constant 0 : i32
    return %arg0, %c0_i32, %c0_i32_0, %c0_i32_1 : i32, i32, i32, i32
  }
  func.func @transform_1(%arg0: i32, %arg1: i32) -> (i32, i32, i32) {
    %c0_i32 = arith.constant 0 : i32
    %c0_i32_0 = arith.constant 0 : i32
    %c0_i32_1 = arith.constant 0 : i32
    %c0_i32_2 = arith.constant 0 : i32
    return %c0_i32, %c0_i32_0, %c0_i32_1 : i32, i32, i32
  }
  func.func @transform_2(%arg0: i32, %arg1: i32) -> (i32, i32) {
    %c0_i32 = arith.constant 0 : i32
    %c0_i32_0 = arith.constant 0 : i32
    %c0_i32_1 = arith.constant 0 : i32
    return %c0_i32, %c0_i32_0 : i32, i32
  }
  func.func @transform_3(%arg0: i32, %arg1: i32) -> (i32, i32, i32, i32) {
    %c0_i32 = arith.constant 0 : i32
    %c0_i32_0 = arith.constant 0 : i32
    %c0_i32_1 = arith.constant 0 : i32
    return %arg0, %arg1, %c0_i32, %c0_i32_0 : i32, i32, i32, i32
  }
  func.func @transform_4(%arg0: i32, %arg1: i32) -> (i32, i32, i32, i32) {
    %c0_i32 = arith.constant 0 : i32
    %c0_i32_0 = arith.constant 0 : i32
    %c0_i32_1 = arith.constant 0 : i32
    return %arg0, %arg1, %c0_i32, %c0_i32_0 : i32, i32, i32, i32
  }
  func.func @transform_5(%arg0: i32, %arg1: i32) -> (i32, i32, i32, i32) {
    %c0_i32 = arith.constant 0 : i32
    %c0_i32_0 = arith.constant 0 : i32
    %c0_i32_1 = arith.constant 0 : i32
    return %arg0, %arg1, %c0_i32, %c0_i32_0 : i32, i32, i32, i32
  }
}

module attributes {stable_mosaic.version = 11 : i64} {
  func.func @_bn_relu_kernel(%arg0: i32, %arg1: i32, %arg2: memref<1x16x16x128xbf16, #tpu.memory_space<vmem>>, %arg3: memref<1x8xf32, #tpu.memory_space<vmem>>, %arg4: memref<1x8xf32, #tpu.memory_space<vmem>>, %arg5: memref<1x16x16x8xf32, #tpu.memory_space<vmem>>) attributes {dimension_semantics = [#tpu.dimension_semantics<parallel>, #tpu.dimension_semantics<parallel>], iteration_bounds = array<i64: 2, 1>, scalar_prefetch = 0 : i64, scratch_operands = 0 : i64, tpu.core_type = #tpu.core_type<tc>, window_params = [{transform_indices = @transform_0, window_bounds = array<i64: 1, 16, 16, 128>}, {pipeline_mode = #tpu.pipeline_mode<synchronous>, transform_indices = @transform_1, window_bounds = array<i64: 1, 8>}, {pipeline_mode = #tpu.pipeline_mode<synchronous>, transform_indices = @transform_2, window_bounds = array<i64: 1, 8>}, {transform_indices = @transform_3, window_bounds = array<i64: 1, 16, 16, 8>}]} {
    %c0 = arith.constant 0 : index
    %c0_0 = arith.constant 0 : index
    %c0_1 = arith.constant 0 : index
    %c0_2 = arith.constant 0 : index
    %0 = vector.load %arg2[%c0, %c0_0, %c0_1, %c0_2] : memref<1x16x16x128xbf16, #tpu.memory_space<vmem>>, vector<1x16x16x128xbf16>
    %1 = vector.shape_cast %0 : vector<1x16x16x128xbf16> to vector<16x16x128xbf16>
    %2 = vector.extract_strided_slice %1 {offsets = [0, 0, 0], sizes = [16, 16, 8], strides = [1, 1, 1]} : vector<16x16x128xbf16> to vector<16x16x8xbf16>
    %3 = arith.extf %2 : vector<16x16x8xbf16> to vector<16x16x8xf32>
    %c0_3 = arith.constant 0 : index
    %c0_4 = arith.constant 0 : index
    %4 = vector.load %arg3[%c0_3, %c0_4] : memref<1x8xf32, #tpu.memory_space<vmem>>, vector<1x8xf32>
    %5 = vector.shape_cast %4 : vector<1x8xf32> to vector<1x1x8xf32>
    %6 = vector.broadcast %5 : vector<1x1x8xf32> to vector<16x16x8xf32>
    %7 = arith.mulf %3, %6 : vector<16x16x8xf32>
    %c0_5 = arith.constant 0 : index
    %c0_6 = arith.constant 0 : index
    %8 = vector.load %arg4[%c0_5, %c0_6] : memref<1x8xf32, #tpu.memory_space<vmem>>, vector<1x8xf32>
    %9 = vector.shape_cast %8 : vector<1x8xf32> to vector<1x1x8xf32>
    %10 = vector.broadcast %9 : vector<1x1x8xf32> to vector<16x16x8xf32>
    %11 = arith.addf %7, %10 : vector<16x16x8xf32>
    %cst = arith.constant 0.000000e+00 : f32
    %12 = vector.broadcast %cst : f32 to vector<16x16x8xf32>
    %13 = arith.maximumf %11, %12 : vector<16x16x8xf32>
    %c0_7 = arith.constant 0 : index
    %c0_8 = arith.constant 0 : index
    %c0_9 = arith.constant 0 : index
    %c0_10 = arith.constant 0 : index
    %14 = vector.load %arg5[%c0_7, %c0_8, %c0_9, %c0_10] : memref<1x16x16x8xf32, #tpu.memory_space<vmem>>, vector<1x16x16x8xf32>
    %15 = vector.shape_cast %14 : vector<1x16x16x8xf32> to vector<16x16x8xf32>
    %16 = vector.shape_cast %13 : vector<16x16x8xf32> to vector<1x16x16x8xf32>
    tpu.vector_store %arg5[%c0_7, %c0_8, %c0_9, %c0_10], %16 {strides = array<i32>} : memref<1x16x16x8xf32, #tpu.memory_space<vmem>>, vector<1x16x16x8xf32>,
    return
  }
  func.func @transform_0(%arg0: i32, %arg1: i32) -> (i32, i32, i32, i32) {
    %c0_i32 = arith.constant 0 : i32
    %c0_i32_0 = arith.constant 0 : i32
    %c0_i32_1 = arith.constant 0 : i32
    return %arg0, %arg1, %c0_i32, %c0_i32_0 : i32, i32, i32, i32
  }
  func.func @transform_1(%arg0: i32, %arg1: i32) -> (i32, i32) {
    %c0_i32 = arith.constant 0 : i32
    %c0_i32_0 = arith.constant 0 : i32
    %c0_i32_1 = arith.constant 0 : i32
    return %c0_i32, %c0_i32_0 : i32, i32
  }
  func.func @transform_2(%arg0: i32, %arg1: i32) -> (i32, i32) {
    %c0_i32 = arith.constant 0 : i32
    %c0_i32_0 = arith.constant 0 : i32
    %c0_i32_1 = arith.constant 0 : i32
    return %c0_i32, %c0_i32_0 : i32, i32
  }
  func.func @transform_3(%arg0: i32, %arg1: i32) -> (i32, i32, i32, i32) {
    %c0_i32 = arith.constant 0 : i32
    %c0_i32_0 = arith.constant 0 : i32
    %c0_i32_1 = arith.constant 0 : i32
    return %arg0, %arg1, %c0_i32, %c0_i32_0 : i32, i32, i32, i32
  }
}

</mosaic_0001>

<llo_original>
// kernel: conv_block_forward.3
$region0: #{conv_block_forward.3}
  #allocation0 [shape = 'u32[]', space=smem, size = 0x4, offset = 0x4, fixed_abs, tag = 'smem constant byte address 0x4 - core index']
  #allocation1 [shape = 'u32[144,128]{1,0:T(1,128)}', space=vmem, size = 0x12000, scoped, tag = 'internal scratch']
  %s0 = inlined_call_operand.vmem [shape: bf16[2,16,16,128], index: 0, kind: input, shape index: {}]
  %s1 = inlined_call_operand.vmem [shape: f32[1,8], index: 1, kind: input, shape index: {}]
  %s2 = inlined_call_operand.vmem [shape: f32[1,8], index: 2, kind: input, shape index: {}]
  %s3 = inlined_call_operand.vmem [shape: f32[2,16,16,8], index: 3, kind: output, shape index: {}]
  %s4 = sld [smem:[#allocation0]]
  $region45: #{conv_block_forward.3} parent=0
    _
  %s6 = ssub.s32 1, %s4
  %s7 = scalar_select 0, %s6, %s4
  loop: start=0, step=1, limit=4
  $region2: #{conv_block_forward.3} parent=0 // loop_pre_header
    _
  $region3: #{conv_block_forward.3} parent=0 // loop_header
    %s9 = sphi 0, %s13
    %p10 = scmp.ge.s32.totalorder %s9, 4
    %s16 = sphi 0, %s28
    %s17 = sphi 0, %s24
    %s18 = sphi 0, %s16
    %s19 = sphi 0, %s17
    %s20 = sphi 0, %s18
    %s21 = sphi 0, %s19
    %s33 = sphi 0, %s35
    %s36 = sphi 0, %s33
    %s37 = sphi 0, %s36
    %s53 = sphi 0, %s37
    %s57 = sphi 0, %s57
    %s59 = sphi 0, %s57
    %s60 = sphi 0, %s59
    %s74 = sphi 0, %s60
    %s78 = sphi 0, %s78
    %s80 = sphi 0, %s78
    %s81 = sphi 0, %s80
    %s95 = sphi 0, %s81
    %s103 = sphi 0, %s105
    %s106 = sphi 0, %s103
    %s107 = sphi 0, %s106
    %s123 = sphi 0, %s107
  $region4: #{conv_block_forward.3} parent=0 // loop_header_branch
    %12 = sbr.rel (%p10) target = $region8
  $region5: #{conv_block_forward.3} parent=0 // loop_body
    %s14 = ssub.s32 %s9, 1
    %s15 = ssub.s32 %s9, 2
    %s22 = sadd.s32 1, %s17
    %p23 = scmp.ge.s32.totalorder %s22, 1
    %s24 = scalar_select %p23, 0, %s22
    %s25 = sadd.s32 1, %s16
    %s26 = scalar_select %p23, %s25, %s16
    %p27 = scmp.ge.s32.totalorder %s26, 2
    %s28 = scalar_select %p27, 0, %s26
    %s29 = ssub.s32 %s16, %s28
    %s30 = ssub.s32 %s17, %s24
    %s31 = sor.u32 %s29, %s30
    %p32 = scmp.eq.s32.totalorder %s31, 0
    %s34 = sadd.s32 %s33, 1
    %s35 = scalar_select %p32, %s33, %s34
    %p38 = pneg %p32
    %p39 = scmp.eq.s32.totalorder %s9, 1
    %p40 = por %p38, %p39
    %p41 = scmp.ne.s32.totalorder %s33, %s36
    %p42 = scmp.eq.s32.totalorder %s9, 0
    %p43 = por %p41, %p42
    %p44 = scmp.ne.s32.totalorder %s33, %s36
    %p45 = scmp.eq.s32.totalorder %s14, 1
    %p46 = por %p44, %p45
    %p47 = scmp.ne.s32.totalorder %s36, %s37
    %p48 = scmp.eq.s32.totalorder %s14, 0
    %p49 = por %p47, %p48
    %p50 = scmp.ne.s32.totalorder %s36, %s37
    %p51 = scmp.eq.s32.totalorder %s15, 1
    %p52 = por %p50, %p51
    %p54 = scmp.ne.s32.totalorder %s37, %s53
    %p55 = scmp.eq.s32.totalorder %s15, 0
    %p56 = por %p54, %p55
    %s58 = sadd.s32 %s57, 1
    %p61 = scmp.eq.s32.totalorder %s9, 1
    %p62 = scmp.ne.s32.totalorder %s57, %s59
    %p63 = scmp.eq.s32.totalorder %s9, 0
    %p64 = por %p62, %p63
    %p65 = scmp.ne.s32.totalorder %s57, %s59
    %p66 = scmp.eq.s32.totalorder %s14, 1
    %p67 = por %p65, %p66
    %p68 = scmp.ne.s32.totalorder %s59, %s60
    %p69 = scmp.eq.s32.totalorder %s14, 0
    %p70 = por %p68, %p69
    %p71 = scmp.ne.s32.totalorder %s59, %s60
    %p72 = scmp.eq.s32.totalorder %s15, 1
    %p73 = por %p71, %p72
    %p75 = scmp.ne.s32.totalorder %s60, %s74
    %p76 = scmp.eq.s32.totalorder %s15, 0
    %p77 = por %p75, %p76
    %s79 = sadd.s32 %s78, 1
    %p82 = scmp.eq.s32.totalorder %s9, 1
    %p83 = scmp.ne.s32.totalorder %s78, %s80
    %p84 = scmp.eq.s32.totalorder %s9, 0
    %p85 = por %p83, %p84
    %p86 = scmp.ne.s32.totalorder %s78, %s80
    %p87 = scmp.eq.s32.totalorder %s14, 1
    %p88 = por %p86, %p87
    %p89 = scmp.ne.s32.totalorder %s80, %s81
    %p90 = scmp.eq.s32.totalorder %s14, 0
    %p91 = por %p89, %p90
    %p92 = scmp.ne.s32.totalorder %s80, %s81
    %p93 = scmp.eq.s32.totalorder %s15, 1
    %p94 = por %p92, %p93
    %p96 = scmp.ne.s32.totalorder %s81, %s95
    %p97 = scmp.eq.s32.totalorder %s15, 0
    %p98 = por %p96, %p97
    %s99 = ssub.s32 %s16, %s28
    %s100 = ssub.s32 %s17, %s24
    %s101 = sor.u32 %s99, %s100
    %p102 = scmp.eq.s32.totalorder %s101, 0
    %s104 = sadd.s32 %s103, 1
    %s105 = scalar_select %p102, %s103, %s104
    %p108 = pneg %p102
    %p109 = scmp.eq.s32.totalorder %s9, 1
    %p110 = por %p108, %p109
    %p111 = scmp.ne.s32.totalorder %s103, %s106
    %p112 = scmp.eq.s32.totalorder %s9, 0
    %p113 = por %p111, %p112
    %p114 = scmp.ne.s32.totalorder %s103, %s106
    %p115 = scmp.eq.s32.totalorder %s14, 1
    %p116 = por %p114, %p115
    %p117 = scmp.ne.s32.totalorder %s106, %s107
    %p118 = scmp.eq.s32.totalorder %s14, 0
    %p119 = por %p117, %p118
    %p120 = scmp.ne.s32.totalorder %s106, %s107
    %p121 = scmp.eq.s32.totalorder %s15, 1
    %p122 = por %p120, %p121
    %p124 = scmp.ne.s32.totalorder %s107, %s123
    %p125 = scmp.eq.s32.totalorder %s15, 0
    %p126 = por %p124, %p125
    %p127 = scmp.le.s32.totalorder 1, %s9
    %p128 = scmp.lt.s32.totalorder %s9, 3
    %p129 = pnand %p127, %p128
    %p130 = pneg %p129
    // Predicated region
    $region9: #{conv_block_forward.3} parent=5 // pred_check
      _
    $region10: #{conv_block_forward.3} parent=5 // pred_check_branch
      %132 = sbr.rel (%p129) target = $region12
    $region11: #{conv_block_forward.3} parent=5 // pred_region
      %s133 = ssub.s32 %s9, 1
      // Predicated region
      $region13: #{conv_block_forward.3} parent=11 // pred_check
        %p134 = pneg %p70
      $region14: #{conv_block_forward.3} parent=11 // pred_check_branch
        %136 = sbr.rel (%p134) target = $region16
      $region15: #{conv_block_forward.3} parent=11 // pred_region
        _
      $region16: #{conv_block_forward.3} parent=11 // pred_fallthru
        _
      // Predicated region
      $region17: #{conv_block_forward.3} parent=11 // pred_check
        %p137 = pneg %p91
      $region18: #{conv_block_forward.3} parent=11 // pred_check_branch
        %139 = sbr.rel (%p137) target = $region20
      $region19: #{conv_block_forward.3} parent=11 // pred_region
        _
      $region20: #{conv_block_forward.3} parent=11 // pred_fallthru
        _
    $region12: #{conv_block_forward.3} parent=5 // pred_fallthru
      _
    %p140 = scmp.lt.s32.totalorder %s9, 2
    // Predicated region
    $region21: #{conv_block_forward.3} parent=5 // pred_check
      %p141 = pneg %p140
    $region22: #{conv_block_forward.3} parent=5 // pred_check_branch
      %143 = sbr.rel (%p141) target = $region24
    $region23: #{conv_block_forward.3} parent=5 // pred_region
      // Predicated region
      $region25: #{conv_block_forward.3} parent=23 // pred_check
        %p144 = pneg %p43
      $region26: #{conv_block_forward.3} parent=23 // pred_check_branch
        %146 = sbr.rel (%p144) target = $region28
      $region27: #{conv_block_forward.3} parent=23 // pred_region
        %s147 = smul.u32 16, %s17
        %p148 = scmp.lt.s32.totalorder %s16, 1
        %s149 = scalar_select %p148, %s16, 1
        %p150 = scmp.lt.s32.totalorder %s147, 15
        %s151 = scalar_select %p150, %s147, 15
        %s152 = smul.addr %s151, 2
        %s153 = smul.addr %s149, 32
        %s154 = sadd.s32 %s152, %s153
        %s155 = smul.addr %s154, 4
        %s156 = scalar_lea.vmem %s0, %s155
        %s157 = smul.u32 16, %s17
      $region28: #{conv_block_forward.3} parent=23 // pred_fallthru
        _
    $region24: #{conv_block_forward.3} parent=5 // pred_fallthru
      _
    %p158 = scmp.le.s32.totalorder 1, %s9
    %p159 = scmp.lt.s32.totalorder %s9, 3
    %p160 = pnand %p158, %p159
    %p161 = pneg %p160
    // Predicated region
    $region29: #{conv_block_forward.3} parent=5 // pred_check
      _
    $region30: #{conv_block_forward.3} parent=5 // pred_check_branch
      %163 = sbr.rel (%p160) target = $region32
    $region31: #{conv_block_forward.3} parent=5 // pred_region
      %s164 = ssub.s32 %s9, 1
      %s165 = smul.u32 16, %s19
      %p166 = scmp.lt.s32.totalorder %s18, 1
      %s167 = scalar_select %p166, %s18, 1
      %p168 = scmp.lt.s32.totalorder %s165, 15
      %s169 = scalar_select %p168, %s165, 15
      %s170 = smul.addr %s169, 2
      %s171 = smul.addr %s167, 32
      %s172 = sadd.s32 %s170, %s171
      %s173 = smul.addr %s172, 4
      %s174 = scalar_lea.vmem %s0, %s173
      %p175 = pneg %p49
      %p176 = pneg %p46
      %p177 = pneg %p70
      %p178 = pneg %p67
      %p179 = pneg %p91
      %p180 = pneg %p88
      %p181 = pneg %p119
      %p182 = pneg %p116
      %s183 = smul.u32 16, %s19
      %p184 = scmp.lt.s32.totalorder %s18, 1
      %s185 = scalar_select %p184, %s18, 1
      %p186 = scmp.lt.s32.totalorder %s183, 15
      %s187 = scalar_select %p186, %s183, 15
      %s188 = smul.addr %s187, 2
      %s189 = smul.addr %s185, 32
      %s190 = sadd.s32 %s188, %s189
      %s191 = smul.addr %s190, 8
      %s192 = scalar_lea.vmem %s3, %s191
      %s193 = smul.u32 16, %s19
      %p194 = scmp.lt.s32.totalorder %s18, 1
      %s195 = scalar_select %p194, %s18, 1
      %p196 = scmp.lt.s32.totalorder %s193, 15
      %s197 = scalar_select %p196, %s193, 15
      %s198 = smul.addr %s197, 2
      %s199 = smul.addr %s195, 32
      %s200 = sadd.s32 %s198, %s199
      %s201 = smul.addr %s200, 4
      %s202 = scalar_lea.vmem %s0, %s201
      %s203 = smul.u32 16, %s19
      %s204 = smul.u32 16, %s19
      %p205 = scmp.lt.s32.totalorder %s18, 1
      %s206 = scalar_select %p205, %s18, 1
      %p207 = scmp.lt.s32.totalorder %s204, 15
      %s208 = scalar_select %p207, %s204, 15
      %s209 = smul.addr %s208, 2
      %s210 = smul.addr %s206, 32
      %s211 = sadd.s32 %s209, %s210
      %s212 = smul.addr %s211, 8
      %s213 = scalar_lea.vmem %s3, %s212
      %s214 = smul.u32 16, %s19
      %v215 = vld [vmem:[%s202] sm:$0xf]
      %v216 = vld [vmem:[%s202 + $0x4] sm:$0xf]
      %v217 = vld [vmem:[%s202 + $0x8] sm:$0xf]
      %v218 = vld [vmem:[%s202 + $0xc] sm:$0xf]
      %v219 = vld [vmem:[%s202 + $0x10] sm:$0xf]
      %v220 = vld [vmem:[%s202 + $0x14] sm:$0xf]
      %v221 = vld [vmem:[%s202 + $0x18] sm:$0xf]
      %v222 = vld [vmem:[%s202 + $0x1c] sm:$0xf]
      %v223 = vld [vmem:[%s202 + $0x20] sm:$0xf]
      %v224 = vld [vmem:[%s202 + $0x24] sm:$0xf]
      %v225 = vld [vmem:[%s202 + $0x28] sm:$0xf]
      %v226 = vld [vmem:[%s202 + $0x2c] sm:$0xf]
      %v227 = vld [vmem:[%s202 + $0x30] sm:$0xf]
      %v228 = vld [vmem:[%s202 + $0x34] sm:$0xf]
      %v229 = vld [vmem:[%s202 + $0x38] sm:$0xf]
      %v230 = vld [vmem:[%s202 + $0x3c] sm:$0xf]
      %v231 = vld [vmem:[%s202 + $0x40] sm:$0xf]
      %v232 = vld [vmem:[%s202 + $0x44] sm:$0xf]
      %v233 = vld [vmem:[%s202 + $0x48] sm:$0xf]
      %v234 = vld [vmem:[%s202 + $0x4c] sm:$0xf]
      %v235 = vld [vmem:[%s202 + $0x50] sm:$0xf]
      %v236 = vld [vmem:[%s202 + $0x54] sm:$0xf]
      %v237 = vld [vmem:[%s202 + $0x58] sm:$0xf]
      %v238 = vld [vmem:[%s202 + $0x5c] sm:$0xf]
      %v239 = vld [vmem:[%s202 + $0x60] sm:$0xf]
      %v240 = vld [vmem:[%s202 + $0x64] sm:$0xf]
      %v241 = vld [vmem:[%s202 + $0x68] sm:$0xf]
      %v242 = vld [vmem:[%s202 + $0x6c] sm:$0xf]
      %v243 = vld [vmem:[%s202 + $0x70] sm:$0xf]
      %v244 = vld [vmem:[%s202 + $0x74] sm:$0xf]
      %v245 = vld [vmem:[%s202 + $0x78] sm:$0xf]
      %v246 = vld [vmem:[%s202 + $0x7c] sm:$0xf]
      %v247 = vunpack.c.l.bf16 %v215
      %v248 = vunpack.c.l.bf16 %v216
      %v249 = vunpack.c.l.bf16 %v217
      %v250 = vunpack.c.l.bf16 %v218
      %v251 = vunpack.c.l.bf16 %v219
      %v252 = vunpack.c.l.bf16 %v220
      %v253 = vunpack.c.l.bf16 %v221
      %v254 = vunpack.c.l.bf16 %v222
      %v255 = vunpack.c.l.bf16 %v223
      %v256 = vunpack.c.l.bf16 %v224
      %v257 = vunpack.c.l.bf16 %v225
      %v258 = vunpack.c.l.bf16 %v226
      %v259 = vunpack.c.l.bf16 %v227
      %v260 = vunpack.c.l.bf16 %v228
      %v261 = vunpack.c.l.bf16 %v229
      %v262 = vunpack.c.l.bf16 %v230
      %v263 = vunpack.c.l.bf16 %v231
      %v264 = vunpack.c.l.bf16 %v232
      %v265 = vunpack.c.l.bf16 %v233
      %v266 = vunpack.c.l.bf16 %v234
      %v267 = vunpack.c.l.bf16 %v235
      %v268 = vunpack.c.l.bf16 %v236
      %v269 = vunpack.c.l.bf16 %v237
      %v270 = vunpack.c.l.bf16 %v238
      %v271 = vunpack.c.l.bf16 %v239
      %v272 = vunpack.c.l.bf16 %v240
      %v273 = vunpack.c.l.bf16 %v241
      %v274 = vunpack.c.l.bf16 %v242
      %v275 = vunpack.c.l.bf16 %v243
      %v276 = vunpack.c.l.bf16 %v244
      %v277 = vunpack.c.l.bf16 %v245
      %v278 = vunpack.c.l.bf16 %v246
      %v279 = vld [vmem:[%s1] sm:$0x1]
      %v281 = vlaneseq
      %v282 = vshrl.u32 %v281, 7
      %v283 = vsub.s32 0, %v282
      %v284 = vrot.slane %v279, %v283
      %v286 = vmul.f32 %v247, %v284
      %v287 = vmul.f32 %v248, %v284
      %v288 = vmul.f32 %v249, %v284
      %v289 = vmul.f32 %v250, %v284
      %v290 = vmul.f32 %v251, %v284
      %v291 = vmul.f32 %v252, %v284
      %v292 = vmul.f32 %v253, %v284
      %v293 = vmul.f32 %v254, %v284
      %v294 = vmul.f32 %v255, %v284
      %v295 = vmul.f32 %v256, %v284
      %v296 = vmul.f32 %v257, %v284
      %v297 = vmul.f32 %v258, %v284
      %v298 = vmul.f32 %v259, %v284
      %v299 = vmul.f32 %v260, %v284
      %v300 = vmul.f32 %v261, %v284
      %v301 = vmul.f32 %v262, %v284
      %v302 = vmul.f32 %v263, %v284
      %v303 = vmul.f32 %v264, %v284
      %v304 = vmul.f32 %v265, %v284
      %v305 = vmul.f32 %v266, %v284
      %v306 = vmul.f32 %v267, %v284
      %v307 = vmul.f32 %v268, %v284
      %v308 = vmul.f32 %v269, %v284
      %v309 = vmul.f32 %v270, %v284
      %v310 = vmul.f32 %v271, %v284
      %v311 = vmul.f32 %v272, %v284
      %v312 = vmul.f32 %v273, %v284
      %v313 = vmul.f32 %v274, %v284
      %v314 = vmul.f32 %v275, %v284
      %v315 = vmul.f32 %v276, %v284
      %v316 = vmul.f32 %v277, %v284
      %v317 = vmul.f32 %v278, %v284
      %v318 = vld [vmem:[%s2] sm:$0x1]
      %v320 = vlaneseq
      %v321 = vshrl.u32 %v320, 7
      %v322 = vsub.s32 0, %v321
      %v323 = vrot.slane %v318, %v322
      %v325 = vadd.f32 %v286, %v323
      %v326 = vadd.f32 %v287, %v323
      %v327 = vadd.f32 %v288, %v323
      %v328 = vadd.f32 %v289, %v323
      %v329 = vadd.f32 %v290, %v323
      %v330 = vadd.f32 %v291, %v323
      %v331 = vadd.f32 %v292, %v323
      %v332 = vadd.f32 %v293, %v323
      %v333 = vadd.f32 %v294, %v323
      %v334 = vadd.f32 %v295, %v323
      %v335 = vadd.f32 %v296, %v323
      %v336 = vadd.f32 %v297, %v323
      %v337 = vadd.f32 %v298, %v323
      %v338 = vadd.f32 %v299, %v323
      %v339 = vadd.f32 %v300, %v323
      %v340 = vadd.f32 %v301, %v323
      %v341 = vadd.f32 %v302, %v323
      %v342 = vadd.f32 %v303, %v323
      %v343 = vadd.f32 %v304, %v323
      %v344 = vadd.f32 %v305, %v323
      %v345 = vadd.f32 %v306, %v323
      %v346 = vadd.f32 %v307, %v323
      %v347 = vadd.f32 %v308, %v323
      %v348 = vadd.f32 %v309, %v323
      %v349 = vadd.f32 %v310, %v323
      %v350 = vadd.f32 %v311, %v323
      %v351 = vadd.f32 %v312, %v323
      %v352 = vadd.f32 %v313, %v323
      %v353 = vadd.f32 %v314, %v323
      %v354 = vadd.f32 %v315, %v323
      %v355 = vadd.f32 %v316, %v323
      %v356 = vadd.f32 %v317, %v323
      %v357 = vmax.f32 %v325, 0.0
      %v358 = vmax.f32 %v326, 0.0
      %v359 = vmax.f32 %v327, 0.0
      %v360 = vmax.f32 %v328, 0.0
      %v361 = vmax.f32 %v329, 0.0
      %v362 = vmax.f32 %v330, 0.0
      %v363 = vmax.f32 %v331, 0.0
      %v364 = vmax.f32 %v332, 0.0
      %v365 = vmax.f32 %v333, 0.0
      %v366 = vmax.f32 %v334, 0.0
      %v367 = vmax.f32 %v335, 0.0
      %v368 = vmax.f32 %v336, 0.0
      %v369 = vmax.f32 %v337, 0.0
      %v370 = vmax.f32 %v338, 0.0
      %v371 = vmax.f32 %v339, 0.0
      %v372 = vmax.f32 %v340, 0.0
      %v373 = vmax.f32 %v341, 0.0
      %v374 = vmax.f32 %v342, 0.0
      %v375 = vmax.f32 %v343, 0.0
      %v376 = vmax.f32 %v344, 0.0
      %v377 = vmax.f32 %v345, 0.0
      %v378 = vmax.f32 %v346, 0.0
      %v379 = vmax.f32 %v347, 0.0
      %v380 = vmax.f32 %v348, 0.0
      %v381 = vmax.f32 %v349, 0.0
      %v382 = vmax.f32 %v350, 0.0
      %v383 = vmax.f32 %v351, 0.0
      %v384 = vmax.f32 %v352, 0.0
      %v385 = vmax.f32 %v353, 0.0
      %v386 = vmax.f32 %v354, 0.0
      %v387 = vmax.f32 %v355, 0.0
      %v388 = vmax.f32 %v356, 0.0
      %vm389 = vcmask 64512
      %390 = vst.msk [vmem:[%s213] sm:$0xff] %vm389, %v357
      %391 = vst.msk [vmem:[%s213 + $0x8] sm:$0xff] %vm389, %v358
      %392 = vst.msk [vmem:[%s213 + $0x10] sm:$0xff] %vm389, %v359
      %393 = vst.msk [vmem:[%s213 + $0x18] sm:$0xff] %vm389, %v360
      %394 = vst.msk [vmem:[%s213 + $0x20] sm:$0xff] %vm389, %v361
      %395 = vst.msk [vmem:[%s213 + $0x28] sm:$0xff] %vm389, %v362
      %396 = vst.msk [vmem:[%s213 + $0x30] sm:$0xff] %vm389, %v363
      %397 = vst.msk [vmem:[%s213 + $0x38] sm:$0xff] %vm389, %v364
      %398 = vst.msk [vmem:[%s213 + $0x40] sm:$0xff] %vm389, %v365
      %399 = vst.msk [vmem:[%s213 + $0x48] sm:$0xff] %vm389, %v366
      %400 = vst.msk [vmem:[%s213 + $0x50] sm:$0xff] %vm389, %v367
      %401 = vst.msk [vmem:[%s213 + $0x58] sm:$0xff] %vm389, %v368
      %402 = vst.msk [vmem:[%s213 + $0x60] sm:$0xff] %vm389, %v369
      %403 = vst.msk [vmem:[%s213 + $0x68] sm:$0xff] %vm389, %v370
      %404 = vst.msk [vmem:[%s213 + $0x70] sm:$0xff] %vm389, %v371
      %405 = vst.msk [vmem:[%s213 + $0x78] sm:$0xff] %vm389, %v372
      %406 = vst.msk [vmem:[%s213 + $0x80] sm:$0xff] %vm389, %v373
      %407 = vst.msk [vmem:[%s213 + $0x88] sm:$0xff] %vm389, %v374
      %408 = vst.msk [vmem:[%s213 + $0x90] sm:$0xff] %vm389, %v375
      %409 = vst.msk [vmem:[%s213 + $0x98] sm:$0xff] %vm389, %v376
      %410 = vst.msk [vmem:[%s213 + $0xa0] sm:$0xff] %vm389, %v377
      %411 = vst.msk [vmem:[%s213 + $0xa8] sm:$0xff] %vm389, %v378
      %412 = vst.msk [vmem:[%s213 + $0xb0] sm:$0xff] %vm389, %v379
      %413 = vst.msk [vmem:[%s213 + $0xb8] sm:$0xff] %vm389, %v380
      %414 = vst.msk [vmem:[%s213 + $0xc0] sm:$0xff] %vm389, %v381
      %415 = vst.msk [vmem:[%s213 + $0xc8] sm:$0xff] %vm389, %v382
      %416 = vst.msk [vmem:[%s213 + $0xd0] sm:$0xff] %vm389, %v383
      %417 = vst.msk [vmem:[%s213 + $0xd8] sm:$0xff] %vm389, %v384
      %418 = vst.msk [vmem:[%s213 + $0xe0] sm:$0xff] %vm389, %v385
      %419 = vst.msk [vmem:[%s213 + $0xe8] sm:$0xff] %vm389, %v386
      %420 = vst.msk [vmem:[%s213 + $0xf0] sm:$0xff] %vm389, %v387
      %421 = vst.msk [vmem:[%s213 + $0xf8] sm:$0xff] %vm389, %v388
      %s422 = smul.u32 16, %s19
      %p423 = scmp.lt.s32.totalorder %s18, 1
      %s424 = scalar_select %p423, %s18, 1
      %p425 = scmp.lt.s32.totalorder %s422, 15
      %s426 = scalar_select %p425, %s422, 15
      %s427 = smul.addr %s426, 2
      %s428 = smul.addr %s424, 32
      %s429 = sadd.s32 %s427, %s428
      %s430 = smul.addr %s429, 8
      %s431 = scalar_lea.vmem %s3, %s430
      // Predicated region
      $region33: #{conv_block_forward.3} parent=31 // pred_check
        %p432 = pneg %p116
      $region34: #{conv_block_forward.3} parent=31 // pred_check_branch
        %434 = sbr.rel (%p432) target = $region36
      $region35: #{conv_block_forward.3} parent=31 // pred_region
        %s435 = smul.u32 16, %s19
      $region36: #{conv_block_forward.3} parent=31 // pred_fallthru
        _
    $region32: #{conv_block_forward.3} parent=5 // pred_fallthru
      _
    %p436 = scmp.le.s32.totalorder 2, %s9
    // Predicated region
    $region37: #{conv_block_forward.3} parent=5 // pred_check
      %p437 = pneg %p436
    $region38: #{conv_block_forward.3} parent=5 // pred_check_branch
      %439 = sbr.rel (%p437) target = $region40
    $region39: #{conv_block_forward.3} parent=5 // pred_region
      %s440 = ssub.s32 %s9, 2
      // Predicated region
      $region41: #{conv_block_forward.3} parent=39 // pred_check
        %p441 = pneg %p122
      $region42: #{conv_block_forward.3} parent=39 // pred_check_branch
        %443 = sbr.rel (%p441) target = $region44
      $region43: #{conv_block_forward.3} parent=39 // pred_region
        %s444 = smul.u32 16, %s21
        %p445 = scmp.lt.s32.totalorder %s20, 1
        %s446 = scalar_select %p445, %s20, 1
        %p447 = scmp.lt.s32.totalorder %s444, 15
        %s448 = scalar_select %p447, %s444, 15
        %s449 = smul.addr %s448, 2
        %s450 = smul.addr %s446, 32
        %s451 = sadd.s32 %s449, %s450
        %s452 = smul.addr %s451, 8
        %s453 = scalar_lea.vmem %s3, %s452
      $region44: #{conv_block_forward.3} parent=39 // pred_fallthru
        _
    $region40: #{conv_block_forward.3} parent=5 // pred_fallthru
      _
  $region6: #{conv_block_forward.3} parent=0 // loop_footer
    %s13 = sadd.s32 1, %s9
  $region7: #{conv_block_forward.3} parent=0 // loop_footer_branch
    %8 = sbr.rel target = $region3
  $region8: #{conv_block_forward.3} parent=0 // loop_exit
    _

// kernel: conv_block_forward.2
$region0: #{conv_block_forward.2}
  #allocation0 [shape = 'u32[]', space=smem, size = 0x4, offset = 0x4, fixed_abs, tag = 'smem constant byte address 0x4 - core index']
  #allocation1 [shape = 'u32[144,128]{1,0:T(1,128)}', space=vmem, size = 0x12000, scoped, tag = 'internal scratch']
  %s0 = inlined_call_operand.vmem [shape: bf16[2,16,16,4], index: 0, kind: input, shape index: {}]
  %s1 = inlined_call_operand.vmem [shape: bf16[9,4,128], index: 1, kind: input, shape index: {}]
  %s2 = inlined_call_operand.vmem [shape: f32[1,128], index: 2, kind: input, shape index: {}]
  %s3 = inlined_call_operand.vmem [shape: bf16[2,16,16,128], index: 3, kind: output, shape index: {0}]
  %s4 = inlined_call_operand.vmem [shape: f32[2,1,1,128], index: 4, kind: output, shape index: {1}]
  %s5 = inlined_call_operand.vmem [shape: f32[2,1,1,128], index: 5, kind: output, shape index: {2}]
  %6 = xla_tuple %s3, %s4, %s5
  %s7 = sld [smem:[#allocation0]]
  $region61: #{conv_block_forward.2} parent=0
    _
  %s9 = ssub.s32 1, %s7
  %s10 = scalar_select 0, %s9, %s7
  loop: start=0, step=1, limit=4
  $region2: #{conv_block_forward.2} parent=0 // loop_pre_header
    _
  $region3: #{conv_block_forward.2} parent=0 // loop_header
    %s12 = sphi 0, %s16
    %p13 = scmp.ge.s32.totalorder %s12, 4
    %s19 = sphi 0, %s31
    %s20 = sphi 0, %s27
    %s21 = sphi 0, %s19
    %s22 = sphi 0, %s20
    %s23 = sphi 0, %s21
    %s24 = sphi 0, %s22
    %s34 = sphi 0, %s36
    %s37 = sphi 0, %s34
    %s38 = sphi 0, %s37
    %s54 = sphi 0, %s38
    %s58 = sphi 0, %s58
    %s60 = sphi 0, %s58
    %s61 = sphi 0, %s60
    %s75 = sphi 0, %s61
    %s79 = sphi 0, %s79
    %s81 = sphi 0, %s79
    %s82 = sphi 0, %s81
    %s96 = sphi 0, %s82
    %s104 = sphi 0, %s106
    %s107 = sphi 0, %s104
    %s108 = sphi 0, %s107
    %s124 = sphi 0, %s108
    %s132 = sphi 0, %s134
    %s135 = sphi 0, %s132
    %s136 = sphi 0, %s135
    %s152 = sphi 0, %s136
    %s160 = sphi 0, %s162
    %s163 = sphi 0, %s160
    %s164 = sphi 0, %s163
    %s180 = sphi 0, %s164
  $region4: #{conv_block_forward.2} parent=0 // loop_header_branch
    %15 = sbr.rel (%p13) target = $region8
  $region5: #{conv_block_forward.2} parent=0 // loop_body
    %s17 = ssub.s32 %s12, 1
    %s18 = ssub.s32 %s12, 2
    %s25 = sadd.s32 1, %s20
    %p26 = scmp.ge.s32.totalorder %s25, 1
    %s27 = scalar_select %p26, 0, %s25
    %s28 = sadd.s32 1, %s19
    %s29 = scalar_select %p26, %s28, %s19
    %p30 = scmp.ge.s32.totalorder %s29, 2
    %s31 = scalar_select %p30, 0, %s29
    %s32 = ssub.s32 %s19, %s31
    %p33 = scmp.eq.s32.totalorder %s32, 0
    %s35 = sadd.s32 %s34, 1
    %s36 = scalar_select %p33, %s34, %s35
    %p39 = pneg %p33
    %p40 = scmp.eq.s32.totalorder %s12, 1
    %p41 = por %p39, %p40
    %p42 = scmp.ne.s32.totalorder %s34, %s37
    %p43 = scmp.eq.s32.totalorder %s12, 0
    %p44 = por %p42, %p43
    %p45 = scmp.ne.s32.totalorder %s34, %s37
    %p46 = scmp.eq.s32.totalorder %s17, 1
    %p47 = por %p45, %p46
    %p48 = scmp.ne.s32.totalorder %s37, %s38
    %p49 = scmp.eq.s32.totalorder %s17, 0
    %p50 = por %p48, %p49
    %p51 = scmp.ne.s32.totalorder %s37, %s38
    %p52 = scmp.eq.s32.totalorder %s18, 1
    %p53 = por %p51, %p52
    %p55 = scmp.ne.s32.totalorder %s38, %s54
    %p56 = scmp.eq.s32.totalorder %s18, 0
    %p57 = por %p55, %p56
    %s59 = sadd.s32 %s58, 1
    %p62 = scmp.eq.s32.totalorder %s12, 1
    %p63 = scmp.ne.s32.totalorder %s58, %s60
    %p64 = scmp.eq.s32.totalorder %s12, 0
    %p65 = por %p63, %p64
    %p66 = scmp.ne.s32.totalorder %s58, %s60
    %p67 = scmp.eq.s32.totalorder %s17, 1
    %p68 = por %p66, %p67
    %p69 = scmp.ne.s32.totalorder %s60, %s61
    %p70 = scmp.eq.s32.totalorder %s17, 0
    %p71 = por %p69, %p70
    %p72 = scmp.ne.s32.totalorder %s60, %s61
    %p73 = scmp.eq.s32.totalorder %s18, 1
    %p74 = por %p72, %p73
    %p76 = scmp.ne.s32.totalorder %s61, %s75
    %p77 = scmp.eq.s32.totalorder %s18, 0
    %p78 = por %p76, %p77
    %s80 = sadd.s32 %s79, 1
    %p83 = scmp.eq.s32.totalorder %s12, 1
    %p84 = scmp.ne.s32.totalorder %s79, %s81
    %p85 = scmp.eq.s32.totalorder %s12, 0
    %p86 = por %p84, %p85
    %p87 = scmp.ne.s32.totalorder %s79, %s81
    %p88 = scmp.eq.s32.totalorder %s17, 1
    %p89 = por %p87, %p88
    %p90 = scmp.ne.s32.totalorder %s81, %s82
    %p91 = scmp.eq.s32.totalorder %s17, 0
    %p92 = por %p90, %p91
    %p93 = scmp.ne.s32.totalorder %s81, %s82
    %p94 = scmp.eq.s32.totalorder %s18, 1
    %p95 = por %p93, %p94
    %p97 = scmp.ne.s32.totalorder %s82, %s96
    %p98 = scmp.eq.s32.totalorder %s18, 0
    %p99 = por %p97, %p98
    %s100 = ssub.s32 %s19, %s31
    %s101 = ssub.s32 %s20, %s27
    %s102 = sor.u32 %s100, %s101
    %p103 = scmp.eq.s32.totalorder %s102, 0
    %s105 = sadd.s32 %s104, 1
    %s106 = scalar_select %p103, %s104, %s105
    %p109 = pneg %p103
    %p110 = scmp.eq.s32.totalorder %s12, 1
    %p111 = por %p109, %p110
    %p112 = scmp.ne.s32.totalorder %s104, %s107
    %p113 = scmp.eq.s32.totalorder %s12, 0
    %p114 = por %p112, %p113
    %p115 = scmp.ne.s32.totalorder %s104, %s107
    %p116 = scmp.eq.s32.totalorder %s17, 1
    %p117 = por %p115, %p116
    %p118 = scmp.ne.s32.totalorder %s107, %s108
    %p119 = scmp.eq.s32.totalorder %s17, 0
    %p120 = por %p118, %p119
    %p121 = scmp.ne.s32.totalorder %s107, %s108
    %p122 = scmp.eq.s32.totalorder %s18, 1
    %p123 = por %p121, %p122
    %p125 = scmp.ne.s32.totalorder %s108, %s124
    %p126 = scmp.eq.s32.totalorder %s18, 0
    %p127 = por %p125, %p126
    %s128 = ssub.s32 %s19, %s31
    %s129 = ssub.s32 %s20, %s27
    %s130 = sor.u32 %s128, %s129
    %p131 = scmp.eq.s32.totalorder %s130, 0
    %s133 = sadd.s32 %s132, 1
    %s134 = scalar_select %p131, %s132, %s133
    %p137 = pneg %p131
    %p138 = scmp.eq.s32.totalorder %s12, 1
    %p139 = por %p137, %p138
    %p140 = scmp.ne.s32.totalorder %s132, %s135
    %p141 = scmp.eq.s32.totalorder %s12, 0
    %p142 = por %p140, %p141
    %p143 = scmp.ne.s32.totalorder %s132, %s135
    %p144 = scmp.eq.s32.totalorder %s17, 1
    %p145 = por %p143, %p144
    %p146 = scmp.ne.s32.totalorder %s135, %s136
    %p147 = scmp.eq.s32.totalorder %s17, 0
    %p148 = por %p146, %p147
    %p149 = scmp.ne.s32.totalorder %s135, %s136
    %p150 = scmp.eq.s32.totalorder %s18, 1
    %p151 = por %p149, %p150
    %p153 = scmp.ne.s32.totalorder %s136, %s152
    %p154 = scmp.eq.s32.totalorder %s18, 0
    %p155 = por %p153, %p154
    %s156 = ssub.s32 %s19, %s31
    %s157 = ssub.s32 %s20, %s27
    %s158 = sor.u32 %s156, %s157
    %p159 = scmp.eq.s32.totalorder %s158, 0
    %s161 = sadd.s32 %s160, 1
    %s162 = scalar_select %p159, %s160, %s161
    %p165 = pneg %p159
    %p166 = scmp.eq.s32.totalorder %s12, 1
    %p167 = por %p165, %p166
    %p168 = scmp.ne.s32.totalorder %s160, %s163
    %p169 = scmp.eq.s32.totalorder %s12, 0
    %p170 = por %p168, %p169
    %p171 = scmp.ne.s32.totalorder %s160, %s163
    %p172 = scmp.eq.s32.totalorder %s17, 1
    %p173 = por %p171, %p172
    %p174 = scmp.ne.s32.totalorder %s163, %s164
    %p175 = scmp.eq.s32.totalorder %s17, 0
    %p176 = por %p174, %p175
    %p177 = scmp.ne.s32.totalorder %s163, %s164
    %p178 = scmp.eq.s32.totalorder %s18, 1
    %p179 = por %p177, %p178
    %p181 = scmp.ne.s32.totalorder %s164, %s180
    %p182 = scmp.eq.s32.totalorder %s18, 0
    %p183 = por %p181, %p182
    %p184 = scmp.le.s32.totalorder 1, %s12
    %p185 = scmp.lt.s32.totalorder %s12, 3
    %p186 = pnand %p184, %p185
    %p187 = pneg %p186
    // Predicated region
    $region9: #{conv_block_forward.2} parent=5 // pred_check
      _
    $region10: #{conv_block_forward.2} parent=5 // pred_check_branch
      %189 = sbr.rel (%p186) target = $region12
    $region11: #{conv_block_forward.2} parent=5 // pred_region
      %s190 = ssub.s32 %s12, 1
      // Predicated region
      $region13: #{conv_block_forward.2} parent=11 // pred_check
        %p191 = pneg %p71
      $region14: #{conv_block_forward.2} parent=11 // pred_check_branch
        %193 = sbr.rel (%p191) target = $region16
      $region15: #{conv_block_forward.2} parent=11 // pred_region
        _
      $region16: #{conv_block_forward.2} parent=11 // pred_fallthru
        _
      // Predicated region
      $region17: #{conv_block_forward.2} parent=11 // pred_check
        %p194 = pneg %p92
      $region18: #{conv_block_forward.2} parent=11 // pred_check_branch
        %196 = sbr.rel (%p194) target = $region20
      $region19: #{conv_block_forward.2} parent=11 // pred_region
        _
      $region20: #{conv_block_forward.2} parent=11 // pred_fallthru
        _
    $region12: #{conv_block_forward.2} parent=5 // pred_fallthru
      _
    %p197 = scmp.lt.s32.totalorder %s12, 2
    // Predicated region
    $region21: #{conv_block_forward.2} parent=5 // pred_check
      %p198 = pneg %p197
    $region22: #{conv_block_forward.2} parent=5 // pred_check_branch
      %200 = sbr.rel (%p198) target = $region24
    $region23: #{conv_block_forward.2} parent=5 // pred_region
      // Predicated region
      $region25: #{conv_block_forward.2} parent=23 // pred_check
        %p201 = pneg %p44
      $region26: #{conv_block_forward.2} parent=23 // pred_check_branch
        %203 = sbr.rel (%p201) target = $region28
      $region27: #{conv_block_forward.2} parent=23 // pred_region
        %p204 = scmp.lt.s32.totalorder %s19, 1
        %s205 = scalar_select %p204, %s19, 1
        %s206 = smul.addr %s205, 32
        %s207 = smul.addr %s206, 4
        %s208 = scalar_lea.vmem %s0, %s207
      $region28: #{conv_block_forward.2} parent=23 // pred_fallthru
        _
    $region24: #{conv_block_forward.2} parent=5 // pred_fallthru
      _
    %p209 = scmp.le.s32.totalorder 1, %s12
    %p210 = scmp.lt.s32.totalorder %s12, 3
    %p211 = pnand %p209, %p210
    %p212 = pneg %p211
    // Predicated region
    $region29: #{conv_block_forward.2} parent=5 // pred_check
      _
    $region30: #{conv_block_forward.2} parent=5 // pred_check_branch
      %214 = sbr.rel (%p211) target = $region32
    $region31: #{conv_block_forward.2} parent=5 // pred_region
      %s215 = ssub.s32 %s12, 1
      %p216 = scmp.lt.s32.totalorder %s21, 1
      %s217 = scalar_select %p216, %s21, 1
      %s218 = smul.addr %s217, 32
      %s219 = smul.addr %s218, 4
      %s220 = scalar_lea.vmem %s0, %s219
      %p221 = pneg %p50
      %p222 = pneg %p47
      %p223 = pneg %p71
      %p224 = pneg %p68
      %p225 = pneg %p92
      %p226 = pneg %p89
      %p227 = pneg %p120
      %p228 = pneg %p117
      %s229 = smul.u32 16, %s22
      %p230 = scmp.lt.s32.totalorder %s21, 1
      %s231 = scalar_select %p230, %s21, 1
      %p232 = scmp.lt.s32.totalorder %s229, 15
      %s233 = scalar_select %p232, %s229, 15
      %s234 = smul.addr %s233, 2
      %s235 = smul.addr %s231, 32
      %s236 = sadd.s32 %s234, %s235
      %s237 = smul.addr %s236, 4
      %s238 = scalar_lea.vmem %s3, %s237
      %p239 = pneg %p148
      %p240 = pneg %p145
      %p241 = scmp.lt.s32.totalorder %s21, 1
      %s242 = scalar_select %p241, %s21, 1
      %p243 = scmp.lt.s32.totalorder %s22, 0
      %s244 = scalar_select %p243, %s22, 0
      %s245 = sadd.s32 %s244, %s242
      %s246 = scalar_lea.vmem %s4, %s245
      %p247 = pneg %p176
      %p248 = pneg %p173
      %p249 = scmp.lt.s32.totalorder %s21, 1
      %s250 = scalar_select %p249, %s21, 1
      %p251 = scmp.lt.s32.totalorder %s22, 0
      %s252 = scalar_select %p251, %s22, 0
      %s253 = sadd.s32 %s252, %s250
      %s254 = scalar_lea.vmem %s5, %s253
      %p255 = scmp.lt.s32.totalorder %s21, 1
      %s256 = scalar_select %p255, %s21, 1
      %s257 = smul.addr %s256, 32
      %s258 = smul.addr %s257, 4
      %s259 = scalar_lea.vmem %s0, %s258
      %s260 = smul.u32 16, %s22
      %p261 = scmp.lt.s32.totalorder %s21, 1
      %s262 = scalar_select %p261, %s21, 1
      %p263 = scmp.lt.s32.totalorder %s260, 15
      %s264 = scalar_select %p263, %s260, 15
      %s265 = smul.addr %s264, 2
      %s266 = smul.addr %s262, 32
      %s267 = sadd.s32 %s265, %s266
      %s268 = smul.addr %s267, 4
      %s269 = scalar_lea.vmem %s3, %s268
      %s270 = smul.u32 16, %s22
      %p271 = scmp.lt.s32.totalorder %s21, 1
      %s272 = scalar_select %p271, %s21, 1
      %p273 = scmp.lt.s32.totalorder %s22, 0
      %s274 = scalar_select %p273, %s22, 0
      %s275 = sadd.s32 %s274, %s272
      %s276 = scalar_lea.vmem %s4, %s275
      %p277 = scmp.lt.s32.totalorder %s21, 1
      %s278 = scalar_select %p277, %s21, 1
      %p279 = scmp.lt.s32.totalorder %s22, 0
      %s280 = scalar_select %p279, %s22, 0
      %s281 = sadd.s32 %s280, %s278
      %s282 = scalar_lea.vmem %s5, %s281
      %s284 = smul.u32 %s22, 16
      %s285 = smul.u32 %s284, 2
      %s286 = smul.addr %s285, 4
      %s287 = scalar_lea.vmem %s259, %s286
      %v288 = vld [vmem:[%s287] sm:$0xf]
      %v289 = vld [vmem:[%s287 + $0x4] sm:$0xf]
      %v290 = vld [vmem:[%s287 + $0x8] sm:$0xf]
      %v291 = vld [vmem:[%s287 + $0xc] sm:$0xf]
      %v292 = vld [vmem:[%s287 + $0x10] sm:$0xf]
      %v293 = vld [vmem:[%s287 + $0x14] sm:$0xf]
      %v294 = vld [vmem:[%s287 + $0x18] sm:$0xf]
      %v295 = vld [vmem:[%s287 + $0x1c] sm:$0xf]
      %v296 = vld [vmem:[%s287 + $0x20] sm:$0xf]
      %v297 = vld [vmem:[%s287 + $0x24] sm:$0xf]
      %v298 = vld [vmem:[%s287 + $0x28] sm:$0xf]
      %v299 = vld [vmem:[%s287 + $0x2c] sm:$0xf]
      %v300 = vld [vmem:[%s287 + $0x30] sm:$0xf]
      %v301 = vld [vmem:[%s287 + $0x34] sm:$0xf]
      %v302 = vld [vmem:[%s287 + $0x38] sm:$0xf]
      %v303 = vld [vmem:[%s287 + $0x3c] sm:$0xf]
      %v304 = vld [vmem:[%s287 + $0x40] sm:$0xf]
      %v305 = vld [vmem:[%s287 + $0x44] sm:$0xf]
      %v306 = vld [vmem:[%s287 + $0x48] sm:$0xf]
      %v307 = vld [vmem:[%s287 + $0x4c] sm:$0xf]
      %v308 = vld [vmem:[%s287 + $0x50] sm:$0xf]
      %v309 = vld [vmem:[%s287 + $0x54] sm:$0xf]
      %v310 = vld [vmem:[%s287 + $0x58] sm:$0xf]
      %v311 = vld [vmem:[%s287 + $0x5c] sm:$0xf]
      %v312 = vld [vmem:[%s287 + $0x60] sm:$0xf]
      %v313 = vld [vmem:[%s287 + $0x64] sm:$0xf]
      %v314 = vld [vmem:[%s287 + $0x68] sm:$0xf]
      %v315 = vld [vmem:[%s287 + $0x6c] sm:$0xf]
      %v316 = vld [vmem:[%s287 + $0x70] sm:$0xf]
      %v317 = vld [vmem:[%s287 + $0x74] sm:$0xf]
      %v318 = vld [vmem:[%s287 + $0x78] sm:$0xf]
      %v319 = vld [vmem:[%s287 + $0x7c] sm:$0xf]
      %s320 = ssub.s32 %s284, 1
      %p321 = scmp.gt.s32.totalorder %s320, 0
      %s322 = scalar_select %p321, %s320, 0
      %s323 = smul.u32 %s322, 2
      %s324 = smul.addr %s323, 4
      %s325 = scalar_lea.vmem %s259, %s324
      %v326 = vld [vmem:[%s325] sm:$0xf]
      %v327 = vld [vmem:[%s325 + $0x4] sm:$0xf]
      %s328 = sadd.s32 %s284, 16
      %p329 = scmp.lt.s32.totalorder %s328, 15
      %s330 = scalar_select %p329, %s328, 15
      %s331 = smul.u32 %s330, 2
      %s332 = smul.addr %s331, 4
      %s333 = scalar_lea.vmem %s259, %s332
      %v334 = vld [vmem:[%s333] sm:$0xf]
      %v335 = vld [vmem:[%s333 + $0x4] sm:$0xf]
      %p336 = scmp.eq.s32.totalorder %s22, 0
      %s337 = scalar_select %p336, 1, 0
      %v338 = vstv %s337
      %vm339 = vcmp.eq.s32.totalorder %v338, 1
      %v340 = vsel %vm339, 0, %v326
      %v341 = vsel %vm339, 0, %v327
      %v342 = vsel %vm339, 0, %v334
      %v343 = vsel %vm339, 0, %v335
      %v380 = vunpack.c.l.b16 %v340
      %v381 = vunpack.c.l.b16 %v341
      %v382 = vunpack.c.l.b16 %v288
      %v383 = vunpack.c.l.b16 %v289
      %v384 = vunpack.c.l.b16 %v290
      %v385 = vunpack.c.l.b16 %v291
      %v386 = vunpack.c.l.b16 %v292
      %v387 = vunpack.c.l.b16 %v293
      %v388 = vunpack.c.l.b16 %v294
      %v389 = vunpack.c.l.b16 %v295
      %v390 = vunpack.c.l.b16 %v296
      %v391 = vunpack.c.l.b16 %v297
      %v392 = vunpack.c.l.b16 %v298
      %v393 = vunpack.c.l.b16 %v299
      %v394 = vunpack.c.l.b16 %v300
      %v395 = vunpack.c.l.b16 %v301
      %v396 = vunpack.c.l.b16 %v302
      %v397 = vunpack.c.l.b16 %v303
      %v398 = vunpack.c.l.b16 %v304
      %v399 = vunpack.c.l.b16 %v305
      %v400 = vunpack.c.l.b16 %v306
      %v401 = vunpack.c.l.b16 %v307
      %v402 = vunpack.c.l.b16 %v308
      %v403 = vunpack.c.l.b16 %v309
      %v404 = vunpack.c.l.b16 %v310
      %v405 = vunpack.c.l.b16 %v311
      %v406 = vunpack.c.l.b16 %v312
      %v407 = vunpack.c.l.b16 %v313
      %v408 = vunpack.c.l.b16 %v314
      %v409 = vunpack.c.l.b16 %v315
      %v410 = vunpack.c.l.b16 %v316
      %v411 = vunpack.c.l.b16 %v317
      %v412 = vunpack.c.l.b16 %v318
      %v413 = vunpack.c.l.b16 %v319
      %v414 = vunpack.c.l.b16 %v342
      %v415 = vunpack.c.l.b16 %v343
      %v416 = vpack.c.b16 %v380, %v380
      %v417 = vpack.c.b16 %v381, %v381
      %v418 = vpack.c.b16 %v382, %v382
      %v419 = vpack.c.b16 %v383, %v383
      %v420 = vpack.c.b16 %v384, %v384
      %v421 = vpack.c.b16 %v385, %v385
      %v422 = vpack.c.b16 %v386, %v386
      %v423 = vpack.c.b16 %v387, %v387
      %v424 = vpack.c.b16 %v388, %v388
      %v425 = vpack.c.b16 %v389, %v389
      %v426 = vpack.c.b16 %v390, %v390
      %v427 = vpack.c.b16 %v391, %v391
      %v428 = vpack.c.b16 %v392, %v392
      %v429 = vpack.c.b16 %v393, %v393
      %v430 = vpack.c.b16 %v394, %v394
      %v431 = vpack.c.b16 %v395, %v395
      %v432 = vpack.c.b16 %v396, %v396
      %v433 = vpack.c.b16 %v397, %v397
      %v434 = vpack.c.b16 %v398, %v398
      %v435 = vpack.c.b16 %v399, %v399
      %v436 = vpack.c.b16 %v400, %v400
      %v437 = vpack.c.b16 %v401, %v401
      %v438 = vpack.c.b16 %v402, %v402
      %v439 = vpack.c.b16 %v403, %v403
      %v440 = vpack.c.b16 %v404, %v404
      %v441 = vpack.c.b16 %v405, %v405
      %v442 = vpack.c.b16 %v406, %v406
      %v443 = vpack.c.b16 %v407, %v407
      %v444 = vpack.c.b16 %v408, %v408
      %v445 = vpack.c.b16 %v409, %v409
      %v446 = vpack.c.b16 %v410, %v410
      %v447 = vpack.c.b16 %v411, %v411
      %v448 = vpack.c.b16 %v412, %v412
      %v449 = vpack.c.b16 %v413, %v413
      %v450 = vpack.c.b16 %v414, %v414
      %v451 = vpack.c.b16 %v415, %v415
      %vm452 = vcmask 1043456
      %v455 = vsel %vm452, 0, %v416
      %v457 = vsel %vm452, 0, %v418
      %v459 = vsel %vm452, 0, %v420
      %v461 = vsel %vm452, 0, %v422
      %v463 = vsel %vm452, 0, %v424
      %v465 = vsel %vm452, 0, %v426
      %v467 = vsel %vm452, 0, %v428
      %v469 = vsel %vm452, 0, %v430
      %v471 = vsel %vm452, 0, %v432
      %v473 = vsel %vm452, 0, %v434
      %v475 = vsel %vm452, 0, %v436
      %v477 = vsel %vm452, 0, %v438
      %v479 = vsel %vm452, 0, %v440
      %v481 = vsel %vm452, 0, %v442
      %v483 = vsel %vm452, 0, %v444
      %v485 = vsel %vm452, 0, %v446
      %v487 = vsel %vm452, 0, %v448
      %v489 = vsel %vm452, 0, %v450
      %v491 = vsel %vm452, %v417, 0
      %v493 = vsel %vm452, %v419, 0
      %v495 = vsel %vm452, %v421, 0
      %v497 = vsel %vm452, %v423, 0
      %v499 = vsel %vm452, %v425, 0
      %v501 = vsel %vm452, %v427, 0
      %v503 = vsel %vm452, %v429, 0
      %v505 = vsel %vm452, %v431, 0
      %v507 = vsel %vm452, %v433, 0
      %v509 = vsel %vm452, %v435, 0
      %v511 = vsel %vm452, %v437, 0
      %v513 = vsel %vm452, %v439, 0
      %v515 = vsel %vm452, %v441, 0
      %v517 = vsel %vm452, %v443, 0
      %v519 = vsel %vm452, %v445, 0
      %v521 = vsel %vm452, %v447, 0
      %v523 = vsel %vm452, %v449, 0
      %v525 = vsel %vm452, %v451, 0
      %vm526 = vsmask.f32 4352
      %v527 = vshrl.u32 %v455, 16
      %v529 = vrot.slane %v527, 3
      %v530 = vshll.u32 %v455, 16
      %v532 = vrot.slane %v530, 4
      %v533 = vor.u32 %v529, %v532
      %v534 = vshrl.u32 %v491, 16
      %v536 = vrot.slane %v534, 3
      %v537 = vshll.u32 %v491, 16
      %v539 = vrot.slane %v537, 4
      %v540 = vor.u32 %v536, %v539
      %v541 = vsel %vm526, %v533, %v540
      %v542 = vshrl.u32 %v457, 16
      %v544 = vrot.slane %v542, 3
      %v545 = vshll.u32 %v457, 16
      %v547 = vrot.slane %v545, 4
      %v548 = vor.u32 %v544, %v547
      %v549 = vshrl.u32 %v493, 16
      %v551 = vrot.slane %v549, 3
      %v552 = vshll.u32 %v493, 16
      %v554 = vrot.slane %v552, 4
      %v555 = vor.u32 %v551, %v554
      %v556 = vsel %vm526, %v548, %v555
      %v557 = vshrl.u32 %v459, 16
      %v559 = vrot.slane %v557, 3
      %v560 = vshll.u32 %v459, 16
      %v562 = vrot.slane %v560, 4
      %v563 = vor.u32 %v559, %v562
      %v564 = vshrl.u32 %v495, 16
      %v566 = vrot.slane %v564, 3
      %v567 = vshll.u32 %v495, 16
      %v569 = vrot.slane %v567, 4
      %v570 = vor.u32 %v566, %v569
      %v571 = vsel %vm526, %v563, %v570
      %v572 = vshrl.u32 %v461, 16
      %v574 = vrot.slane %v572, 3
      %v575 = vshll.u32 %v461, 16
      %v577 = vrot.slane %v575, 4
      %v578 = vor.u32 %v574, %v577
      %v579 = vshrl.u32 %v497, 16
      %v581 = vrot.slane %v579, 3
      %v582 = vshll.u32 %v497, 16
      %v584 = vrot.slane %v582, 4
      %v585 = vor.u32 %v581, %v584
      %v586 = vsel %vm526, %v578, %v585
      %v587 = vshrl.u32 %v463, 16
      %v589 = vrot.slane %v587, 3
      %v590 = vshll.u32 %v463, 16
      %v592 = vrot.slane %v590, 4
      %v593 = vor.u32 %v589, %v592
      %v594 = vshrl.u32 %v499, 16
      %v596 = vrot.slane %v594, 3
      %v597 = vshll.u32 %v499, 16
      %v599 = vrot.slane %v597, 4
      %v600 = vor.u32 %v596, %v599
      %v601 = vsel %vm526, %v593, %v600
      %v602 = vshrl.u32 %v465, 16
      %v604 = vrot.slane %v602, 3
      %v605 = vshll.u32 %v465, 16
      %v607 = vrot.slane %v605, 4
      %v608 = vor.u32 %v604, %v607
      %v609 = vshrl.u32 %v501, 16
      %v611 = vrot.slane %v609, 3
      %v612 = vshll.u32 %v501, 16
      %v614 = vrot.slane %v612, 4
      %v615 = vor.u32 %v611, %v614
      %v616 = vsel %vm526, %v608, %v615
      %v617 = vshrl.u32 %v467, 16
      %v619 = vrot.slane %v617, 3
      %v620 = vshll.u32 %v467, 16
      %v622 = vrot.slane %v620, 4
      %v623 = vor.u32 %v619, %v622
      %v624 = vshrl.u32 %v503, 16
      %v626 = vrot.slane %v624, 3
      %v627 = vshll.u32 %v503, 16
      %v629 = vrot.slane %v627, 4
      %v630 = vor.u32 %v626, %v629
      %v631 = vsel %vm526, %v623, %v630
      %v632 = vshrl.u32 %v469, 16
      %v634 = vrot.slane %v632, 3
      %v635 = vshll.u32 %v469, 16
      %v637 = vrot.slane %v635, 4
      %v638 = vor.u32 %v634, %v637
      %v639 = vshrl.u32 %v505, 16
      %v641 = vrot.slane %v639, 3
      %v642 = vshll.u32 %v505, 16
      %v644 = vrot.slane %v642, 4
      %v645 = vor.u32 %v641, %v644
      %v646 = vsel %vm526, %v638, %v645
      %v647 = vshrl.u32 %v471, 16
      %v649 = vrot.slane %v647, 3
      %v650 = vshll.u32 %v471, 16
      %v652 = vrot.slane %v650, 4
      %v653 = vor.u32 %v649, %v652
      %v654 = vshrl.u32 %v507, 16
      %v656 = vrot.slane %v654, 3
      %v657 = vshll.u32 %v507, 16
      %v659 = vrot.slane %v657, 4
      %v660 = vor.u32 %v656, %v659
      %v661 = vsel %vm526, %v653, %v660
      %v662 = vshrl.u32 %v473, 16
      %v664 = vrot.slane %v662, 3
      %v665 = vshll.u32 %v473, 16
      %v667 = vrot.slane %v665, 4
      %v668 = vor.u32 %v664, %v667
      %v669 = vshrl.u32 %v509, 16
      %v671 = vrot.slane %v669, 3
      %v672 = vshll.u32 %v509, 16
      %v674 = vrot.slane %v672, 4
      %v675 = vor.u32 %v671, %v674
      %v676 = vsel %vm526, %v668, %v675
      %v677 = vshrl.u32 %v475, 16
      %v679 = vrot.slane %v677, 3
      %v680 = vshll.u32 %v475, 16
      %v682 = vrot.slane %v680, 4
      %v683 = vor.u32 %v679, %v682
      %v684 = vshrl.u32 %v511, 16
      %v686 = vrot.slane %v684, 3
      %v687 = vshll.u32 %v511, 16
      %v689 = vrot.slane %v687, 4
      %v690 = vor.u32 %v686, %v689
      %v691 = vsel %vm526, %v683, %v690
      %v692 = vshrl.u32 %v477, 16
      %v694 = vrot.slane %v692, 3
      %v695 = vshll.u32 %v477, 16
      %v697 = vrot.slane %v695, 4
      %v698 = vor.u32 %v694, %v697
      %v699 = vshrl.u32 %v513, 16
      %v701 = vrot.slane %v699, 3
      %v702 = vshll.u32 %v513, 16
      %v704 = vrot.slane %v702, 4
      %v705 = vor.u32 %v701, %v704
      %v706 = vsel %vm526, %v698, %v705
      %v707 = vshrl.u32 %v479, 16
      %v709 = vrot.slane %v707, 3
      %v710 = vshll.u32 %v479, 16
      %v712 = vrot.slane %v710, 4
      %v713 = vor.u32 %v709, %v712
      %v714 = vshrl.u32 %v515, 16
      %v716 = vrot.slane %v714, 3
      %v717 = vshll.u32 %v515, 16
      %v719 = vrot.slane %v717, 4
      %v720 = vor.u32 %v716, %v719
      %v721 = vsel %vm526, %v713, %v720
      %v722 = vshrl.u32 %v481, 16
      %v724 = vrot.slane %v722, 3
      %v725 = vshll.u32 %v481, 16
      %v727 = vrot.slane %v725, 4
      %v728 = vor.u32 %v724, %v727
      %v729 = vshrl.u32 %v517, 16
      %v731 = vrot.slane %v729, 3
      %v732 = vshll.u32 %v517, 16
      %v734 = vrot.slane %v732, 4
      %v735 = vor.u32 %v731, %v734
      %v736 = vsel %vm526, %v728, %v735
      %v737 = vshrl.u32 %v483, 16
      %v739 = vrot.slane %v737, 3
      %v740 = vshll.u32 %v483, 16
      %v742 = vrot.slane %v740, 4
      %v743 = vor.u32 %v739, %v742
      %v744 = vshrl.u32 %v519, 16
      %v746 = vrot.slane %v744, 3
      %v747 = vshll.u32 %v519, 16
      %v749 = vrot.slane %v747, 4
      %v750 = vor.u32 %v746, %v749
      %v751 = vsel %vm526, %v743, %v750
      %v752 = vshrl.u32 %v485, 16
      %v754 = vrot.slane %v752, 3
      %v755 = vshll.u32 %v485, 16
      %v757 = vrot.slane %v755, 4
      %v758 = vor.u32 %v754, %v757
      %v759 = vshrl.u32 %v521, 16
      %v761 = vrot.slane %v759, 3
      %v762 = vshll.u32 %v521, 16
      %v764 = vrot.slane %v762, 4
      %v765 = vor.u32 %v761, %v764
      %v766 = vsel %vm526, %v758, %v765
      %v767 = vld [vmem:[%s1] sm:$0x3]
      %vm800 = vcmask 1043456
      %v801 = vrot.slane %v455, 4
      %v802 = vrot.slane %v491, 4
      %v803 = vsel %vm800, %v801, %v802
      %v804 = vrot.slane %v457, 4
      %v805 = vrot.slane %v493, 4
      %v806 = vsel %vm800, %v804, %v805
      %v807 = vrot.slane %v459, 4
      %v808 = vrot.slane %v495, 4
      %v809 = vsel %vm800, %v807, %v808
      %v810 = vrot.slane %v461, 4
      %v811 = vrot.slane %v497, 4
      %v812 = vsel %vm800, %v810, %v811
      %v813 = vrot.slane %v463, 4
      %v814 = vrot.slane %v499, 4
      %v815 = vsel %vm800, %v813, %v814
      %v816 = vrot.slane %v465, 4
      %v817 = vrot.slane %v501, 4
      %v818 = vsel %vm800, %v816, %v817
      %v819 = vrot.slane %v467, 4
      %v820 = vrot.slane %v503, 4
      %v821 = vsel %vm800, %v819, %v820
      %v822 = vrot.slane %v469, 4
      %v823 = vrot.slane %v505, 4
      %v824 = vsel %vm800, %v822, %v823
      %v825 = vrot.slane %v471, 4
      %v826 = vrot.slane %v507, 4
      %v827 = vsel %vm800, %v825, %v826
      %v828 = vrot.slane %v473, 4
      %v829 = vrot.slane %v509, 4
      %v830 = vsel %vm800, %v828, %v829
      %v831 = vrot.slane %v475, 4
      %v832 = vrot.slane %v511, 4
      %v833 = vsel %vm800, %v831, %v832
      %v834 = vrot.slane %v477, 4
      %v835 = vrot.slane %v513, 4
      %v836 = vsel %vm800, %v834, %v835
      %v837 = vrot.slane %v479, 4
      %v838 = vrot.slane %v515, 4
      %v839 = vsel %vm800, %v837, %v838
      %v840 = vrot.slane %v481, 4
      %v841 = vrot.slane %v517, 4
      %v842 = vsel %vm800, %v840, %v841
      %v843 = vrot.slane %v483, 4
      %v844 = vrot.slane %v519, 4
      %v845 = vsel %vm800, %v843, %v844
      %v846 = vrot.slane %v485, 4
      %v847 = vrot.slane %v521, 4
      %v848 = vsel %vm800, %v846, %v847
      %s849 = scalar_lea.vmem %s1, 2
      %v850 = vld [vmem:[%s849] sm:$0x3]
      %vm851 = vcmask 31744
      %v853 = vsel %vm851, %v803, 0
      %v856 = vsel %vm851, %v806, 0
      %v859 = vsel %vm851, %v809, 0
      %v862 = vsel %vm851, %v812, 0
      %v865 = vsel %vm851, %v815, 0
      %v868 = vsel %vm851, %v818, 0
      %v871 = vsel %vm851, %v821, 0
      %v874 = vsel %vm851, %v824, 0
      %v877 = vsel %vm851, %v827, 0
      %v880 = vsel %vm851, %v830, 0
      %v883 = vsel %vm851, %v833, 0
      %v886 = vsel %vm851, %v836, 0
      %v889 = vsel %vm851, %v839, 0
      %v892 = vsel %vm851, %v842, 0
      %v895 = vsel %vm851, %v845, 0
      %v898 = vsel %vm851, %v848, 0
      %vm900 = vcmask 1041408
      %v902 = vsel %vm900, %v850, 0
      %904 = vmatprep.subr.bf16.mxu0 0
      %905 = vmatpush1.bf16.msra.mxu0 0
      %906 = vmatprep.subr.bf16.mxu0 0
      %907 = vmatpush1.bf16.msra.mxu0 0
      %908 = vmatprep.subr.bf16.mxu0 0
      %909 = vmatpush1.bf16.msra.mxu0 0
      %910 = vmatprep.subr.bf16.mxu0 0
      %911 = vmatpush1.bf16.msra.mxu0 0
      %912 = vmatprep.subr.bf16.mxu0 0
      %913 = vmatpush1.bf16.msra.mxu0 0
      %914 = vmatprep.subr.bf16.mxu0 0
      %915 = vmatpush1.bf16.msra.mxu0 0
      %916 = vmatprep.subr.bf16.mxu0 0
      %917 = vmatpush1.bf16.msra.mxu0 0
      %918 = vmatprep.subr.bf16.mxu0 0
      %919 = vmatpush1.bf16.msra.mxu0 %v902
      %920 = vmatprep.subr.bf16.mxu0 0
      %921 = vmatpush2.bf16.msra.mxu0 0
      %922 = vmatprep.subr.bf16.mxu0 0
      %923 = vmatpush2.bf16.msra.mxu0 0
      %924 = vmatprep.subr.bf16.mxu0 0
      %925 = vmatpush2.bf16.msra.mxu0 0
      %926 = vmatprep.subr.bf16.mxu0 0
      %927 = vmatpush2.bf16.msra.mxu0 0
      %928 = vmatprep.subr.bf16.mxu0 0
      %929 = vmatpush2.bf16.msra.mxu0 0
      %930 = vmatprep.subr.bf16.mxu0 0
      %931 = vmatpush2.bf16.msra.mxu0 0
      %932 = vmatprep.subr.bf16.mxu0 0
      %933 = vmatpush2.bf16.msra.mxu0 0
      %934 = vmatprep.subr.bf16.mxu0 0
      %935 = vmatpush2.bf16.msra.mxu0 0
      %936 = vmatprep.mubr.bf16.mxu0 0
      %937 = vmatmul.mubr.bf16.gmra.mxu0 %v853
      %v938 = vpop.f32.mrf.mxu0
      %v939 = vadd.f32 0.0, %v938
      %v940 = vpop.f32.mrf.mxu0
      %v941 = vpop.f32.mrf.mxu0
      %v942 = vadd.f32 0.0, %v941
      %v943 = vpop.f32.mrf.mxu0
      %944 = vmatprep.mubr.bf16.mxu0 0
      %945 = vmatmul.mubr.bf16.gmra.mxu0 %v856
      %v946 = vpop.f32.mrf.mxu0
      %v947 = vadd.f32 0.0, %v946
      %v948 = vpop.f32.mrf.mxu0
      %v949 = vpop.f32.mrf.mxu0
      %v950 = vadd.f32 0.0, %v949
      %v951 = vpop.f32.mrf.mxu0
      %952 = vmatprep.mubr.bf16.mxu0 0
      %953 = vmatmul.mubr.bf16.gmra.mxu0 %v859
      %v954 = vpop.f32.mrf.mxu0
      %v955 = vadd.f32 0.0, %v954
      %v956 = vpop.f32.mrf.mxu0
      %v957 = vpop.f32.mrf.mxu0
      %v958 = vadd.f32 0.0, %v957
      %v959 = vpop.f32.mrf.mxu0
      %960 = vmatprep.mubr.bf16.mxu0 0
      %961 = vmatmul.mubr.bf16.gmra.mxu0 %v862
      %v962 = vpop.f32.mrf.mxu0
      %v963 = vadd.f32 0.0, %v962
      %v964 = vpop.f32.mrf.mxu0
      %v965 = vpop.f32.mrf.mxu0
      %v966 = vadd.f32 0.0, %v965
      %v967 = vpop.f32.mrf.mxu0
      %968 = vmatprep.mubr.bf16.mxu0 0
      %969 = vmatmul.mubr.bf16.gmra.mxu0 %v865
      %v970 = vpop.f32.mrf.mxu0
      %v971 = vadd.f32 0.0, %v970
      %v972 = vpop.f32.mrf.mxu0
      %v973 = vpop.f32.mrf.mxu0
      %v974 = vadd.f32 0.0, %v973
      %v975 = vpop.f32.mrf.mxu0
      %976 = vmatprep.mubr.bf16.mxu0 0
      %977 = vmatmul.mubr.bf16.gmra.mxu0 %v868
      %v978 = vpop.f32.mrf.mxu0
      %v979 = vadd.f32 0.0, %v978
      %v980 = vpop.f32.mrf.mxu0
      %v981 = vpop.f32.mrf.mxu0
      %v982 = vadd.f32 0.0, %v981
      %v983 = vpop.f32.mrf.mxu0
      %984 = vmatprep.mubr.bf16.mxu0 0
      %985 = vmatmul.mubr.bf16.gmra.mxu0 %v871
      %v986 = vpop.f32.mrf.mxu0
      %v987 = vadd.f32 0.0, %v986
      %v988 = vpop.f32.mrf.mxu0
      %v989 = vpop.f32.mrf.mxu0
      %v990 = vadd.f32 0.0, %v989
      %v991 = vpop.f32.mrf.mxu0
      %992 = vmatprep.mubr.bf16.mxu0 0
      %993 = vmatmul.mubr.bf16.gmra.mxu0 %v874
      %v994 = vpop.f32.mrf.mxu0
      %v995 = vadd.f32 0.0, %v994
      %v996 = vpop.f32.mrf.mxu0
      %v997 = vpop.f32.mrf.mxu0
      %v998 = vadd.f32 0.0, %v997
      %v999 = vpop.f32.mrf.mxu0
      %1000 = vmatprep.mubr.bf16.mxu0 0
      %1001 = vmatmul.mubr.bf16.gmra.mxu0 %v877
      %v1002 = vpop.f32.mrf.mxu0
      %v1003 = vadd.f32 0.0, %v1002
      %v1004 = vpop.f32.mrf.mxu0
      %v1005 = vpop.f32.mrf.mxu0
      %v1006 = vadd.f32 0.0, %v1005
      %v1007 = vpop.f32.mrf.mxu0
      %1008 = vmatprep.mubr.bf16.mxu0 0
      %1009 = vmatmul.mubr.bf16.gmra.mxu0 %v880
      %v1010 = vpop.f32.mrf.mxu0
      %v1011 = vadd.f32 0.0, %v1010
      %v1012 = vpop.f32.mrf.mxu0
      %v1013 = vpop.f32.mrf.mxu0
      %v1014 = vadd.f32 0.0, %v1013
      %v1015 = vpop.f32.mrf.mxu0
      %1016 = vmatprep.mubr.bf16.mxu0 0
      %1017 = vmatmul.mubr.bf16.gmra.mxu0 %v883
      %v1018 = vpop.f32.mrf.mxu0
      %v1019 = vadd.f32 0.0, %v1018
      %v1020 = vpop.f32.mrf.mxu0
      %v1021 = vpop.f32.mrf.mxu0
      %v1022 = vadd.f32 0.0, %v1021
      %v1023 = vpop.f32.mrf.mxu0
      %1024 = vmatprep.mubr.bf16.mxu0 0
      %1025 = vmatmul.mubr.bf16.gmra.mxu0 %v886
      %v1026 = vpop.f32.mrf.mxu0
      %v1027 = vadd.f32 0.0, %v1026
      %v1028 = vpop.f32.mrf.mxu0
      %v1029 = vpop.f32.mrf.mxu0
      %v1030 = vadd.f32 0.0, %v1029
      %v1031 = vpop.f32.mrf.mxu0
      %1032 = vmatprep.mubr.bf16.mxu0 0
      %1033 = vmatmul.mubr.bf16.gmra.mxu0 %v889
      %v1034 = vpop.f32.mrf.mxu0
      %v1035 = vadd.f32 0.0, %v1034
      %v1036 = vpop.f32.mrf.mxu0
      %v1037 = vpop.f32.mrf.mxu0
      %v1038 = vadd.f32 0.0, %v1037
      %v1039 = vpop.f32.mrf.mxu0
      %1040 = vmatprep.mubr.bf16.mxu0 0
      %1041 = vmatmul.mubr.bf16.gmra.mxu0 %v892
      %v1042 = vpop.f32.mrf.mxu0
      %v1043 = vadd.f32 0.0, %v1042
      %v1044 = vpop.f32.mrf.mxu0
      %v1045 = vpop.f32.mrf.mxu0
      %v1046 = vadd.f32 0.0, %v1045
      %v1047 = vpop.f32.mrf.mxu0
      %1048 = vmatprep.mubr.bf16.mxu0 0
      %1049 = vmatmul.mubr.bf16.gmra.mxu0 %v895
      %v1050 = vpop.f32.mrf.mxu0
      %v1051 = vadd.f32 0.0, %v1050
      %v1052 = vpop.f32.mrf.mxu0
      %v1053 = vpop.f32.mrf.mxu0
      %v1054 = vadd.f32 0.0, %v1053
      %v1055 = vpop.f32.mrf.mxu0
      %1056 = vmatprep.mubr.bf16.mxu0 0
      %1057 = vmatmul.mubr.bf16.gmra.mxu0 %v898
      %v1058 = vpop.f32.mrf.mxu0
      %v1059 = vadd.f32 0.0, %v1058
      %v1060 = vpop.f32.mrf.mxu0
      %v1061 = vpop.f32.mrf.mxu0
      %v1062 = vadd.f32 0.0, %v1061
      %v1063 = vpop.f32.mrf.mxu0
      %1064 = vdwg.mxu0
      %v1066 = vsel %vm851, %v541, 0
      %v1069 = vsel %vm851, %v556, 0
      %v1072 = vsel %vm851, %v571, 0
      %v1075 = vsel %vm851, %v586, 0
      %v1078 = vsel %vm851, %v601, 0
      %v1081 = vsel %vm851, %v616, 0
      %v1084 = vsel %vm851, %v631, 0
      %v1087 = vsel %vm851, %v646, 0
      %v1090 = vsel %vm851, %v661, 0
      %v1093 = vsel %vm851, %v676, 0
      %v1096 = vsel %vm851, %v691, 0
      %v1099 = vsel %vm851, %v706, 0
      %v1102 = vsel %vm851, %v721, 0
      %v1105 = vsel %vm851, %v736, 0
      %v1108 = vsel %vm851, %v751, 0
      %v1111 = vsel %vm851, %v766, 0
      %v1114 = vsel %vm900, %v767, 0
      %1116 = vmatprep.subr.bf16.mxu0 0
      %1117 = vmatpush1.bf16.msra.mxu0 0
      %1118 = vmatprep.subr.bf16.mxu0 0
      %1119 = vmatpush1.bf16.msra.mxu0 0
      %1120 = vmatprep.subr.bf16.mxu0 0
      %1121 = vmatpush1.bf16.msra.mxu0 0
      %1122 = vmatprep.subr.bf16.mxu0 0
      %1123 = vmatpush1.bf16.msra.mxu0 0
      %1124 = vmatprep.subr.bf16.mxu0 0
      %1125 = vmatpush1.bf16.msra.mxu0 0
      %1126 = vmatprep.subr.bf16.mxu0 0
      %1127 = vmatpush1.bf16.msra.mxu0 0
      %1128 = vmatprep.subr.bf16.mxu0 0
      %1129 = vmatpush1.bf16.msra.mxu0 0
      %1130 = vmatprep.subr.bf16.mxu0 0
      %1131 = vmatpush1.bf16.msra.mxu0 %v1114
      %1132 = vmatprep.subr.bf16.mxu0 0
      %1133 = vmatpush2.bf16.msra.mxu0 0
      %1134 = vmatprep.subr.bf16.mxu0 0
      %1135 = vmatpush2.bf16.msra.mxu0 0
      %1136 = vmatprep.subr.bf16.mxu0 0
      %1137 = vmatpush2.bf16.msra.mxu0 0
      %1138 = vmatprep.subr.bf16.mxu0 0
      %1139 = vmatpush2.bf16.msra.mxu0 0
      %1140 = vmatprep.subr.bf16.mxu0 0
      %1141 = vmatpush2.bf16.msra.mxu0 0
      %1142 = vmatprep.subr.bf16.mxu0 0
      %1143 = vmatpush2.bf16.msra.mxu0 0
      %1144 = vmatprep.subr.bf16.mxu0 0
      %1145 = vmatpush2.bf16.msra.mxu0 0
      %1146 = vmatprep.subr.bf16.mxu0 0
      %1147 = vmatpush2.bf16.msra.mxu0 0
      %1148 = vmatprep.mubr.bf16.mxu0 0
      %1149 = vmatmul.mubr.bf16.gmra.mxu0 %v1066
      %v1150 = vpop.f32.mrf.mxu0
      %v1151 = vadd.f32 %v939, %v1150
      %v1152 = vpop.f32.mrf.mxu0
      %v1153 = vpop.f32.mrf.mxu0
      %v1154 = vadd.f32 %v942, %v1153
      %v1155 = vpop.f32.mrf.mxu0
      %1156 = vmatprep.mubr.bf16.mxu0 0
      %1157 = vmatmul.mubr.bf16.gmra.mxu0 %v1069
      %v1158 = vpop.f32.mrf.mxu0
      %v1159 = vadd.f32 %v947, %v1158
      %v1160 = vpop.f32.mrf.mxu0
      %v1161 = vpop.f32.mrf.mxu0
      %v1162 = vadd.f32 %v950, %v1161
      %v1163 = vpop.f32.mrf.mxu0
      %1164 = vmatprep.mubr.bf16.mxu0 0
      %1165 = vmatmul.mubr.bf16.gmra.mxu0 %v1072
      %v1166 = vpop.f32.mrf.mxu0
      %v1167 = vadd.f32 %v955, %v1166
      %v1168 = vpop.f32.mrf.mxu0
      %v1169 = vpop.f32.mrf.mxu0
      %v1170 = vadd.f32 %v958, %v1169
      %v1171 = vpop.f32.mrf.mxu0
      %1172 = vmatprep.mubr.bf16.mxu0 0
      %1173 = vmatmul.mubr.bf16.gmra.mxu0 %v1075
      %v1174 = vpop.f32.mrf.mxu0
      %v1175 = vadd.f32 %v963, %v1174
      %v1176 = vpop.f32.mrf.mxu0
      %v1177 = vpop.f32.mrf.mxu0
      %v1178 = vadd.f32 %v966, %v1177
      %v1179 = vpop.f32.mrf.mxu0
      %1180 = vmatprep.mubr.bf16.mxu0 0
      %1181 = vmatmul.mubr.bf16.gmra.mxu0 %v1078
      %v1182 = vpop.f32.mrf.mxu0
      %v1183 = vadd.f32 %v971, %v1182
      %v1184 = vpop.f32.mrf.mxu0
      %v1185 = vpop.f32.mrf.mxu0
      %v1186 = vadd.f32 %v974, %v1185
      %v1187 = vpop.f32.mrf.mxu0
      %1188 = vmatprep.mubr.bf16.mxu0 0
      %1189 = vmatmul.mubr.bf16.gmra.mxu0 %v1081
      %v1190 = vpop.f32.mrf.mxu0
      %v1191 = vadd.f32 %v979, %v1190
      %v1192 = vpop.f32.mrf.mxu0
      %v1193 = vpop.f32.mrf.mxu0
      %v1194 = vadd.f32 %v982, %v1193
      %v1195 = vpop.f32.mrf.mxu0
      %1196 = vmatprep.mubr.bf16.mxu0 0
      %1197 = vmatmul.mubr.bf16.gmra.mxu0 %v1084
      %v1198 = vpop.f32.mrf.mxu0
      %v1199 = vadd.f32 %v987, %v1198
      %v1200 = vpop.f32.mrf.mxu0
      %v1201 = vpop.f32.mrf.mxu0
      %v1202 = vadd.f32 %v990, %v1201
      %v1203 = vpop.f32.mrf.mxu0
      %1204 = vmatprep.mubr.bf16.mxu0 0
      %1205 = vmatmul.mubr.bf16.gmra.mxu0 %v1087
      %v1206 = vpop.f32.mrf.mxu0
      %v1207 = vadd.f32 %v995, %v1206
      %v1208 = vpop.f32.mrf.mxu0
      %v1209 = vpop.f32.mrf.mxu0
      %v1210 = vadd.f32 %v998, %v1209
      %v1211 = vpop.f32.mrf.mxu0
      %1212 = vmatprep.mubr.bf16.mxu0 0
      %1213 = vmatmul.mubr.bf16.gmra.mxu0 %v1090
      %v1214 = vpop.f32.mrf.mxu0
      %v1215 = vadd.f32 %v1003, %v1214
      %v1216 = vpop.f32.mrf.mxu0
      %v1217 = vpop.f32.mrf.mxu0
      %v1218 = vadd.f32 %v1006, %v1217
      %v1219 = vpop.f32.mrf.mxu0
      %1220 = vmatprep.mubr.bf16.mxu0 0
      %1221 = vmatmul.mubr.bf16.gmra.mxu0 %v1093
      %v1222 = vpop.f32.mrf.mxu0
      %v1223 = vadd.f32 %v1011, %v1222
      %v1224 = vpop.f32.mrf.mxu0
      %v1225 = vpop.f32.mrf.mxu0
      %v1226 = vadd.f32 %v1014, %v1225
      %v1227 = vpop.f32.mrf.mxu0
      %1228 = vmatprep.mubr.bf16.mxu0 0
      %1229 = vmatmul.mubr.bf16.gmra.mxu0 %v1096
      %v1230 = vpop.f32.mrf.mxu0
      %v1231 = vadd.f32 %v1019, %v1230
      %v1232 = vpop.f32.mrf.mxu0
      %v1233 = vpop.f32.mrf.mxu0
      %v1234 = vadd.f32 %v1022, %v1233
      %v1235 = vpop.f32.mrf.mxu0
      %1236 = vmatprep.mubr.bf16.mxu0 0
      %1237 = vmatmul.mubr.bf16.gmra.mxu0 %v1099
      %v1238 = vpop.f32.mrf.mxu0
      %v1239 = vadd.f32 %v1027, %v1238
      %v1240 = vpop.f32.mrf.mxu0
      %v1241 = vpop.f32.mrf.mxu0
      %v1242 = vadd.f32 %v1030, %v1241
      %v1243 = vpop.f32.mrf.mxu0
      %1244 = vmatprep.mubr.bf16.mxu0 0
      %1245 = vmatmul.mubr.bf16.gmra.mxu0 %v1102
      %v1246 = vpop.f32.mrf.mxu0
      %v1247 = vadd.f32 %v1035, %v1246
      %v1248 = vpop.f32.mrf.mxu0
      %v1249 = vpop.f32.mrf.mxu0
      %v1250 = vadd.f32 %v1038, %v1249
      %v1251 = vpop.f32.mrf.mxu0
      %1252 = vmatprep.mubr.bf16.mxu0 0
      %1253 = vmatmul.mubr.bf16.gmra.mxu0 %v1105
      %v1254 = vpop.f32.mrf.mxu0
      %v1255 = vadd.f32 %v1043, %v1254
      %v1256 = vpop.f32.mrf.mxu0
      %v1257 = vpop.f32.mrf.mxu0
      %v1258 = vadd.f32 %v1046, %v1257
      %v1259 = vpop.f32.mrf.mxu0
      %1260 = vmatprep.mubr.bf16.mxu0 0
      %1261 = vmatmul.mubr.bf16.gmra.mxu0 %v1108
      %v1262 = vpop.f32.mrf.mxu0
      %v1263 = vadd.f32 %v1051, %v1262
      %v1264 = vpop.f32.mrf.mxu0
      %v1265 = vpop.f32.mrf.mxu0
      %v1266 = vadd.f32 %v1054, %v1265
      %v1267 = vpop.f32.mrf.mxu0
      %1268 = vmatprep.mubr.bf16.mxu0 0
      %1269 = vmatmul.mubr.bf16.gmra.mxu0 %v1111
      %v1270 = vpop.f32.mrf.mxu0
      %v1271 = vadd.f32 %v1059, %v1270
      %v1272 = vpop.f32.mrf.mxu0
      %v1273 = vpop.f32.mrf.mxu0
      %v1274 = vadd.f32 %v1062, %v1273
      %v1275 = vpop.f32.mrf.mxu0
      %1276 = vdwg.mxu0
      %vm1277 = vsmask.f32 3328
      %v1278 = vrot.slane %v527, 4
      %v1279 = vrot.slane %v530, 5
      %v1280 = vor.u32 %v1278, %v1279
      %v1281 = vrot.slane %v534, 4
      %v1282 = vrot.slane %v537, 5
      %v1283 = vor.u32 %v1281, %v1282
      %v1284 = vsel %vm1277, %v1280, %v1283
      %v1285 = vrot.slane %v542, 4
      %v1286 = vrot.slane %v545, 5
      %v1287 = vor.u32 %v1285, %v1286
      %v1288 = vrot.slane %v549, 4
      %v1289 = vrot.slane %v552, 5
      %v1290 = vor.u32 %v1288, %v1289
      %v1291 = vsel %vm1277, %v1287, %v1290
      %v1292 = vrot.slane %v557, 4
      %v1293 = vrot.slane %v560, 5
      %v1294 = vor.u32 %v1292, %v1293
      %v1295 = vrot.slane %v564, 4
      %v1296 = vrot.slane %v567, 5
      %v1297 = vor.u32 %v1295, %v1296
      %v1298 = vsel %vm1277, %v1294, %v1297
      %v1299 = vrot.slane %v572, 4
      %v1300 = vrot.slane %v575, 5
      %v1301 = vor.u32 %v1299, %v1300
      %v1302 = vrot.slane %v579, 4
      %v1303 = vrot.slane %v582, 5
      %v1304 = vor.u32 %v1302, %v1303
      %v1305 = vsel %vm1277, %v1301, %v1304
      %v1306 = vrot.slane %v587, 4
      %v1307 = vrot.slane %v590, 5
      %v1308 = vor.u32 %v1306, %v1307
      %v1309 = vrot.slane %v594, 4
      %v1310 = vrot.slane %v597, 5
      %v1311 = vor.u32 %v1309, %v1310
      %v1312 = vsel %vm1277, %v1308, %v1311
      %v1313 = vrot.slane %v602, 4
      %v1314 = vrot.slane %v605, 5
      %v1315 = vor.u32 %v1313, %v1314
      %v1316 = vrot.slane %v609, 4
      %v1317 = vrot.slane %v612, 5
      %v1318 = vor.u32 %v1316, %v1317
      %v1319 = vsel %vm1277, %v1315, %v1318
      %v1320 = vrot.slane %v617, 4
      %v1321 = vrot.slane %v620, 5
      %v1322 = vor.u32 %v1320, %v1321
      %v1323 = vrot.slane %v624, 4
      %v1324 = vrot.slane %v627, 5
      %v1325 = vor.u32 %v1323, %v1324
      %v1326 = vsel %vm1277, %v1322, %v1325
      %v1327 = vrot.slane %v632, 4
      %v1328 = vrot.slane %v635, 5
      %v1329 = vor.u32 %v1327, %v1328
      %v1330 = vrot.slane %v639, 4
      %v1331 = vrot.slane %v642, 5
      %v1332 = vor.u32 %v1330, %v1331
      %v1333 = vsel %vm1277, %v1329, %v1332
      %v1334 = vrot.slane %v647, 4
      %v1335 = vrot.slane %v650, 5
      %v1336 = vor.u32 %v1334, %v1335
      %v1337 = vrot.slane %v654, 4
      %v1338 = vrot.slane %v657, 5
      %v1339 = vor.u32 %v1337, %v1338
      %v1340 = vsel %vm1277, %v1336, %v1339
      %v1341 = vrot.slane %v662, 4
      %v1342 = vrot.slane %v665, 5
      %v1343 = vor.u32 %v1341, %v1342
      %v1344 = vrot.slane %v669, 4
      %v1345 = vrot.slane %v672, 5
      %v1346 = vor.u32 %v1344, %v1345
      %v1347 = vsel %vm1277, %v1343, %v1346
      %v1348 = vrot.slane %v677, 4
      %v1349 = vrot.slane %v680, 5
      %v1350 = vor.u32 %v1348, %v1349
      %v1351 = vrot.slane %v684, 4
      %v1352 = vrot.slane %v687, 5
      %v1353 = vor.u32 %v1351, %v1352
      %v1354 = vsel %vm1277, %v1350, %v1353
      %v1355 = vrot.slane %v692, 4
      %v1356 = vrot.slane %v695, 5
      %v1357 = vor.u32 %v1355, %v1356
      %v1358 = vrot.slane %v699, 4
      %v1359 = vrot.slane %v702, 5
      %v1360 = vor.u32 %v1358, %v1359
      %v1361 = vsel %vm1277, %v1357, %v1360
      %v1362 = vrot.slane %v707, 4
      %v1363 = vrot.slane %v710, 5
      %v1364 = vor.u32 %v1362, %v1363
      %v1365 = vrot.slane %v714, 4
      %v1366 = vrot.slane %v717, 5
      %v1367 = vor.u32 %v1365, %v1366
      %v1368 = vsel %vm1277, %v1364, %v1367
      %v1369 = vrot.slane %v722, 4
      %v1370 = vrot.slane %v725, 5
      %v1371 = vor.u32 %v1369, %v1370
      %v1372 = vrot.slane %v729, 4
      %v1373 = vrot.slane %v732, 5
      %v1374 = vor.u32 %v1372, %v1373
      %v1375 = vsel %vm1277, %v1371, %v1374
      %v1376 = vrot.slane %v737, 4
      %v1377 = vrot.slane %v740, 5
      %v1378 = vor.u32 %v1376, %v1377
      %v1379 = vrot.slane %v744, 4
      %v1380 = vrot.slane %v747, 5
      %v1381 = vor.u32 %v1379, %v1380
      %v1382 = vsel %vm1277, %v1378, %v1381
      %v1383 = vrot.slane %v752, 4
      %v1384 = vrot.slane %v755, 5
      %v1385 = vor.u32 %v1383, %v1384
      %v1386 = vrot.slane %v759, 4
      %v1387 = vrot.slane %v762, 5
      %v1388 = vor.u32 %v1386, %v1387
      %v1389 = vsel %vm1277, %v1385, %v1388
      %s1390 = scalar_lea.vmem %s1, 4
      %v1391 = vld [vmem:[%s1390] sm:$0x3]
      %v1393 = vsel %vm851, %v1284, 0
      %v1396 = vsel %vm851, %v1291, 0
      %v1399 = vsel %vm851, %v1298, 0
      %v1402 = vsel %vm851, %v1305, 0
      %v1405 = vsel %vm851, %v1312, 0
      %v1408 = vsel %vm851, %v1319, 0
      %v1411 = vsel %vm851, %v1326, 0
      %v1414 = vsel %vm851, %v1333, 0
      %v1417 = vsel %vm851, %v1340, 0
      %v1420 = vsel %vm851, %v1347, 0
      %v1423 = vsel %vm851, %v1354, 0
      %v1426 = vsel %vm851, %v1361, 0
      %v1429 = vsel %vm851, %v1368, 0
      %v1432 = vsel %vm851, %v1375, 0
      %v1435 = vsel %vm851, %v1382, 0
      %v1438 = vsel %vm851, %v1389, 0
      %v1441 = vsel %vm900, %v1391, 0
      %1443 = vmatprep.subr.bf16.mxu0 0
      %1444 = vmatpush1.bf16.msra.mxu0 0
      %1445 = vmatprep.subr.bf16.mxu0 0
      %1446 = vmatpush1.bf16.msra.mxu0 0
      %1447 = vmatprep.subr.bf16.mxu0 0
      %1448 = vmatpush1.bf16.msra.mxu0 0
      %1449 = vmatprep.subr.bf16.mxu0 0
      %1450 = vmatpush1.bf16.msra.mxu0 0
      %1451 = vmatprep.subr.bf16.mxu0 0
      %1452 = vmatpush1.bf16.msra.mxu0 0
      %1453 = vmatprep.subr.bf16.mxu0 0
      %1454 = vmatpush1.bf16.msra.mxu0 0
      %1455 = vmatprep.subr.bf16.mxu0 0
      %1456 = vmatpush1.bf16.msra.mxu0 0
      %1457 = vmatprep.subr.bf16.mxu0 0
      %1458 = vmatpush1.bf16.msra.mxu0 %v1441
      %1459 = vmatprep.subr.bf16.mxu0 0
      %1460 = vmatpush2.bf16.msra.mxu0 0
      %1461 = vmatprep.subr.bf16.mxu0 0
      %1462 = vmatpush2.bf16.msra.mxu0 0
      %1463 = vmatprep.subr.bf16.mxu0 0
      %1464 = vmatpush2.bf16.msra.mxu0 0
      %1465 = vmatprep.subr.bf16.mxu0 0
      %1466 = vmatpush2.bf16.msra.mxu0 0
      %1467 = vmatprep.subr.bf16.mxu0 0
      %1468 = vmatpush2.bf16.msra.mxu0 0
      %1469 = vmatprep.subr.bf16.mxu0 0
      %1470 = vmatpush2.bf16.msra.mxu0 0
      %1471 = vmatprep.subr.bf16.mxu0 0
      %1472 = vmatpush2.bf16.msra.mxu0 0
      %1473 = vmatprep.subr.bf16.mxu0 0
      %1474 = vmatpush2.bf16.msra.mxu0 0
      %1475 = vmatprep.mubr.bf16.mxu0 0
      %1476 = vmatmul.mubr.bf16.gmra.mxu0 %v1393
      %v1477 = vpop.f32.mrf.mxu0
      %v1478 = vadd.f32 0.0, %v1477
      %v1479 = vpop.f32.mrf.mxu0
      %v1480 = vpop.f32.mrf.mxu0
      %v1481 = vadd.f32 0.0, %v1480
      %v1482 = vpop.f32.mrf.mxu0
      %1483 = vmatprep.mubr.bf16.mxu0 0
      %1484 = vmatmul.mubr.bf16.gmra.mxu0 %v1396
      %v1485 = vpop.f32.mrf.mxu0
      %v1486 = vadd.f32 0.0, %v1485
      %v1487 = vpop.f32.mrf.mxu0
      %v1488 = vpop.f32.mrf.mxu0
      %v1489 = vadd.f32 0.0, %v1488
      %v1490 = vpop.f32.mrf.mxu0
      %1491 = vmatprep.mubr.bf16.mxu0 0
      %1492 = vmatmul.mubr.bf16.gmra.mxu0 %v1399
      %v1493 = vpop.f32.mrf.mxu0
      %v1494 = vadd.f32 0.0, %v1493
      %v1495 = vpop.f32.mrf.mxu0
      %v1496 = vpop.f32.mrf.mxu0
      %v1497 = vadd.f32 0.0, %v1496
      %v1498 = vpop.f32.mrf.mxu0
      %1499 = vmatprep.mubr.bf16.mxu0 0
      %1500 = vmatmul.mubr.bf16.gmra.mxu0 %v1402
      %v1501 = vpop.f32.mrf.mxu0
      %v1502 = vadd.f32 0.0, %v1501
      %v1503 = vpop.f32.mrf.mxu0
      %v1504 = vpop.f32.mrf.mxu0
      %v1505 = vadd.f32 0.0, %v1504
      %v1506 = vpop.f32.mrf.mxu0
      %1507 = vmatprep.mubr.bf16.mxu0 0
      %1508 = vmatmul.mubr.bf16.gmra.mxu0 %v1405
      %v1509 = vpop.f32.mrf.mxu0
      %v1510 = vadd.f32 0.0, %v1509
      %v1511 = vpop.f32.mrf.mxu0
      %v1512 = vpop.f32.mrf.mxu0
      %v1513 = vadd.f32 0.0, %v1512
      %v1514 = vpop.f32.mrf.mxu0
      %1515 = vmatprep.mubr.bf16.mxu0 0
      %1516 = vmatmul.mubr.bf16.gmra.mxu0 %v1408
      %v1517 = vpop.f32.mrf.mxu0
      %v1518 = vadd.f32 0.0, %v1517
      %v1519 = vpop.f32.mrf.mxu0
      %v1520 = vpop.f32.mrf.mxu0
      %v1521 = vadd.f32 0.0, %v1520
      %v1522 = vpop.f32.mrf.mxu0
      %1523 = vmatprep.mubr.bf16.mxu0 0
      %1524 = vmatmul.mubr.bf16.gmra.mxu0 %v1411
      %v1525 = vpop.f32.mrf.mxu0
      %v1526 = vadd.f32 0.0, %v1525
      %v1527 = vpop.f32.mrf.mxu0
      %v1528 = vpop.f32.mrf.mxu0
      %v1529 = vadd.f32 0.0, %v1528
      %v1530 = vpop.f32.mrf.mxu0
      %1531 = vmatprep.mubr.bf16.mxu0 0
      %1532 = vmatmul.mubr.bf16.gmra.mxu0 %v1414
      %v1533 = vpop.f32.mrf.mxu0
      %v1534 = vadd.f32 0.0, %v1533
      %v1535 = vpop.f32.mrf.mxu0
      %v1536 = vpop.f32.mrf.mxu0
      %v1537 = vadd.f32 0.0, %v1536
      %v1538 = vpop.f32.mrf.mxu0
      %1539 = vmatprep.mubr.bf16.mxu0 0
      %1540 = vmatmul.mubr.bf16.gmra.mxu0 %v1417
      %v1541 = vpop.f32.mrf.mxu0
      %v1542 = vadd.f32 0.0, %v1541
      %v1543 = vpop.f32.mrf.mxu0
      %v1544 = vpop.f32.mrf.mxu0
      %v1545 = vadd.f32 0.0, %v1544
      %v1546 = vpop.f32.mrf.mxu0
      %1547 = vmatprep.mubr.bf16.mxu0 0
      %1548 = vmatmul.mubr.bf16.gmra.mxu0 %v1420
      %v1549 = vpop.f32.mrf.mxu0
      %v1550 = vadd.f32 0.0, %v1549
      %v1551 = vpop.f32.mrf.mxu0
      %v1552 = vpop.f32.mrf.mxu0
      %v1553 = vadd.f32 0.0, %v1552
      %v1554 = vpop.f32.mrf.mxu0
      %1555 = vmatprep.mubr.bf16.mxu0 0
      %1556 = vmatmul.mubr.bf16.gmra.mxu0 %v1423
      %v1557 = vpop.f32.mrf.mxu0
      %v1558 = vadd.f32 0.0, %v1557
      %v1559 = vpop.f32.mrf.mxu0
      %v1560 = vpop.f32.mrf.mxu0
      %v1561 = vadd.f32 0.0, %v1560
      %v1562 = vpop.f32.mrf.mxu0
      %1563 = vmatprep.mubr.bf16.mxu0 0
      %1564 = vmatmul.mubr.bf16.gmra.mxu0 %v1426
      %v1565 = vpop.f32.mrf.mxu0
      %v1566 = vadd.f32 0.0, %v1565
      %v1567 = vpop.f32.mrf.mxu0
      %v1568 = vpop.f32.mrf.mxu0
      %v1569 = vadd.f32 0.0, %v1568
      %v1570 = vpop.f32.mrf.mxu0
      %1571 = vmatprep.mubr.bf16.mxu0 0
      %1572 = vmatmul.mubr.bf16.gmra.mxu0 %v1429
      %v1573 = vpop.f32.mrf.mxu0
      %v1574 = vadd.f32 0.0, %v1573
      %v1575 = vpop.f32.mrf.mxu0
      %v1576 = vpop.f32.mrf.mxu0
      %v1577 = vadd.f32 0.0, %v1576
      %v1578 = vpop.f32.mrf.mxu0
      %1579 = vmatprep.mubr.bf16.mxu0 0
      %1580 = vmatmul.mubr.bf16.gmra.mxu0 %v1432
      %v1581 = vpop.f32.mrf.mxu0
      %v1582 = vadd.f32 0.0, %v1581
      %v1583 = vpop.f32.mrf.mxu0
      %v1584 = vpop.f32.mrf.mxu0
      %v1585 = vadd.f32 0.0, %v1584
      %v1586 = vpop.f32.mrf.mxu0
      %1587 = vmatprep.mubr.bf16.mxu0 0
      %1588 = vmatmul.mubr.bf16.gmra.mxu0 %v1435
      %v1589 = vpop.f32.mrf.mxu0
      %v1590 = vadd.f32 0.0, %v1589
      %v1591 = vpop.f32.mrf.mxu0
      %v1592 = vpop.f32.mrf.mxu0
      %v1593 = vadd.f32 0.0, %v1592
      %v1594 = vpop.f32.mrf.mxu0
      %1595 = vmatprep.mubr.bf16.mxu0 0
      %1596 = vmatmul.mubr.bf16.gmra.mxu0 %v1438
      %v1597 = vpop.f32.mrf.mxu0
      %v1598 = vadd.f32 0.0, %v1597
      %v1599 = vpop.f32.mrf.mxu0
      %v1600 = vpop.f32.mrf.mxu0
      %v1601 = vadd.f32 0.0, %v1600
      %v1602 = vpop.f32.mrf.mxu0
      %1603 = vdwg.mxu0
      %v1604 = vadd.f32 %v1151, %v1478
      %v1605 = vadd.f32 %v1154, %v1481
      %v1606 = vadd.f32 %v1159, %v1486
      %v1607 = vadd.f32 %v1162, %v1489
      %v1608 = vadd.f32 %v1167, %v1494
      %v1609 = vadd.f32 %v1170, %v1497
      %v1610 = vadd.f32 %v1175, %v1502
      %v1611 = vadd.f32 %v1178, %v1505
      %v1612 = vadd.f32 %v1183, %v1510
      %v1613 = vadd.f32 %v1186, %v1513
      %v1614 = vadd.f32 %v1191, %v1518
      %v1615 = vadd.f32 %v1194, %v1521
      %v1616 = vadd.f32 %v1199, %v1526
      %v1617 = vadd.f32 %v1202, %v1529
      %v1618 = vadd.f32 %v1207, %v1534
      %v1619 = vadd.f32 %v1210, %v1537
      %v1620 = vadd.f32 %v1215, %v1542
      %v1621 = vadd.f32 %v1218, %v1545
      %v1622 = vadd.f32 %v1223, %v1550
      %v1623 = vadd.f32 %v1226, %v1553
      %v1624 = vadd.f32 %v1231, %v1558
      %v1625 = vadd.f32 %v1234, %v1561
      %v1626 = vadd.f32 %v1239, %v1566
      %v1627 = vadd.f32 %v1242, %v1569
      %v1628 = vadd.f32 %v1247, %v1574
      %v1629 = vadd.f32 %v1250, %v1577
      %v1630 = vadd.f32 %v1255, %v1582
      %v1631 = vadd.f32 %v1258, %v1585
      %v1632 = vadd.f32 %v1263, %v1590
      %v1633 = vadd.f32 %v1266, %v1593
      %v1634 = vadd.f32 %v1271, %v1598
      %v1635 = vadd.f32 %v1274, %v1601
      %v1636 = vshrl.u32 %v487, 16
      %v1638 = vrot.slane %v1636, 3
      %v1639 = vshll.u32 %v487, 16
      %v1641 = vrot.slane %v1639, 4
      %v1642 = vor.u32 %v1638, %v1641
      %v1643 = vshrl.u32 %v523, 16
      %v1645 = vrot.slane %v1643, 3
      %v1646 = vshll.u32 %v523, 16
      %v1648 = vrot.slane %v1646, 4
      %v1649 = vor.u32 %v1645, %v1648
      %v1650 = vsel %vm526, %v1642, %v1649
      %s1651 = scalar_lea.vmem %s1, 6
      %v1652 = vld [vmem:[%s1651] sm:$0x3]
      %v1654 = vsel %vm851, %v1650, 0
      %v1657 = vsel %vm900, %v1652, 0
      %1659 = vmatprep.subr.bf16.mxu0 0
      %1660 = vmatpush1.bf16.msra.mxu0 0
      %1661 = vmatprep.subr.bf16.mxu0 0
      %1662 = vmatpush1.bf16.msra.mxu0 0
      %1663 = vmatprep.subr.bf16.mxu0 0
      %1664 = vmatpush1.bf16.msra.mxu0 0
      %1665 = vmatprep.subr.bf16.mxu0 0
      %1666 = vmatpush1.bf16.msra.mxu0 0
      %1667 = vmatprep.subr.bf16.mxu0 0
      %1668 = vmatpush1.bf16.msra.mxu0 0
      %1669 = vmatprep.subr.bf16.mxu0 0
      %1670 = vmatpush1.bf16.msra.mxu0 0
      %1671 = vmatprep.subr.bf16.mxu0 0
      %1672 = vmatpush1.bf16.msra.mxu0 0
      %1673 = vmatprep.subr.bf16.mxu0 0
      %1674 = vmatpush1.bf16.msra.mxu0 %v1657
      %1675 = vmatprep.subr.bf16.mxu0 0
      %1676 = vmatpush2.bf16.msra.mxu0 0
      %1677 = vmatprep.subr.bf16.mxu0 0
      %1678 = vmatpush2.bf16.msra.mxu0 0
      %1679 = vmatprep.subr.bf16.mxu0 0
      %1680 = vmatpush2.bf16.msra.mxu0 0
      %1681 = vmatprep.subr.bf16.mxu0 0
      %1682 = vmatpush2.bf16.msra.mxu0 0
      %1683 = vmatprep.subr.bf16.mxu0 0
      %1684 = vmatpush2.bf16.msra.mxu0 0
      %1685 = vmatprep.subr.bf16.mxu0 0
      %1686 = vmatpush2.bf16.msra.mxu0 0
      %1687 = vmatprep.subr.bf16.mxu0 0
      %1688 = vmatpush2.bf16.msra.mxu0 0
      %1689 = vmatprep.subr.bf16.mxu0 0
      %1690 = vmatpush2.bf16.msra.mxu0 0
      %1691 = vmatprep.mubr.bf16.mxu0 0
      %1692 = vmatmul.mubr.bf16.gmra.mxu0 %v1069
      %v1693 = vpop.f32.mrf.mxu0
      %v1694 = vadd.f32 0.0, %v1693
      %v1695 = vpop.f32.mrf.mxu0
      %v1696 = vpop.f32.mrf.mxu0
      %v1697 = vadd.f32 0.0, %v1696
      %v1698 = vpop.f32.mrf.mxu0
      %1699 = vmatprep.mubr.bf16.mxu0 0
      %1700 = vmatmul.mubr.bf16.gmra.mxu0 %v1072
      %v1701 = vpop.f32.mrf.mxu0
      %v1702 = vadd.f32 0.0, %v1701
      %v1703 = vpop.f32.mrf.mxu0
      %v1704 = vpop.f32.mrf.mxu0
      %v1705 = vadd.f32 0.0, %v1704
      %v1706 = vpop.f32.mrf.mxu0
      %1707 = vmatprep.mubr.bf16.mxu0 0
      %1708 = vmatmul.mubr.bf16.gmra.mxu0 %v1075
      %v1709 = vpop.f32.mrf.mxu0
      %v1710 = vadd.f32 0.0, %v1709
      %v1711 = vpop.f32.mrf.mxu0
      %v1712 = vpop.f32.mrf.mxu0
      %v1713 = vadd.f32 0.0, %v1712
      %v1714 = vpop.f32.mrf.mxu0
      %1715 = vmatprep.mubr.bf16.mxu0 0
      %1716 = vmatmul.mubr.bf16.gmra.mxu0 %v1078
      %v1717 = vpop.f32.mrf.mxu0
      %v1718 = vadd.f32 0.0, %v1717
      %v1719 = vpop.f32.mrf.mxu0
      %v1720 = vpop.f32.mrf.mxu0
      %v1721 = vadd.f32 0.0, %v1720
      %v1722 = vpop.f32.mrf.mxu0
      %1723 = vmatprep.mubr.bf16.mxu0 0
      %1724 = vmatmul.mubr.bf16.gmra.mxu0 %v1081
      %v1725 = vpop.f32.mrf.mxu0
      %v1726 = vadd.f32 0.0, %v1725
      %v1727 = vpop.f32.mrf.mxu0
      %v1728 = vpop.f32.mrf.mxu0
      %v1729 = vadd.f32 0.0, %v1728
      %v1730 = vpop.f32.mrf.mxu0
      %1731 = vmatprep.mubr.bf16.mxu0 0
      %1732 = vmatmul.mubr.bf16.gmra.mxu0 %v1084
      %v1733 = vpop.f32.mrf.mxu0
      %v1734 = vadd.f32 0.0, %v1733
      %v1735 = vpop.f32.mrf.mxu0
      %v1736 = vpop.f32.mrf.mxu0
      %v1737 = vadd.f32 0.0, %v1736
      %v1738 = vpop.f32.mrf.mxu0
      %1739 = vmatprep.mubr.bf16.mxu0 0
      %1740 = vmatmul.mubr.bf16.gmra.mxu0 %v1087
      %v1741 = vpop.f32.mrf.mxu0
      %v1742 = vadd.f32 0.0, %v1741
      %v1743 = vpop.f32.mrf.mxu0
      %v1744 = vpop.f32.mrf.mxu0
      %v1745 = vadd.f32 0.0, %v1744
      %v1746 = vpop.f32.mrf.mxu0
      %1747 = vmatprep.mubr.bf16.mxu0 0
      %1748 = vmatmul.mubr.bf16.gmra.mxu0 %v1090
      %v1749 = vpop.f32.mrf.mxu0
      %v1750 = vadd.f32 0.0, %v1749
      %v1751 = vpop.f32.mrf.mxu0
      %v1752 = vpop.f32.mrf.mxu0
      %v1753 = vadd.f32 0.0, %v1752
      %v1754 = vpop.f32.mrf.mxu0
      %1755 = vmatprep.mubr.bf16.mxu0 0
      %1756 = vmatmul.mubr.bf16.gmra.mxu0 %v1093
      %v1757 = vpop.f32.mrf.mxu0
      %v1758 = vadd.f32 0.0, %v1757
      %v1759 = vpop.f32.mrf.mxu0
      %v1760 = vpop.f32.mrf.mxu0
      %v1761 = vadd.f32 0.0, %v1760
      %v1762 = vpop.f32.mrf.mxu0
      %1763 = vmatprep.mubr.bf16.mxu0 0
      %1764 = vmatmul.mubr.bf16.gmra.mxu0 %v1096
      %v1765 = vpop.f32.mrf.mxu0
      %v1766 = vadd.f32 0.0, %v1765
      %v1767 = vpop.f32.mrf.mxu0
      %v1768 = vpop.f32.mrf.mxu0
      %v1769 = vadd.f32 0.0, %v1768
      %v1770 = vpop.f32.mrf.mxu0
      %1771 = vmatprep.mubr.bf16.mxu0 0
      %1772 = vmatmul.mubr.bf16.gmra.mxu0 %v1099
      %v1773 = vpop.f32.mrf.mxu0
      %v1774 = vadd.f32 0.0, %v1773
      %v1775 = vpop.f32.mrf.mxu0
      %v1776 = vpop.f32.mrf.mxu0
      %v1777 = vadd.f32 0.0, %v1776
      %v1778 = vpop.f32.mrf.mxu0
      %1779 = vmatprep.mubr.bf16.mxu0 0
      %1780 = vmatmul.mubr.bf16.gmra.mxu0 %v1102
      %v1781 = vpop.f32.mrf.mxu0
      %v1782 = vadd.f32 0.0, %v1781
      %v1783 = vpop.f32.mrf.mxu0
      %v1784 = vpop.f32.mrf.mxu0
      %v1785 = vadd.f32 0.0, %v1784
      %v1786 = vpop.f32.mrf.mxu0
      %1787 = vmatprep.mubr.bf16.mxu0 0
      %1788 = vmatmul.mubr.bf16.gmra.mxu0 %v1105
      %v1789 = vpop.f32.mrf.mxu0
      %v1790 = vadd.f32 0.0, %v1789
      %v1791 = vpop.f32.mrf.mxu0
      %v1792 = vpop.f32.mrf.mxu0
      %v1793 = vadd.f32 0.0, %v1792
      %v1794 = vpop.f32.mrf.mxu0
      %1795 = vmatprep.mubr.bf16.mxu0 0
      %1796 = vmatmul.mubr.bf16.gmra.mxu0 %v1108
      %v1797 = vpop.f32.mrf.mxu0
      %v1798 = vadd.f32 0.0, %v1797
      %v1799 = vpop.f32.mrf.mxu0
      %v1800 = vpop.f32.mrf.mxu0
      %v1801 = vadd.f32 0.0, %v1800
      %v1802 = vpop.f32.mrf.mxu0
      %1803 = vmatprep.mubr.bf16.mxu0 0
      %1804 = vmatmul.mubr.bf16.gmra.mxu0 %v1111
      %v1805 = vpop.f32.mrf.mxu0
      %v1806 = vadd.f32 0.0, %v1805
      %v1807 = vpop.f32.mrf.mxu0
      %v1808 = vpop.f32.mrf.mxu0
      %v1809 = vadd.f32 0.0, %v1808
      %v1810 = vpop.f32.mrf.mxu0
      %1811 = vmatprep.mubr.bf16.mxu0 0
      %1812 = vmatmul.mubr.bf16.gmra.mxu0 %v1654
      %v1813 = vpop.f32.mrf.mxu0
      %v1814 = vadd.f32 0.0, %v1813
      %v1815 = vpop.f32.mrf.mxu0
      %v1816 = vpop.f32.mrf.mxu0
      %v1817 = vadd.f32 0.0, %v1816
      %v1818 = vpop.f32.mrf.mxu0
      %1819 = vdwg.mxu0
      %v1820 = vadd.f32 %v1604, %v1694
      %v1821 = vadd.f32 %v1605, %v1697
      %v1822 = vadd.f32 %v1606, %v1702
      %v1823 = vadd.f32 %v1607, %v1705
      %v1824 = vadd.f32 %v1608, %v1710
      %v1825 = vadd.f32 %v1609, %v1713
      %v1826 = vadd.f32 %v1610, %v1718
      %v1827 = vadd.f32 %v1611, %v1721
      %v1828 = vadd.f32 %v1612, %v1726
      %v1829 = vadd.f32 %v1613, %v1729
      %v1830 = vadd.f32 %v1614, %v1734
      %v1831 = vadd.f32 %v1615, %v1737
      %v1832 = vadd.f32 %v1616, %v1742
      %v1833 = vadd.f32 %v1617, %v1745
      %v1834 = vadd.f32 %v1618, %v1750
      %v1835 = vadd.f32 %v1619, %v1753
      %v1836 = vadd.f32 %v1620, %v1758
      %v1837 = vadd.f32 %v1621, %v1761
      %v1838 = vadd.f32 %v1622, %v1766
      %v1839 = vadd.f32 %v1623, %v1769
      %v1840 = vadd.f32 %v1624, %v1774
      %v1841 = vadd.f32 %v1625, %v1777
      %v1842 = vadd.f32 %v1626, %v1782
      %v1843 = vadd.f32 %v1627, %v1785
      %v1844 = vadd.f32 %v1628, %v1790
      %v1845 = vadd.f32 %v1629, %v1793
      %v1846 = vadd.f32 %v1630, %v1798
      %v1847 = vadd.f32 %v1631, %v1801
      %v1848 = vadd.f32 %v1632, %v1806
      %v1849 = vadd.f32 %v1633, %v1809
      %v1850 = vadd.f32 %v1634, %v1814
      %v1851 = vadd.f32 %v1635, %v1817
      %v1854 = vrot.slane %v487, 4
      %v1855 = vrot.slane %v523, 4
      %v1856 = vsel %vm800, %v1854, %v1855
      %s1857 = scalar_lea.vmem %s1, 8
      %v1858 = vld [vmem:[%s1857] sm:$0x3]
      %v1860 = vsel %vm851, %v1856, 0
      %v1863 = vsel %vm900, %v1858, 0
      %1865 = vmatprep.subr.bf16.mxu0 0
      %1866 = vmatpush1.bf16.msra.mxu0 0
      %1867 = vmatprep.subr.bf16.mxu0 0
      %1868 = vmatpush1.bf16.msra.mxu0 0
      %1869 = vmatprep.subr.bf16.mxu0 0
      %1870 = vmatpush1.bf16.msra.mxu0 0
      %1871 = vmatprep.subr.bf16.mxu0 0
      %1872 = vmatpush1.bf16.msra.mxu0 0
      %1873 = vmatprep.subr.bf16.mxu0 0
      %1874 = vmatpush1.bf16.msra.mxu0 0
      %1875 = vmatprep.subr.bf16.mxu0 0
      %1876 = vmatpush1.bf16.msra.mxu0 0
      %1877 = vmatprep.subr.bf16.mxu0 0
      %1878 = vmatpush1.bf16.msra.mxu0 0
      %1879 = vmatprep.subr.bf16.mxu0 0
      %1880 = vmatpush1.bf16.msra.mxu0 %v1863
      %1881 = vmatprep.subr.bf16.mxu0 0
      %1882 = vmatpush2.bf16.msra.mxu0 0
      %1883 = vmatprep.subr.bf16.mxu0 0
      %1884 = vmatpush2.bf16.msra.mxu0 0
      %1885 = vmatprep.subr.bf16.mxu0 0
      %1886 = vmatpush2.bf16.msra.mxu0 0
      %1887 = vmatprep.subr.bf16.mxu0 0
      %1888 = vmatpush2.bf16.msra.mxu0 0
      %1889 = vmatprep.subr.bf16.mxu0 0
      %1890 = vmatpush2.bf16.msra.mxu0 0
      %1891 = vmatprep.subr.bf16.mxu0 0
      %1892 = vmatpush2.bf16.msra.mxu0 0
      %1893 = vmatprep.subr.bf16.mxu0 0
      %1894 = vmatpush2.bf16.msra.mxu0 0
      %1895 = vmatprep.subr.bf16.mxu0 0
      %1896 = vmatpush2.bf16.msra.mxu0 0
      %1897 = vmatprep.mubr.bf16.mxu0 0
      %1898 = vmatmul.mubr.bf16.gmra.mxu0 %v856
      %v1899 = vpop.f32.mrf.mxu0
      %v1900 = vadd.f32 0.0, %v1899
      %v1901 = vpop.f32.mrf.mxu0
      %v1902 = vpop.f32.mrf.mxu0
      %v1903 = vadd.f32 0.0, %v1902
      %v1904 = vpop.f32.mrf.mxu0
      %1905 = vmatprep.mubr.bf16.mxu0 0
      %1906 = vmatmul.mubr.bf16.gmra.mxu0 %v859
      %v1907 = vpop.f32.mrf.mxu0
      %v1908 = vadd.f32 0.0, %v1907
      %v1909 = vpop.f32.mrf.mxu0
      %v1910 = vpop.f32.mrf.mxu0
      %v1911 = vadd.f32 0.0, %v1910
      %v1912 = vpop.f32.mrf.mxu0
      %1913 = vmatprep.mubr.bf16.mxu0 0
      %1914 = vmatmul.mubr.bf16.gmra.mxu0 %v862
      %v1915 = vpop.f32.mrf.mxu0
      %v1916 = vadd.f32 0.0, %v1915
      %v1917 = vpop.f32.mrf.mxu0
      %v1918 = vpop.f32.mrf.mxu0
      %v1919 = vadd.f32 0.0, %v1918
      %v1920 = vpop.f32.mrf.mxu0
      %1921 = vmatprep.mubr.bf16.mxu0 0
      %1922 = vmatmul.mubr.bf16.gmra.mxu0 %v865
      %v1923 = vpop.f32.mrf.mxu0
      %v1924 = vadd.f32 0.0, %v1923
      %v1925 = vpop.f32.mrf.mxu0
      %v1926 = vpop.f32.mrf.mxu0
      %v1927 = vadd.f32 0.0, %v1926
      %v1928 = vpop.f32.mrf.mxu0
      %1929 = vmatprep.mubr.bf16.mxu0 0
      %1930 = vmatmul.mubr.bf16.gmra.mxu0 %v868
      %v1931 = vpop.f32.mrf.mxu0
      %v1932 = vadd.f32 0.0, %v1931
      %v1933 = vpop.f32.mrf.mxu0
      %v1934 = vpop.f32.mrf.mxu0
      %v1935 = vadd.f32 0.0, %v1934
      %v1936 = vpop.f32.mrf.mxu0
      %1937 = vmatprep.mubr.bf16.mxu0 0
      %1938 = vmatmul.mubr.bf16.gmra.mxu0 %v871
      %v1939 = vpop.f32.mrf.mxu0
      %v1940 = vadd.f32 0.0, %v1939
      %v1941 = vpop.f32.mrf.mxu0
      %v1942 = vpop.f32.mrf.mxu0
      %v1943 = vadd.f32 0.0, %v1942
      %v1944 = vpop.f32.mrf.mxu0
      %1945 = vmatprep.mubr.bf16.mxu0 0
      %1946 = vmatmul.mubr.bf16.gmra.mxu0 %v874
      %v1947 = vpop.f32.mrf.mxu0
      %v1948 = vadd.f32 0.0, %v1947
      %v1949 = vpop.f32.mrf.mxu0
      %v1950 = vpop.f32.mrf.mxu0
      %v1951 = vadd.f32 0.0, %v1950
      %v1952 = vpop.f32.mrf.mxu0
      %1953 = vmatprep.mubr.bf16.mxu0 0
      %1954 = vmatmul.mubr.bf16.gmra.mxu0 %v877
      %v1955 = vpop.f32.mrf.mxu0
      %v1956 = vadd.f32 0.0, %v1955
      %v1957 = vpop.f32.mrf.mxu0
      %v1958 = vpop.f32.mrf.mxu0
      %v1959 = vadd.f32 0.0, %v1958
      %v1960 = vpop.f32.mrf.mxu0
      %1961 = vmatprep.mubr.bf16.mxu0 0
      %1962 = vmatmul.mubr.bf16.gmra.mxu0 %v880
      %v1963 = vpop.f32.mrf.mxu0
      %v1964 = vadd.f32 0.0, %v1963
      %v1965 = vpop.f32.mrf.mxu0
      %v1966 = vpop.f32.mrf.mxu0
      %v1967 = vadd.f32 0.0, %v1966
      %v1968 = vpop.f32.mrf.mxu0
      %1969 = vmatprep.mubr.bf16.mxu0 0
      %1970 = vmatmul.mubr.bf16.gmra.mxu0 %v883
      %v1971 = vpop.f32.mrf.mxu0
      %v1972 = vadd.f32 0.0, %v1971
      %v1973 = vpop.f32.mrf.mxu0
      %v1974 = vpop.f32.mrf.mxu0
      %v1975 = vadd.f32 0.0, %v1974
      %v1976 = vpop.f32.mrf.mxu0
      %1977 = vmatprep.mubr.bf16.mxu0 0
      %1978 = vmatmul.mubr.bf16.gmra.mxu0 %v886
      %v1979 = vpop.f32.mrf.mxu0
      %v1980 = vadd.f32 0.0, %v1979
      %v1981 = vpop.f32.mrf.mxu0
      %v1982 = vpop.f32.mrf.mxu0
      %v1983 = vadd.f32 0.0, %v1982
      %v1984 = vpop.f32.mrf.mxu0
      %1985 = vmatprep.mubr.bf16.mxu0 0
      %1986 = vmatmul.mubr.bf16.gmra.mxu0 %v889
      %v1987 = vpop.f32.mrf.mxu0
      %v1988 = vadd.f32 0.0, %v1987
      %v1989 = vpop.f32.mrf.mxu0
      %v1990 = vpop.f32.mrf.mxu0
      %v1991 = vadd.f32 0.0, %v1990
      %v1992 = vpop.f32.mrf.mxu0
      %1993 = vmatprep.mubr.bf16.mxu0 0
      %1994 = vmatmul.mubr.bf16.gmra.mxu0 %v892
      %v1995 = vpop.f32.mrf.mxu0
      %v1996 = vadd.f32 0.0, %v1995
      %v1997 = vpop.f32.mrf.mxu0
      %v1998 = vpop.f32.mrf.mxu0
      %v1999 = vadd.f32 0.0, %v1998
      %v2000 = vpop.f32.mrf.mxu0
      %2001 = vmatprep.mubr.bf16.mxu0 0
      %2002 = vmatmul.mubr.bf16.gmra.mxu0 %v895
      %v2003 = vpop.f32.mrf.mxu0
      %v2004 = vadd.f32 0.0, %v2003
      %v2005 = vpop.f32.mrf.mxu0
      %v2006 = vpop.f32.mrf.mxu0
      %v2007 = vadd.f32 0.0, %v2006
      %v2008 = vpop.f32.mrf.mxu0
      %2009 = vmatprep.mubr.bf16.mxu0 0
      %2010 = vmatmul.mubr.bf16.gmra.mxu0 %v898
      %v2011 = vpop.f32.mrf.mxu0
      %v2012 = vadd.f32 0.0, %v2011
      %v2013 = vpop.f32.mrf.mxu0
      %v2014 = vpop.f32.mrf.mxu0
      %v2015 = vadd.f32 0.0, %v2014
      %v2016 = vpop.f32.mrf.mxu0
      %2017 = vmatprep.mubr.bf16.mxu0 0
      %2018 = vmatmul.mubr.bf16.gmra.mxu0 %v1860
      %v2019 = vpop.f32.mrf.mxu0
      %v2020 = vadd.f32 0.0, %v2019
      %v2021 = vpop.f32.mrf.mxu0
      %v2022 = vpop.f32.mrf.mxu0
      %v2023 = vadd.f32 0.0, %v2022
      %v2024 = vpop.f32.mrf.mxu0
      %2025 = vdwg.mxu0
      %v2026 = vadd.f32 %v1820, %v1900
      %v2027 = vadd.f32 %v1821, %v1903
      %v2028 = vadd.f32 %v1822, %v1908
      %v2029 = vadd.f32 %v1823, %v1911
      %v2030 = vadd.f32 %v1824, %v1916
      %v2031 = vadd.f32 %v1825, %v1919
      %v2032 = vadd.f32 %v1826, %v1924
      %v2033 = vadd.f32 %v1827, %v1927
      %v2034 = vadd.f32 %v1828, %v1932
      %v2035 = vadd.f32 %v1829, %v1935
      %v2036 = vadd.f32 %v1830, %v1940
      %v2037 = vadd.f32 %v1831, %v1943
      %v2038 = vadd.f32 %v1832, %v1948
      %v2039 = vadd.f32 %v1833, %v1951
      %v2040 = vadd.f32 %v1834, %v1956
      %v2041 = vadd.f32 %v1835, %v1959
      %v2042 = vadd.f32 %v1836, %v1964
      %v2043 = vadd.f32 %v1837, %v1967
      %v2044 = vadd.f32 %v1838, %v1972
      %v2045 = vadd.f32 %v1839, %v1975
      %v2046 = vadd.f32 %v1840, %v1980
      %v2047 = vadd.f32 %v1841, %v1983
      %v2048 = vadd.f32 %v1842, %v1988
      %v2049 = vadd.f32 %v1843, %v1991
      %v2050 = vadd.f32 %v1844, %v1996
      %v2051 = vadd.f32 %v1845, %v1999
      %v2052 = vadd.f32 %v1846, %v2004
      %v2053 = vadd.f32 %v1847, %v2007
      %v2054 = vadd.f32 %v1848, %v2012
      %v2055 = vadd.f32 %v1849, %v2015
      %v2056 = vadd.f32 %v1850, %v2020
      %v2057 = vadd.f32 %v1851, %v2023
      %v2058 = vrot.slane %v1636, 4
      %v2059 = vrot.slane %v1639, 5
      %v2060 = vor.u32 %v2058, %v2059
      %v2061 = vrot.slane %v1643, 4
      %v2062 = vrot.slane %v1646, 5
      %v2063 = vor.u32 %v2061, %v2062
      %v2064 = vsel %vm1277, %v2060, %v2063
      %s2065 = scalar_lea.vmem %s1, 10
      %v2066 = vld [vmem:[%s2065] sm:$0x3]
      %v2068 = vsel %vm851, %v2064, 0
      %v2071 = vsel %vm900, %v2066, 0
      %2073 = vmatprep.subr.bf16.mxu0 0
      %2074 = vmatpush1.bf16.msra.mxu0 0
      %2075 = vmatprep.subr.bf16.mxu0 0
      %2076 = vmatpush1.bf16.msra.mxu0 0
      %2077 = vmatprep.subr.bf16.mxu0 0
      %2078 = vmatpush1.bf16.msra.mxu0 0
      %2079 = vmatprep.subr.bf16.mxu0 0
      %2080 = vmatpush1.bf16.msra.mxu0 0
      %2081 = vmatprep.subr.bf16.mxu0 0
      %2082 = vmatpush1.bf16.msra.mxu0 0
      %2083 = vmatprep.subr.bf16.mxu0 0
      %2084 = vmatpush1.bf16.msra.mxu0 0
      %2085 = vmatprep.subr.bf16.mxu0 0
      %2086 = vmatpush1.bf16.msra.mxu0 0
      %2087 = vmatprep.subr.bf16.mxu0 0
      %2088 = vmatpush1.bf16.msra.mxu0 %v2071
      %2089 = vmatprep.subr.bf16.mxu0 0
      %2090 = vmatpush2.bf16.msra.mxu0 0
      %2091 = vmatprep.subr.bf16.mxu0 0
      %2092 = vmatpush2.bf16.msra.mxu0 0
      %2093 = vmatprep.subr.bf16.mxu0 0
      %2094 = vmatpush2.bf16.msra.mxu0 0
      %2095 = vmatprep.subr.bf16.mxu0 0
      %2096 = vmatpush2.bf16.msra.mxu0 0
      %2097 = vmatprep.subr.bf16.mxu0 0
      %2098 = vmatpush2.bf16.msra.mxu0 0
      %2099 = vmatprep.subr.bf16.mxu0 0
      %2100 = vmatpush2.bf16.msra.mxu0 0
      %2101 = vmatprep.subr.bf16.mxu0 0
      %2102 = vmatpush2.bf16.msra.mxu0 0
      %2103 = vmatprep.subr.bf16.mxu0 0
      %2104 = vmatpush2.bf16.msra.mxu0 0
      %2105 = vmatprep.mubr.bf16.mxu0 0
      %2106 = vmatmul.mubr.bf16.gmra.mxu0 %v1396
      %v2107 = vpop.f32.mrf.mxu0
      %v2108 = vadd.f32 0.0, %v2107
      %v2109 = vpop.f32.mrf.mxu0
      %v2110 = vpop.f32.mrf.mxu0
      %v2111 = vadd.f32 0.0, %v2110
      %v2112 = vpop.f32.mrf.mxu0
      %2113 = vmatprep.mubr.bf16.mxu0 0
      %2114 = vmatmul.mubr.bf16.gmra.mxu0 %v1399
      %v2115 = vpop.f32.mrf.mxu0
      %v2116 = vadd.f32 0.0, %v2115
      %v2117 = vpop.f32.mrf.mxu0
      %v2118 = vpop.f32.mrf.mxu0
      %v2119 = vadd.f32 0.0, %v2118
      %v2120 = vpop.f32.mrf.mxu0
      %2121 = vmatprep.mubr.bf16.mxu0 0
      %2122 = vmatmul.mubr.bf16.gmra.mxu0 %v1402
      %v2123 = vpop.f32.mrf.mxu0
      %v2124 = vadd.f32 0.0, %v2123
      %v2125 = vpop.f32.mrf.mxu0
      %v2126 = vpop.f32.mrf.mxu0
      %v2127 = vadd.f32 0.0, %v2126
      %v2128 = vpop.f32.mrf.mxu0
      %2129 = vmatprep.mubr.bf16.mxu0 0
      %2130 = vmatmul.mubr.bf16.gmra.mxu0 %v1405
      %v2131 = vpop.f32.mrf.mxu0
      %v2132 = vadd.f32 0.0, %v2131
      %v2133 = vpop.f32.mrf.mxu0
      %v2134 = vpop.f32.mrf.mxu0
      %v2135 = vadd.f32 0.0, %v2134
      %v2136 = vpop.f32.mrf.mxu0
      %2137 = vmatprep.mubr.bf16.mxu0 0
      %2138 = vmatmul.mubr.bf16.gmra.mxu0 %v1408
      %v2139 = vpop.f32.mrf.mxu0
      %v2140 = vadd.f32 0.0, %v2139
      %v2141 = vpop.f32.mrf.mxu0
      %v2142 = vpop.f32.mrf.mxu0
      %v2143 = vadd.f32 0.0, %v2142
      %v2144 = vpop.f32.mrf.mxu0
      %2145 = vmatprep.mubr.bf16.mxu0 0
      %2146 = vmatmul.mubr.bf16.gmra.mxu0 %v1411
      %v2147 = vpop.f32.mrf.mxu0
      %v2148 = vadd.f32 0.0, %v2147
      %v2149 = vpop.f32.mrf.mxu0
      %v2150 = vpop.f32.mrf.mxu0
      %v2151 = vadd.f32 0.0, %v2150
      %v2152 = vpop.f32.mrf.mxu0
      %2153 = vmatprep.mubr.bf16.mxu0 0
      %2154 = vmatmul.mubr.bf16.gmra.mxu0 %v1414
      %v2155 = vpop.f32.mrf.mxu0
      %v2156 = vadd.f32 0.0, %v2155
      %v2157 = vpop.f32.mrf.mxu0
      %v2158 = vpop.f32.mrf.mxu0
      %v2159 = vadd.f32 0.0, %v2158
      %v2160 = vpop.f32.mrf.mxu0
      %2161 = vmatprep.mubr.bf16.mxu0 0
      %2162 = vmatmul.mubr.bf16.gmra.mxu0 %v1417
      %v2163 = vpop.f32.mrf.mxu0
      %v2164 = vadd.f32 0.0, %v2163
      %v2165 = vpop.f32.mrf.mxu0
      %v2166 = vpop.f32.mrf.mxu0
      %v2167 = vadd.f32 0.0, %v2166
      %v2168 = vpop.f32.mrf.mxu0
      %2169 = vmatprep.mubr.bf16.mxu0 0
      %2170 = vmatmul.mubr.bf16.gmra.mxu0 %v1420
      %v2171 = vpop.f32.mrf.mxu0
      %v2172 = vadd.f32 0.0, %v2171
      %v2173 = vpop.f32.mrf.mxu0
      %v2174 = vpop.f32.mrf.mxu0
      %v2175 = vadd.f32 0.0, %v2174
      %v2176 = vpop.f32.mrf.mxu0
      %2177 = vmatprep.mubr.bf16.mxu0 0
      %2178 = vmatmul.mubr.bf16.gmra.mxu0 %v1423
      %v2179 = vpop.f32.mrf.mxu0
      %v2180 = vadd.f32 0.0, %v2179
      %v2181 = vpop.f32.mrf.mxu0
      %v2182 = vpop.f32.mrf.mxu0
      %v2183 = vadd.f32 0.0, %v2182
      %v2184 = vpop.f32.mrf.mxu0
      %2185 = vmatprep.mubr.bf16.mxu0 0
      %2186 = vmatmul.mubr.bf16.gmra.mxu0 %v1426
      %v2187 = vpop.f32.mrf.mxu0
      %v2188 = vadd.f32 0.0, %v2187
      %v2189 = vpop.f32.mrf.mxu0
      %v2190 = vpop.f32.mrf.mxu0
      %v2191 = vadd.f32 0.0, %v2190
      %v2192 = vpop.f32.mrf.mxu0
      %2193 = vmatprep.mubr.bf16.mxu0 0
      %2194 = vmatmul.mubr.bf16.gmra.mxu0 %v1429
      %v2195 = vpop.f32.mrf.mxu0
      %v2196 = vadd.f32 0.0, %v2195
      %v2197 = vpop.f32.mrf.mxu0
      %v2198 = vpop.f32.mrf.mxu0
      %v2199 = vadd.f32 0.0, %v2198
      %v2200 = vpop.f32.mrf.mxu0
      %2201 = vmatprep.mubr.bf16.mxu0 0
      %2202 = vmatmul.mubr.bf16.gmra.mxu0 %v1432
      %v2203 = vpop.f32.mrf.mxu0
      %v2204 = vadd.f32 0.0, %v2203
      %v2205 = vpop.f32.mrf.mxu0
      %v2206 = vpop.f32.mrf.mxu0
      %v2207 = vadd.f32 0.0, %v2206
      %v2208 = vpop.f32.mrf.mxu0
      %2209 = vmatprep.mubr.bf16.mxu0 0
      %2210 = vmatmul.mubr.bf16.gmra.mxu0 %v1435
      %v2211 = vpop.f32.mrf.mxu0
      %v2212 = vadd.f32 0.0, %v2211
      %v2213 = vpop.f32.mrf.mxu0
      %v2214 = vpop.f32.mrf.mxu0
      %v2215 = vadd.f32 0.0, %v2214
      %v2216 = vpop.f32.mrf.mxu0
      %2217 = vmatprep.mubr.bf16.mxu0 0
      %2218 = vmatmul.mubr.bf16.gmra.mxu0 %v1438
      %v2219 = vpop.f32.mrf.mxu0
      %v2220 = vadd.f32 0.0, %v2219
      %v2221 = vpop.f32.mrf.mxu0
      %v2222 = vpop.f32.mrf.mxu0
      %v2223 = vadd.f32 0.0, %v2222
      %v2224 = vpop.f32.mrf.mxu0
      %2225 = vmatprep.mubr.bf16.mxu0 0
      %2226 = vmatmul.mubr.bf16.gmra.mxu0 %v2068
      %v2227 = vpop.f32.mrf.mxu0
      %v2228 = vadd.f32 0.0, %v2227
      %v2229 = vpop.f32.mrf.mxu0
      %v2230 = vpop.f32.mrf.mxu0
      %v2231 = vadd.f32 0.0, %v2230
      %v2232 = vpop.f32.mrf.mxu0
      %2233 = vdwg.mxu0
      %v2234 = vadd.f32 %v2026, %v2108
      %v2235 = vadd.f32 %v2027, %v2111
      %v2236 = vadd.f32 %v2028, %v2116
      %v2237 = vadd.f32 %v2029, %v2119
      %v2238 = vadd.f32 %v2030, %v2124
      %v2239 = vadd.f32 %v2031, %v2127
      %v2240 = vadd.f32 %v2032, %v2132
      %v2241 = vadd.f32 %v2033, %v2135
      %v2242 = vadd.f32 %v2034, %v2140
      %v2243 = vadd.f32 %v2035, %v2143
      %v2244 = vadd.f32 %v2036, %v2148
      %v2245 = vadd.f32 %v2037, %v2151
      %v2246 = vadd.f32 %v2038, %v2156
      %v2247 = vadd.f32 %v2039, %v2159
      %v2248 = vadd.f32 %v2040, %v2164
      %v2249 = vadd.f32 %v2041, %v2167
      %v2250 = vadd.f32 %v2042, %v2172
      %v2251 = vadd.f32 %v2043, %v2175
      %v2252 = vadd.f32 %v2044, %v2180
      %v2253 = vadd.f32 %v2045, %v2183
      %v2254 = vadd.f32 %v2046, %v2188
      %v2255 = vadd.f32 %v2047, %v2191
      %v2256 = vadd.f32 %v2048, %v2196
      %v2257 = vadd.f32 %v2049, %v2199
      %v2258 = vadd.f32 %v2050, %v2204
      %v2259 = vadd.f32 %v2051, %v2207
      %v2260 = vadd.f32 %v2052, %v2212
      %v2261 = vadd.f32 %v2053, %v2215
      %v2262 = vadd.f32 %v2054, %v2220
      %v2263 = vadd.f32 %v2055, %v2223
      %v2264 = vadd.f32 %v2056, %v2228
      %v2265 = vadd.f32 %v2057, %v2231
      %v2266 = vshrl.u32 %v489, 16
      %v2268 = vrot.slane %v2266, 3
      %v2269 = vshll.u32 %v489, 16
      %v2271 = vrot.slane %v2269, 4
      %v2272 = vor.u32 %v2268, %v2271
      %v2273 = vshrl.u32 %v525, 16
      %v2275 = vrot.slane %v2273, 3
      %v2276 = vshll.u32 %v525, 16
      %v2278 = vrot.slane %v2276, 4
      %v2279 = vor.u32 %v2275, %v2278
      %v2280 = vsel %vm526, %v2272, %v2279
      %s2281 = scalar_lea.vmem %s1, 12
      %v2282 = vld [vmem:[%s2281] sm:$0x3]
      %v2284 = vsel %vm851, %v2280, 0
      %v2287 = vsel %vm900, %v2282, 0
      %2289 = vmatprep.subr.bf16.mxu0 0
      %2290 = vmatpush1.bf16.msra.mxu0 0
      %2291 = vmatprep.subr.bf16.mxu0 0
      %2292 = vmatpush1.bf16.msra.mxu0 0
      %2293 = vmatprep.subr.bf16.mxu0 0
      %2294 = vmatpush1.bf16.msra.mxu0 0
      %2295 = vmatprep.subr.bf16.mxu0 0
      %2296 = vmatpush1.bf16.msra.mxu0 0
      %2297 = vmatprep.subr.bf16.mxu0 0
      %2298 = vmatpush1.bf16.msra.mxu0 0
      %2299 = vmatprep.subr.bf16.mxu0 0
      %2300 = vmatpush1.bf16.msra.mxu0 0
      %2301 = vmatprep.subr.bf16.mxu0 0
      %2302 = vmatpush1.bf16.msra.mxu0 0
      %2303 = vmatprep.subr.bf16.mxu0 0
      %2304 = vmatpush1.bf16.msra.mxu0 %v2287
      %2305 = vmatprep.subr.bf16.mxu0 0
      %2306 = vmatpush2.bf16.msra.mxu0 0
      %2307 = vmatprep.subr.bf16.mxu0 0
      %2308 = vmatpush2.bf16.msra.mxu0 0
      %2309 = vmatprep.subr.bf16.mxu0 0
      %2310 = vmatpush2.bf16.msra.mxu0 0
      %2311 = vmatprep.subr.bf16.mxu0 0
      %2312 = vmatpush2.bf16.msra.mxu0 0
      %2313 = vmatprep.subr.bf16.mxu0 0
      %2314 = vmatpush2.bf16.msra.mxu0 0
      %2315 = vmatprep.subr.bf16.mxu0 0
      %2316 = vmatpush2.bf16.msra.mxu0 0
      %2317 = vmatprep.subr.bf16.mxu0 0
      %2318 = vmatpush2.bf16.msra.mxu0 0
      %2319 = vmatprep.subr.bf16.mxu0 0
      %2320 = vmatpush2.bf16.msra.mxu0 0
      %2321 = vmatprep.mubr.bf16.mxu0 0
      %2322 = vmatmul.mubr.bf16.gmra.mxu0 %v1072
      %v2323 = vpop.f32.mrf.mxu0
      %v2324 = vadd.f32 0.0, %v2323
      %v2325 = vpop.f32.mrf.mxu0
      %v2326 = vpop.f32.mrf.mxu0
      %v2327 = vadd.f32 0.0, %v2326
      %v2328 = vpop.f32.mrf.mxu0
      %2329 = vmatprep.mubr.bf16.mxu0 0
      %2330 = vmatmul.mubr.bf16.gmra.mxu0 %v1075
      %v2331 = vpop.f32.mrf.mxu0
      %v2332 = vadd.f32 0.0, %v2331
      %v2333 = vpop.f32.mrf.mxu0
      %v2334 = vpop.f32.mrf.mxu0
      %v2335 = vadd.f32 0.0, %v2334
      %v2336 = vpop.f32.mrf.mxu0
      %2337 = vmatprep.mubr.bf16.mxu0 0
      %2338 = vmatmul.mubr.bf16.gmra.mxu0 %v1078
      %v2339 = vpop.f32.mrf.mxu0
      %v2340 = vadd.f32 0.0, %v2339
      %v2341 = vpop.f32.mrf.mxu0
      %v2342 = vpop.f32.mrf.mxu0
      %v2343 = vadd.f32 0.0, %v2342
      %v2344 = vpop.f32.mrf.mxu0
      %2345 = vmatprep.mubr.bf16.mxu0 0
      %2346 = vmatmul.mubr.bf16.gmra.mxu0 %v1081
      %v2347 = vpop.f32.mrf.mxu0
      %v2348 = vadd.f32 0.0, %v2347
      %v2349 = vpop.f32.mrf.mxu0
      %v2350 = vpop.f32.mrf.mxu0
      %v2351 = vadd.f32 0.0, %v2350
      %v2352 = vpop.f32.mrf.mxu0
      %2353 = vmatprep.mubr.bf16.mxu0 0
      %2354 = vmatmul.mubr.bf16.gmra.mxu0 %v1084
      %v2355 = vpop.f32.mrf.mxu0
      %v2356 = vadd.f32 0.0, %v2355
      %v2357 = vpop.f32.mrf.mxu0
      %v2358 = vpop.f32.mrf.mxu0
      %v2359 = vadd.f32 0.0, %v2358
      %v2360 = vpop.f32.mrf.mxu0
      %2361 = vmatprep.mubr.bf16.mxu0 0
      %2362 = vmatmul.mubr.bf16.gmra.mxu0 %v1087
      %v2363 = vpop.f32.mrf.mxu0
      %v2364 = vadd.f32 0.0, %v2363
      %v2365 = vpop.f32.mrf.mxu0
      %v2366 = vpop.f32.mrf.mxu0
      %v2367 = vadd.f32 0.0, %v2366
      %v2368 = vpop.f32.mrf.mxu0
      %2369 = vmatprep.mubr.bf16.mxu0 0
      %2370 = vmatmul.mubr.bf16.gmra.mxu0 %v1090
      %v2371 = vpop.f32.mrf.mxu0
      %v2372 = vadd.f32 0.0, %v2371
      %v2373 = vpop.f32.mrf.mxu0
      %v2374 = vpop.f32.mrf.mxu0
      %v2375 = vadd.f32 0.0, %v2374
      %v2376 = vpop.f32.mrf.mxu0
      %2377 = vmatprep.mubr.bf16.mxu0 0
      %2378 = vmatmul.mubr.bf16.gmra.mxu0 %v1093
      %v2379 = vpop.f32.mrf.mxu0
      %v2380 = vadd.f32 0.0, %v2379
      %v2381 = vpop.f32.mrf.mxu0
      %v2382 = vpop.f32.mrf.mxu0
      %v2383 = vadd.f32 0.0, %v2382
      %v2384 = vpop.f32.mrf.mxu0
      %2385 = vmatprep.mubr.bf16.mxu0 0
      %2386 = vmatmul.mubr.bf16.gmra.mxu0 %v1096
      %v2387 = vpop.f32.mrf.mxu0
      %v2388 = vadd.f32 0.0, %v2387
      %v2389 = vpop.f32.mrf.mxu0
      %v2390 = vpop.f32.mrf.mxu0
      %v2391 = vadd.f32 0.0, %v2390
      %v2392 = vpop.f32.mrf.mxu0
      %2393 = vmatprep.mubr.bf16.mxu0 0
      %2394 = vmatmul.mubr.bf16.gmra.mxu0 %v1099
      %v2395 = vpop.f32.mrf.mxu0
      %v2396 = vadd.f32 0.0, %v2395
      %v2397 = vpop.f32.mrf.mxu0
      %v2398 = vpop.f32.mrf.mxu0
      %v2399 = vadd.f32 0.0, %v2398
      %v2400 = vpop.f32.mrf.mxu0
      %2401 = vmatprep.mubr.bf16.mxu0 0
      %2402 = vmatmul.mubr.bf16.gmra.mxu0 %v1102
      %v2403 = vpop.f32.mrf.mxu0
      %v2404 = vadd.f32 0.0, %v2403
      %v2405 = vpop.f32.mrf.mxu0
      %v2406 = vpop.f32.mrf.mxu0
      %v2407 = vadd.f32 0.0, %v2406
      %v2408 = vpop.f32.mrf.mxu0
      %2409 = vmatprep.mubr.bf16.mxu0 0
      %2410 = vmatmul.mubr.bf16.gmra.mxu0 %v1105
      %v2411 = vpop.f32.mrf.mxu0
      %v2412 = vadd.f32 0.0, %v2411
      %v2413 = vpop.f32.mrf.mxu0
      %v2414 = vpop.f32.mrf.mxu0
      %v2415 = vadd.f32 0.0, %v2414
      %v2416 = vpop.f32.mrf.mxu0
      %2417 = vmatprep.mubr.bf16.mxu0 0
      %2418 = vmatmul.mubr.bf16.gmra.mxu0 %v1108
      %v2419 = vpop.f32.mrf.mxu0
      %v2420 = vadd.f32 0.0, %v2419
      %v2421 = vpop.f32.mrf.mxu0
      %v2422 = vpop.f32.mrf.mxu0
      %v2423 = vadd.f32 0.0, %v2422
      %v2424 = vpop.f32.mrf.mxu0
      %2425 = vmatprep.mubr.bf16.mxu0 0
      %2426 = vmatmul.mubr.bf16.gmra.mxu0 %v1111
      %v2427 = vpop.f32.mrf.mxu0
      %v2428 = vadd.f32 0.0, %v2427
      %v2429 = vpop.f32.mrf.mxu0
      %v2430 = vpop.f32.mrf.mxu0
      %v2431 = vadd.f32 0.0, %v2430
      %v2432 = vpop.f32.mrf.mxu0
      %2433 = vmatprep.mubr.bf16.mxu0 0
      %2434 = vmatmul.mubr.bf16.gmra.mxu0 %v1654
      %v2435 = vpop.f32.mrf.mxu0
      %v2436 = vadd.f32 0.0, %v2435
      %v2437 = vpop.f32.mrf.mxu0
      %v2438 = vpop.f32.mrf.mxu0
      %v2439 = vadd.f32 0.0, %v2438
      %v2440 = vpop.f32.mrf.mxu0
      %2441 = vmatprep.mubr.bf16.mxu0 0
      %2442 = vmatmul.mubr.bf16.gmra.mxu0 %v2284
      %v2443 = vpop.f32.mrf.mxu0
      %v2444 = vadd.f32 0.0, %v2443
      %v2445 = vpop.f32.mrf.mxu0
      %v2446 = vpop.f32.mrf.mxu0
      %v2447 = vadd.f32 0.0, %v2446
      %v2448 = vpop.f32.mrf.mxu0
      %2449 = vdwg.mxu0
      %v2450 = vadd.f32 %v2234, %v2324
      %v2451 = vadd.f32 %v2235, %v2327
      %v2452 = vadd.f32 %v2236, %v2332
      %v2453 = vadd.f32 %v2237, %v2335
      %v2454 = vadd.f32 %v2238, %v2340
      %v2455 = vadd.f32 %v2239, %v2343
      %v2456 = vadd.f32 %v2240, %v2348
      %v2457 = vadd.f32 %v2241, %v2351
      %v2458 = vadd.f32 %v2242, %v2356
      %v2459 = vadd.f32 %v2243, %v2359
      %v2460 = vadd.f32 %v2244, %v2364
      %v2461 = vadd.f32 %v2245, %v2367
      %v2462 = vadd.f32 %v2246, %v2372
      %v2463 = vadd.f32 %v2247, %v2375
      %v2464 = vadd.f32 %v2248, %v2380
      %v2465 = vadd.f32 %v2249, %v2383
      %v2466 = vadd.f32 %v2250, %v2388
      %v2467 = vadd.f32 %v2251, %v2391
      %v2468 = vadd.f32 %v2252, %v2396
      %v2469 = vadd.f32 %v2253, %v2399
      %v2470 = vadd.f32 %v2254, %v2404
      %v2471 = vadd.f32 %v2255, %v2407
      %v2472 = vadd.f32 %v2256, %v2412
      %v2473 = vadd.f32 %v2257, %v2415
      %v2474 = vadd.f32 %v2258, %v2420
      %v2475 = vadd.f32 %v2259, %v2423
      %v2476 = vadd.f32 %v2260, %v2428
      %v2477 = vadd.f32 %v2261, %v2431
      %v2478 = vadd.f32 %v2262, %v2436
      %v2479 = vadd.f32 %v2263, %v2439
      %v2480 = vadd.f32 %v2264, %v2444
      %v2481 = vadd.f32 %v2265, %v2447
      %v2484 = vrot.slane %v489, 4
      %v2485 = vrot.slane %v525, 4
      %v2486 = vsel %vm800, %v2484, %v2485
      %s2487 = scalar_lea.vmem %s1, 14
      %v2488 = vld [vmem:[%s2487] sm:$0x3]
      %v2490 = vsel %vm851, %v2486, 0
      %v2493 = vsel %vm900, %v2488, 0
      %2495 = vmatprep.subr.bf16.mxu0 0
      %2496 = vmatpush1.bf16.msra.mxu0 0
      %2497 = vmatprep.subr.bf16.mxu0 0
      %2498 = vmatpush1.bf16.msra.mxu0 0
      %2499 = vmatprep.subr.bf16.mxu0 0
      %2500 = vmatpush1.bf16.msra.mxu0 0
      %2501 = vmatprep.subr.bf16.mxu0 0
      %2502 = vmatpush1.bf16.msra.mxu0 0
      %2503 = vmatprep.subr.bf16.mxu0 0
      %2504 = vmatpush1.bf16.msra.mxu0 0
      %2505 = vmatprep.subr.bf16.mxu0 0
      %2506 = vmatpush1.bf16.msra.mxu0 0
      %2507 = vmatprep.subr.bf16.mxu0 0
      %2508 = vmatpush1.bf16.msra.mxu0 0
      %2509 = vmatprep.subr.bf16.mxu0 0
      %2510 = vmatpush1.bf16.msra.mxu0 %v2493
      %2511 = vmatprep.subr.bf16.mxu0 0
      %2512 = vmatpush2.bf16.msra.mxu0 0
      %2513 = vmatprep.subr.bf16.mxu0 0
      %2514 = vmatpush2.bf16.msra.mxu0 0
      %2515 = vmatprep.subr.bf16.mxu0 0
      %2516 = vmatpush2.bf16.msra.mxu0 0
      %2517 = vmatprep.subr.bf16.mxu0 0
      %2518 = vmatpush2.bf16.msra.mxu0 0
      %2519 = vmatprep.subr.bf16.mxu0 0
      %2520 = vmatpush2.bf16.msra.mxu0 0
      %2521 = vmatprep.subr.bf16.mxu0 0
      %2522 = vmatpush2.bf16.msra.mxu0 0
      %2523 = vmatprep.subr.bf16.mxu0 0
      %2524 = vmatpush2.bf16.msra.mxu0 0
      %2525 = vmatprep.subr.bf16.mxu0 0
      %2526 = vmatpush2.bf16.msra.mxu0 0
      %2527 = vmatprep.mubr.bf16.mxu0 0
      %2528 = vmatmul.mubr.bf16.gmra.mxu0 %v859
      %v2529 = vpop.f32.mrf.mxu0
      %v2530 = vadd.f32 0.0, %v2529
      %v2531 = vpop.f32.mrf.mxu0
      %v2532 = vpop.f32.mrf.mxu0
      %v2533 = vadd.f32 0.0, %v2532
      %v2534 = vpop.f32.mrf.mxu0
      %2535 = vmatprep.mubr.bf16.mxu0 0
      %2536 = vmatmul.mubr.bf16.gmra.mxu0 %v862
      %v2537 = vpop.f32.mrf.mxu0
      %v2538 = vadd.f32 0.0, %v2537
      %v2539 = vpop.f32.mrf.mxu0
      %v2540 = vpop.f32.mrf.mxu0
      %v2541 = vadd.f32 0.0, %v2540
      %v2542 = vpop.f32.mrf.mxu0
      %2543 = vmatprep.mubr.bf16.mxu0 0
      %2544 = vmatmul.mubr.bf16.gmra.mxu0 %v865
      %v2545 = vpop.f32.mrf.mxu0
      %v2546 = vadd.f32 0.0, %v2545
      %v2547 = vpop.f32.mrf.mxu0
      %v2548 = vpop.f32.mrf.mxu0
      %v2549 = vadd.f32 0.0, %v2548
      %v2550 = vpop.f32.mrf.mxu0
      %2551 = vmatprep.mubr.bf16.mxu0 0
      %2552 = vmatmul.mubr.bf16.gmra.mxu0 %v868
      %v2553 = vpop.f32.mrf.mxu0
      %v2554 = vadd.f32 0.0, %v2553
      %v2555 = vpop.f32.mrf.mxu0
      %v2556 = vpop.f32.mrf.mxu0
      %v2557 = vadd.f32 0.0, %v2556
      %v2558 = vpop.f32.mrf.mxu0
      %2559 = vmatprep.mubr.bf16.mxu0 0
      %2560 = vmatmul.mubr.bf16.gmra.mxu0 %v871
      %v2561 = vpop.f32.mrf.mxu0
      %v2562 = vadd.f32 0.0, %v2561
      %v2563 = vpop.f32.mrf.mxu0
      %v2564 = vpop.f32.mrf.mxu0
      %v2565 = vadd.f32 0.0, %v2564
      %v2566 = vpop.f32.mrf.mxu0
      %2567 = vmatprep.mubr.bf16.mxu0 0
      %2568 = vmatmul.mubr.bf16.gmra.mxu0 %v874
      %v2569 = vpop.f32.mrf.mxu0
      %v2570 = vadd.f32 0.0, %v2569
      %v2571 = vpop.f32.mrf.mxu0
      %v2572 = vpop.f32.mrf.mxu0
      %v2573 = vadd.f32 0.0, %v2572
      %v2574 = vpop.f32.mrf.mxu0
      %2575 = vmatprep.mubr.bf16.mxu0 0
      %2576 = vmatmul.mubr.bf16.gmra.mxu0 %v877
      %v2577 = vpop.f32.mrf.mxu0
      %v2578 = vadd.f32 0.0, %v2577
      %v2579 = vpop.f32.mrf.mxu0
      %v2580 = vpop.f32.mrf.mxu0
      %v2581 = vadd.f32 0.0, %v2580
      %v2582 = vpop.f32.mrf.mxu0
      %2583 = vmatprep.mubr.bf16.mxu0 0
      %2584 = vmatmul.mubr.bf16.gmra.mxu0 %v880
      %v2585 = vpop.f32.mrf.mxu0
      %v2586 = vadd.f32 0.0, %v2585
      %v2587 = vpop.f32.mrf.mxu0
      %v2588 = vpop.f32.mrf.mxu0
      %v2589 = vadd.f32 0.0, %v2588
      %v2590 = vpop.f32.mrf.mxu0
      %2591 = vmatprep.mubr.bf16.mxu0 0
      %2592 = vmatmul.mubr.bf16.gmra.mxu0 %v883
      %v2593 = vpop.f32.mrf.mxu0
      %v2594 = vadd.f32 0.0, %v2593
      %v2595 = vpop.f32.mrf.mxu0
      %v2596 = vpop.f32.mrf.mxu0
      %v2597 = vadd.f32 0.0, %v2596
      %v2598 = vpop.f32.mrf.mxu0
      %2599 = vmatprep.mubr.bf16.mxu0 0
      %2600 = vmatmul.mubr.bf16.gmra.mxu0 %v886
      %v2601 = vpop.f32.mrf.mxu0
      %v2602 = vadd.f32 0.0, %v2601
      %v2603 = vpop.f32.mrf.mxu0
      %v2604 = vpop.f32.mrf.mxu0
      %v2605 = vadd.f32 0.0, %v2604
      %v2606 = vpop.f32.mrf.mxu0
      %2607 = vmatprep.mubr.bf16.mxu0 0
      %2608 = vmatmul.mubr.bf16.gmra.mxu0 %v889
      %v2609 = vpop.f32.mrf.mxu0
      %v2610 = vadd.f32 0.0, %v2609
      %v2611 = vpop.f32.mrf.mxu0
      %v2612 = vpop.f32.mrf.mxu0
      %v2613 = vadd.f32 0.0, %v2612
      %v2614 = vpop.f32.mrf.mxu0
      %2615 = vmatprep.mubr.bf16.mxu0 0
      %2616 = vmatmul.mubr.bf16.gmra.mxu0 %v892
      %v2617 = vpop.f32.mrf.mxu0
      %v2618 = vadd.f32 0.0, %v2617
      %v2619 = vpop.f32.mrf.mxu0
      %v2620 = vpop.f32.mrf.mxu0
      %v2621 = vadd.f32 0.0, %v2620
      %v2622 = vpop.f32.mrf.mxu0
      %2623 = vmatprep.mubr.bf16.mxu0 0
      %2624 = vmatmul.mubr.bf16.gmra.mxu0 %v895
      %v2625 = vpop.f32.mrf.mxu0
      %v2626 = vadd.f32 0.0, %v2625
      %v2627 = vpop.f32.mrf.mxu0
      %v2628 = vpop.f32.mrf.mxu0
      %v2629 = vadd.f32 0.0, %v2628
      %v2630 = vpop.f32.mrf.mxu0
      %2631 = vmatprep.mubr.bf16.mxu0 0
      %2632 = vmatmul.mubr.bf16.gmra.mxu0 %v898
      %v2633 = vpop.f32.mrf.mxu0
      %v2634 = vadd.f32 0.0, %v2633
      %v2635 = vpop.f32.mrf.mxu0
      %v2636 = vpop.f32.mrf.mxu0
      %v2637 = vadd.f32 0.0, %v2636
      %v2638 = vpop.f32.mrf.mxu0
      %2639 = vmatprep.mubr.bf16.mxu0 0
      %2640 = vmatmul.mubr.bf16.gmra.mxu0 %v1860
      %v2641 = vpop.f32.mrf.mxu0
      %v2642 = vadd.f32 0.0, %v2641
      %v2643 = vpop.f32.mrf.mxu0
      %v2644 = vpop.f32.mrf.mxu0
      %v2645 = vadd.f32 0.0, %v2644
      %v2646 = vpop.f32.mrf.mxu0
      %2647 = vmatprep.mubr.bf16.mxu0 0
      %2648 = vmatmul.mubr.bf16.gmra.mxu0 %v2490
      %v2649 = vpop.f32.mrf.mxu0
      %v2650 = vadd.f32 0.0, %v2649
      %v2651 = vpop.f32.mrf.mxu0
      %v2652 = vpop.f32.mrf.mxu0
      %v2653 = vadd.f32 0.0, %v2652
      %v2654 = vpop.f32.mrf.mxu0
      %2655 = vdwg.mxu0
      %v2656 = vadd.f32 %v2450, %v2530
      %v2657 = vadd.f32 %v2451, %v2533
      %v2658 = vadd.f32 %v2452, %v2538
      %v2659 = vadd.f32 %v2453, %v2541
      %v2660 = vadd.f32 %v2454, %v2546
      %v2661 = vadd.f32 %v2455, %v2549
      %v2662 = vadd.f32 %v2456, %v2554
      %v2663 = vadd.f32 %v2457, %v2557
      %v2664 = vadd.f32 %v2458, %v2562
      %v2665 = vadd.f32 %v2459, %v2565
      %v2666 = vadd.f32 %v2460, %v2570
      %v2667 = vadd.f32 %v2461, %v2573
      %v2668 = vadd.f32 %v2462, %v2578
      %v2669 = vadd.f32 %v2463, %v2581
      %v2670 = vadd.f32 %v2464, %v2586
      %v2671 = vadd.f32 %v2465, %v2589
      %v2672 = vadd.f32 %v2466, %v2594
      %v2673 = vadd.f32 %v2467, %v2597
      %v2674 = vadd.f32 %v2468, %v2602
      %v2675 = vadd.f32 %v2469, %v2605
      %v2676 = vadd.f32 %v2470, %v2610
      %v2677 = vadd.f32 %v2471, %v2613
      %v2678 = vadd.f32 %v2472, %v2618
      %v2679 = vadd.f32 %v2473, %v2621
      %v2680 = vadd.f32 %v2474, %v2626
      %v2681 = vadd.f32 %v2475, %v2629
      %v2682 = vadd.f32 %v2476, %v2634
      %v2683 = vadd.f32 %v2477, %v2637
      %v2684 = vadd.f32 %v2478, %v2642
      %v2685 = vadd.f32 %v2479, %v2645
      %v2686 = vadd.f32 %v2480, %v2650
      %v2687 = vadd.f32 %v2481, %v2653
      %v2688 = vrot.slane %v2266, 4
      %v2689 = vrot.slane %v2269, 5
      %v2690 = vor.u32 %v2688, %v2689
      %v2691 = vrot.slane %v2273, 4
      %v2692 = vrot.slane %v2276, 5
      %v2693 = vor.u32 %v2691, %v2692
      %v2694 = vsel %vm1277, %v2690, %v2693
      %s2695 = scalar_lea.vmem %s1, 16
      %v2696 = vld [vmem:[%s2695] sm:$0x3]
      %v2698 = vsel %vm851, %v2694, 0
      %v2701 = vsel %vm900, %v2696, 0
      %2703 = vmatprep.subr.bf16.mxu0 0
      %2704 = vmatpush1.bf16.msra.mxu0 0
      %2705 = vmatprep.subr.bf16.mxu0 0
      %2706 = vmatpush1.bf16.msra.mxu0 0
      %2707 = vmatprep.subr.bf16.mxu0 0
      %2708 = vmatpush1.bf16.msra.mxu0 0
      %2709 = vmatprep.subr.bf16.mxu0 0
      %2710 = vmatpush1.bf16.msra.mxu0 0
      %2711 = vmatprep.subr.bf16.mxu0 0
      %2712 = vmatpush1.bf16.msra.mxu0 0
      %2713 = vmatprep.subr.bf16.mxu0 0
      %2714 = vmatpush1.bf16.msra.mxu0 0
      %2715 = vmatprep.subr.bf16.mxu0 0
      %2716 = vmatpush1.bf16.msra.mxu0 0
      %2717 = vmatprep.subr.bf16.mxu0 0
      %2718 = vmatpush1.bf16.msra.mxu0 %v2701
      %2719 = vmatprep.subr.bf16.mxu0 0
      %2720 = vmatpush2.bf16.msra.mxu0 0
      %2721 = vmatprep.subr.bf16.mxu0 0
      %2722 = vmatpush2.bf16.msra.mxu0 0
      %2723 = vmatprep.subr.bf16.mxu0 0
      %2724 = vmatpush2.bf16.msra.mxu0 0
      %2725 = vmatprep.subr.bf16.mxu0 0
      %2726 = vmatpush2.bf16.msra.mxu0 0
      %2727 = vmatprep.subr.bf16.mxu0 0
      %2728 = vmatpush2.bf16.msra.mxu0 0
      %2729 = vmatprep.subr.bf16.mxu0 0
      %2730 = vmatpush2.bf16.msra.mxu0 0
      %2731 = vmatprep.subr.bf16.mxu0 0
      %2732 = vmatpush2.bf16.msra.mxu0 0
      %2733 = vmatprep.subr.bf16.mxu0 0
      %2734 = vmatpush2.bf16.msra.mxu0 0
      %2735 = vmatprep.mubr.bf16.mxu0 0
      %2736 = vmatmul.mubr.bf16.gmra.mxu0 %v1399
      %v2737 = vpop.f32.mrf.mxu0
      %v2738 = vadd.f32 0.0, %v2737
      %v2739 = vpop.f32.mrf.mxu0
      %v2740 = vpop.f32.mrf.mxu0
      %v2741 = vadd.f32 0.0, %v2740
      %v2742 = vpop.f32.mrf.mxu0
      %2743 = vmatprep.mubr.bf16.mxu0 0
      %2744 = vmatmul.mubr.bf16.gmra.mxu0 %v1402
      %v2745 = vpop.f32.mrf.mxu0
      %v2746 = vadd.f32 0.0, %v2745
      %v2747 = vpop.f32.mrf.mxu0
      %v2748 = vpop.f32.mrf.mxu0
      %v2749 = vadd.f32 0.0, %v2748
      %v2750 = vpop.f32.mrf.mxu0
      %2751 = vmatprep.mubr.bf16.mxu0 0
      %2752 = vmatmul.mubr.bf16.gmra.mxu0 %v1405
      %v2753 = vpop.f32.mrf.mxu0
      %v2754 = vadd.f32 0.0, %v2753
      %v2755 = vpop.f32.mrf.mxu0
      %v2756 = vpop.f32.mrf.mxu0
      %v2757 = vadd.f32 0.0, %v2756
      %v2758 = vpop.f32.mrf.mxu0
      %2759 = vmatprep.mubr.bf16.mxu0 0
      %2760 = vmatmul.mubr.bf16.gmra.mxu0 %v1408
      %v2761 = vpop.f32.mrf.mxu0
      %v2762 = vadd.f32 0.0, %v2761
      %v2763 = vpop.f32.mrf.mxu0
      %v2764 = vpop.f32.mrf.mxu0
      %v2765 = vadd.f32 0.0, %v2764
      %v2766 = vpop.f32.mrf.mxu0
      %2767 = vmatprep.mubr.bf16.mxu0 0
      %2768 = vmatmul.mubr.bf16.gmra.mxu0 %v1411
      %v2769 = vpop.f32.mrf.mxu0
      %v2770 = vadd.f32 0.0, %v2769
      %v2771 = vpop.f32.mrf.mxu0
      %v2772 = vpop.f32.mrf.mxu0
      %v2773 = vadd.f32 0.0, %v2772
      %v2774 = vpop.f32.mrf.mxu0
      %2775 = vmatprep.mubr.bf16.mxu0 0
      %2776 = vmatmul.mubr.bf16.gmra.mxu0 %v1414
      %v2777 = vpop.f32.mrf.mxu0
      %v2778 = vadd.f32 0.0, %v2777
      %v2779 = vpop.f32.mrf.mxu0
      %v2780 = vpop.f32.mrf.mxu0
      %v2781 = vadd.f32 0.0, %v2780
      %v2782 = vpop.f32.mrf.mxu0
      %2783 = vmatprep.mubr.bf16.mxu0 0
      %2784 = vmatmul.mubr.bf16.gmra.mxu0 %v1417
      %v2785 = vpop.f32.mrf.mxu0
      %v2786 = vadd.f32 0.0, %v2785
      %v2787 = vpop.f32.mrf.mxu0
      %v2788 = vpop.f32.mrf.mxu0
      %v2789 = vadd.f32 0.0, %v2788
      %v2790 = vpop.f32.mrf.mxu0
      %2791 = vmatprep.mubr.bf16.mxu0 0
      %2792 = vmatmul.mubr.bf16.gmra.mxu0 %v1420
      %v2793 = vpop.f32.mrf.mxu0
      %v2794 = vadd.f32 0.0, %v2793
      %v2795 = vpop.f32.mrf.mxu0
      %v2796 = vpop.f32.mrf.mxu0
      %v2797 = vadd.f32 0.0, %v2796
      %v2798 = vpop.f32.mrf.mxu0
      %2799 = vmatprep.mubr.bf16.mxu0 0
      %2800 = vmatmul.mubr.bf16.gmra.mxu0 %v1423
      %v2801 = vpop.f32.mrf.mxu0
      %v2802 = vadd.f32 0.0, %v2801
      %v2803 = vpop.f32.mrf.mxu0
      %v2804 = vpop.f32.mrf.mxu0
      %v2805 = vadd.f32 0.0, %v2804
      %v2806 = vpop.f32.mrf.mxu0
      %2807 = vmatprep.mubr.bf16.mxu0 0
      %2808 = vmatmul.mubr.bf16.gmra.mxu0 %v1426
      %v2809 = vpop.f32.mrf.mxu0
      %v2810 = vadd.f32 0.0, %v2809
      %v2811 = vpop.f32.mrf.mxu0
      %v2812 = vpop.f32.mrf.mxu0
      %v2813 = vadd.f32 0.0, %v2812
      %v2814 = vpop.f32.mrf.mxu0
      %2815 = vmatprep.mubr.bf16.mxu0 0
      %2816 = vmatmul.mubr.bf16.gmra.mxu0 %v1429
      %v2817 = vpop.f32.mrf.mxu0
      %v2818 = vadd.f32 0.0, %v2817
      %v2819 = vpop.f32.mrf.mxu0
      %v2820 = vpop.f32.mrf.mxu0
      %v2821 = vadd.f32 0.0, %v2820
      %v2822 = vpop.f32.mrf.mxu0
      %2823 = vmatprep.mubr.bf16.mxu0 0
      %2824 = vmatmul.mubr.bf16.gmra.mxu0 %v1432
      %v2825 = vpop.f32.mrf.mxu0
      %v2826 = vadd.f32 0.0, %v2825
      %v2827 = vpop.f32.mrf.mxu0
      %v2828 = vpop.f32.mrf.mxu0
      %v2829 = vadd.f32 0.0, %v2828
      %v2830 = vpop.f32.mrf.mxu0
      %2831 = vmatprep.mubr.bf16.mxu0 0
      %2832 = vmatmul.mubr.bf16.gmra.mxu0 %v1435
      %v2833 = vpop.f32.mrf.mxu0
      %v2834 = vadd.f32 0.0, %v2833
      %v2835 = vpop.f32.mrf.mxu0
      %v2836 = vpop.f32.mrf.mxu0
      %v2837 = vadd.f32 0.0, %v2836
      %v2838 = vpop.f32.mrf.mxu0
      %2839 = vmatprep.mubr.bf16.mxu0 0
      %2840 = vmatmul.mubr.bf16.gmra.mxu0 %v1438
      %v2841 = vpop.f32.mrf.mxu0
      %v2842 = vadd.f32 0.0, %v2841
      %v2843 = vpop.f32.mrf.mxu0
      %v2844 = vpop.f32.mrf.mxu0
      %v2845 = vadd.f32 0.0, %v2844
      %v2846 = vpop.f32.mrf.mxu0
      %2847 = vmatprep.mubr.bf16.mxu0 0
      %2848 = vmatmul.mubr.bf16.gmra.mxu0 %v2068
      %v2849 = vpop.f32.mrf.mxu0
      %v2850 = vadd.f32 0.0, %v2849
      %v2851 = vpop.f32.mrf.mxu0
      %v2852 = vpop.f32.mrf.mxu0
      %v2853 = vadd.f32 0.0, %v2852
      %v2854 = vpop.f32.mrf.mxu0
      %2855 = vmatprep.mubr.bf16.mxu0 0
      %2856 = vmatmul.mubr.bf16.gmra.mxu0 %v2698
      %v2857 = vpop.f32.mrf.mxu0
      %v2858 = vadd.f32 0.0, %v2857
      %v2859 = vpop.f32.mrf.mxu0
      %v2860 = vpop.f32.mrf.mxu0
      %v2861 = vadd.f32 0.0, %v2860
      %v2862 = vpop.f32.mrf.mxu0
      %2863 = vdwg.mxu0
      %v2864 = vadd.f32 %v2656, %v2738
      %v2865 = vadd.f32 %v2657, %v2741
      %v2866 = vadd.f32 %v2658, %v2746
      %v2867 = vadd.f32 %v2659, %v2749
      %v2868 = vadd.f32 %v2660, %v2754
      %v2869 = vadd.f32 %v2661, %v2757
      %v2870 = vadd.f32 %v2662, %v2762
      %v2871 = vadd.f32 %v2663, %v2765
      %v2872 = vadd.f32 %v2664, %v2770
      %v2873 = vadd.f32 %v2665, %v2773
      %v2874 = vadd.f32 %v2666, %v2778
      %v2875 = vadd.f32 %v2667, %v2781
      %v2876 = vadd.f32 %v2668, %v2786
      %v2877 = vadd.f32 %v2669, %v2789
      %v2878 = vadd.f32 %v2670, %v2794
      %v2879 = vadd.f32 %v2671, %v2797
      %v2880 = vadd.f32 %v2672, %v2802
      %v2881 = vadd.f32 %v2673, %v2805
      %v2882 = vadd.f32 %v2674, %v2810
      %v2883 = vadd.f32 %v2675, %v2813
      %v2884 = vadd.f32 %v2676, %v2818
      %v2885 = vadd.f32 %v2677, %v2821
      %v2886 = vadd.f32 %v2678, %v2826
      %v2887 = vadd.f32 %v2679, %v2829
      %v2888 = vadd.f32 %v2680, %v2834
      %v2889 = vadd.f32 %v2681, %v2837
      %v2890 = vadd.f32 %v2682, %v2842
      %v2891 = vadd.f32 %v2683, %v2845
      %v2892 = vadd.f32 %v2684, %v2850
      %v2893 = vadd.f32 %v2685, %v2853
      %v2894 = vadd.f32 %v2686, %v2858
      %v2895 = vadd.f32 %v2687, %v2861
      %v2896 = vld [vmem:[%s2] sm:$0x1]
      %v2898 = vlaneseq
      %v2899 = vshrl.u32 %v2898, 7
      %v2900 = vsub.s32 0, %v2899
      %v2901 = vrot.slane %v2896, %v2900
      %v2903 = vadd.f32 %v2864, %v2901
      %v2904 = vadd.f32 %v2865, %v2901
      %v2905 = vadd.f32 %v2866, %v2901
      %v2906 = vadd.f32 %v2867, %v2901
      %v2907 = vadd.f32 %v2868, %v2901
      %v2908 = vadd.f32 %v2869, %v2901
      %v2909 = vadd.f32 %v2870, %v2901
      %v2910 = vadd.f32 %v2871, %v2901
      %v2911 = vadd.f32 %v2872, %v2901
      %v2912 = vadd.f32 %v2873, %v2901
      %v2913 = vadd.f32 %v2874, %v2901
      %v2914 = vadd.f32 %v2875, %v2901
      %v2915 = vadd.f32 %v2876, %v2901
      %v2916 = vadd.f32 %v2877, %v2901
      %v2917 = vadd.f32 %v2878, %v2901
      %v2918 = vadd.f32 %v2879, %v2901
      %v2919 = vadd.f32 %v2880, %v2901
      %v2920 = vadd.f32 %v2881, %v2901
      %v2921 = vadd.f32 %v2882, %v2901
      %v2922 = vadd.f32 %v2883, %v2901
      %v2923 = vadd.f32 %v2884, %v2901
      %v2924 = vadd.f32 %v2885, %v2901
      %v2925 = vadd.f32 %v2886, %v2901
      %v2926 = vadd.f32 %v2887, %v2901
      %v2927 = vadd.f32 %v2888, %v2901
      %v2928 = vadd.f32 %v2889, %v2901
      %v2929 = vadd.f32 %v2890, %v2901
      %v2930 = vadd.f32 %v2891, %v2901
      %v2931 = vadd.f32 %v2892, %v2901
      %v2932 = vadd.f32 %v2893, %v2901
      %v2933 = vadd.f32 %v2894, %v2901
      %v2934 = vadd.f32 %v2895, %v2901
      %v2935 = vpack.c.bf16 %v2904, %v2903
      %v2936 = vpack.c.bf16 %v2906, %v2905
      %v2937 = vpack.c.bf16 %v2908, %v2907
      %v2938 = vpack.c.bf16 %v2910, %v2909
      %v2939 = vpack.c.bf16 %v2912, %v2911
      %v2940 = vpack.c.bf16 %v2914, %v2913
      %v2941 = vpack.c.bf16 %v2916, %v2915
      %v2942 = vpack.c.bf16 %v2918, %v2917
      %v2943 = vpack.c.bf16 %v2920, %v2919
      %v2944 = vpack.c.bf16 %v2922, %v2921
      %v2945 = vpack.c.bf16 %v2924, %v2923
      %v2946 = vpack.c.bf16 %v2926, %v2925
      %v2947 = vpack.c.bf16 %v2928, %v2927
      %v2948 = vpack.c.bf16 %v2930, %v2929
      %v2949 = vpack.c.bf16 %v2932, %v2931
      %v2950 = vpack.c.bf16 %v2934, %v2933
      %v2967 = vunpack.c.l.b16 %v2935
      %v2968 = vunpack.c.h.b16 %v2935
      %v2969 = vunpack.c.l.b16 %v2936
      %v2970 = vunpack.c.h.b16 %v2936
      %v2971 = vunpack.c.l.b16 %v2937
      %v2972 = vunpack.c.h.b16 %v2937
      %v2973 = vunpack.c.l.b16 %v2938
      %v2974 = vunpack.c.h.b16 %v2938
      %v2975 = vunpack.c.l.b16 %v2939
      %v2976 = vunpack.c.h.b16 %v2939
      %v2977 = vunpack.c.l.b16 %v2940
      %v2978 = vunpack.c.h.b16 %v2940
      %v2979 = vunpack.c.l.b16 %v2941
      %v2980 = vunpack.c.h.b16 %v2941
      %v2981 = vunpack.c.l.b16 %v2942
      %v2982 = vunpack.c.h.b16 %v2942
      %v2983 = vunpack.c.l.b16 %v2943
      %v2984 = vunpack.c.h.b16 %v2943
      %v2985 = vunpack.c.l.b16 %v2944
      %v2986 = vunpack.c.h.b16 %v2944
      %v2987 = vunpack.c.l.b16 %v2945
      %v2988 = vunpack.c.h.b16 %v2945
      %v2989 = vunpack.c.l.b16 %v2946
      %v2990 = vunpack.c.h.b16 %v2946
      %v2991 = vunpack.c.l.b16 %v2947
      %v2992 = vunpack.c.h.b16 %v2947
      %v2993 = vunpack.c.l.b16 %v2948
      %v2994 = vunpack.c.h.b16 %v2948
      %v2995 = vunpack.c.l.b16 %v2949
      %v2996 = vunpack.c.h.b16 %v2949
      %v2997 = vunpack.c.l.b16 %v2950
      %v2998 = vunpack.c.h.b16 %v2950
      %v2999 = vpack.c.b16 %v2967, %v2967
      %v3000 = vpack.c.b16 %v2968, %v2968
      %v3001 = vpack.c.b16 %v2969, %v2969
      %v3002 = vpack.c.b16 %v2970, %v2970
      %v3003 = vpack.c.b16 %v2971, %v2971
      %v3004 = vpack.c.b16 %v2972, %v2972
      %v3005 = vpack.c.b16 %v2973, %v2973
      %v3006 = vpack.c.b16 %v2974, %v2974
      %v3007 = vpack.c.b16 %v2975, %v2975
      %v3008 = vpack.c.b16 %v2976, %v2976
      %v3009 = vpack.c.b16 %v2977, %v2977
      %v3010 = vpack.c.b16 %v2978, %v2978
      %v3011 = vpack.c.b16 %v2979, %v2979
      %v3012 = vpack.c.b16 %v2980, %v2980
      %v3013 = vpack.c.b16 %v2981, %v2981
      %v3014 = vpack.c.b16 %v2982, %v2982
      %v3015 = vpack.c.b16 %v2983, %v2983
      %v3016 = vpack.c.b16 %v2984, %v2984
      %v3017 = vpack.c.b16 %v2985, %v2985
      %v3018 = vpack.c.b16 %v2986, %v2986
      %v3019 = vpack.c.b16 %v2987, %v2987
      %v3020 = vpack.c.b16 %v2988, %v2988
      %v3021 = vpack.c.b16 %v2989, %v2989
      %v3022 = vpack.c.b16 %v2990, %v2990
      %v3023 = vpack.c.b16 %v2991, %v2991
      %v3024 = vpack.c.b16 %v2992, %v2992
      %v3025 = vpack.c.b16 %v2993, %v2993
      %v3026 = vpack.c.b16 %v2994, %v2994
      %v3027 = vpack.c.b16 %v2995, %v2995
      %v3028 = vpack.c.b16 %v2996, %v2996
      %v3029 = vpack.c.b16 %v2997, %v2997
      %v3030 = vpack.c.b16 %v2998, %v2998
      %3063 = vst [vmem:[%s269] sm:$0xf] %v2999
      %3064 = vst [vmem:[%s269 + $0x4] sm:$0xf] %v3000
      %3065 = vst [vmem:[%s269 + $0x8] sm:$0xf] %v3001
      %3066 = vst [vmem:[%s269 + $0xc] sm:$0xf] %v3002
      %3067 = vst [vmem:[%s269 + $0x10] sm:$0xf] %v3003
      %3068 = vst [vmem:[%s269 + $0x14] sm:$0xf] %v3004
      %3069 = vst [vmem:[%s269 + $0x18] sm:$0xf] %v3005
      %3070 = vst [vmem:[%s269 + $0x1c] sm:$0xf] %v3006
      %3071 = vst [vmem:[%s269 + $0x20] sm:$0xf] %v3007
      %3072 = vst [vmem:[%s269 + $0x24] sm:$0xf] %v3008
      %3073 = vst [vmem:[%s269 + $0x28] sm:$0xf] %v3009
      %3074 = vst [vmem:[%s269 + $0x2c] sm:$0xf] %v3010
      %3075 = vst [vmem:[%s269 + $0x30] sm:$0xf] %v3011
      %3076 = vst [vmem:[%s269 + $0x34] sm:$0xf] %v3012
      %3077 = vst [vmem:[%s269 + $0x38] sm:$0xf] %v3013
      %3078 = vst [vmem:[%s269 + $0x3c] sm:$0xf] %v3014
      %3079 = vst [vmem:[%s269 + $0x40] sm:$0xf] %v3015
      %3080 = vst [vmem:[%s269 + $0x44] sm:$0xf] %v3016
      %3081 = vst [vmem:[%s269 + $0x48] sm:$0xf] %v3017
      %3082 = vst [vmem:[%s269 + $0x4c] sm:$0xf] %v3018
      %3083 = vst [vmem:[%s269 + $0x50] sm:$0xf] %v3019
      %3084 = vst [vmem:[%s269 + $0x54] sm:$0xf] %v3020
      %3085 = vst [vmem:[%s269 + $0x58] sm:$0xf] %v3021
      %3086 = vst [vmem:[%s269 + $0x5c] sm:$0xf] %v3022
      %3087 = vst [vmem:[%s269 + $0x60] sm:$0xf] %v3023
      %3088 = vst [vmem:[%s269 + $0x64] sm:$0xf] %v3024
      %3089 = vst [vmem:[%s269 + $0x68] sm:$0xf] %v3025
      %3090 = vst [vmem:[%s269 + $0x6c] sm:$0xf] %v3026
      %3091 = vst [vmem:[%s269 + $0x70] sm:$0xf] %v3027
      %3092 = vst [vmem:[%s269 + $0x74] sm:$0xf] %v3028
      %3093 = vst [vmem:[%s269 + $0x78] sm:$0xf] %v3029
      %3094 = vst [vmem:[%s269 + $0x7c] sm:$0xf] %v3030
      %v3095 = vadd.f32 %v2903, %v2904
      %v3096 = vadd.f32 %v3095, %v2905
      %v3097 = vadd.f32 %v3096, %v2906
      %v3098 = vadd.f32 %v3097, %v2907
      %v3099 = vadd.f32 %v3098, %v2908
      %v3100 = vadd.f32 %v3099, %v2909
      %v3101 = vadd.f32 %v3100, %v2910
      %v3102 = vadd.f32 %v3101, %v2911
      %v3103 = vadd.f32 %v3102, %v2912
      %v3104 = vadd.f32 %v3103, %v2913
      %v3105 = vadd.f32 %v3104, %v2914
      %v3106 = vadd.f32 %v3105, %v2915
      %v3107 = vadd.f32 %v3106, %v2916
      %v3108 = vadd.f32 %v3107, %v2917
      %v3109 = vadd.f32 %v3108, %v2918
      %v3110 = vadd.f32 %v3109, %v2919
      %v3111 = vadd.f32 %v3110, %v2920
      %v3112 = vadd.f32 %v3111, %v2921
      %v3113 = vadd.f32 %v3112, %v2922
      %v3114 = vadd.f32 %v3113, %v2923
      %v3115 = vadd.f32 %v3114, %v2924
      %v3116 = vadd.f32 %v3115, %v2925
      %v3117 = vadd.f32 %v3116, %v2926
      %v3118 = vadd.f32 %v3117, %v2927
      %v3119 = vadd.f32 %v3118, %v2928
      %v3120 = vadd.f32 %v3119, %v2929
      %v3121 = vadd.f32 %v3120, %v2930
      %v3122 = vadd.f32 %v3121, %v2931
      %v3123 = vadd.f32 %v3122, %v2932
      %v3124 = vadd.f32 %v3123, %v2933
      %v3125 = vadd.f32 %v3124, %v2934
      %v3126 = vrot.slane %v3125, 4
      %v3127 = vadd.f32 %v3125, %v3126
      %v3128 = vrot.slane %v3127, 2
      %v3129 = vadd.f32 %v3127, %v3128
      %v3130 = vrot.slane %v3129, 1
      %v3131 = vadd.f32 %v3129, %v3130
      %3132 = vst [vmem:[%s276] sm:$0x1] %v3131
      %v3133 = vmul.f32 %v2903, %v2903
      %v3134 = vmul.f32 %v2904, %v2904
      %v3135 = vmul.f32 %v2905, %v2905
      %v3136 = vmul.f32 %v2906, %v2906
      %v3137 = vmul.f32 %v2907, %v2907
      %v3138 = vmul.f32 %v2908, %v2908
      %v3139 = vmul.f32 %v2909, %v2909
      %v3140 = vmul.f32 %v2910, %v2910
      %v3141 = vmul.f32 %v2911, %v2911
      %v3142 = vmul.f32 %v2912, %v2912
      %v3143 = vmul.f32 %v2913, %v2913
      %v3144 = vmul.f32 %v2914, %v2914
      %v3145 = vmul.f32 %v2915, %v2915
      %v3146 = vmul.f32 %v2916, %v2916
      %v3147 = vmul.f32 %v2917, %v2917
      %v3148 = vmul.f32 %v2918, %v2918
      %v3149 = vmul.f32 %v2919, %v2919
      %v3150 = vmul.f32 %v2920, %v2920
      %v3151 = vmul.f32 %v2921, %v2921
      %v3152 = vmul.f32 %v2922, %v2922
      %v3153 = vmul.f32 %v2923, %v2923
      %v3154 = vmul.f32 %v2924, %v2924
      %v3155 = vmul.f32 %v2925, %v2925
      %v3156 = vmul.f32 %v2926, %v2926
      %v3157 = vmul.f32 %v2927, %v2927
      %v3158 = vmul.f32 %v2928, %v2928
      %v3159 = vmul.f32 %v2929, %v2929
      %v3160 = vmul.f32 %v2930, %v2930
      %v3161 = vmul.f32 %v2931, %v2931
      %v3162 = vmul.f32 %v2932, %v2932
      %v3163 = vmul.f32 %v2933, %v2933
      %v3164 = vmul.f32 %v2934, %v2934
      %v3165 = vadd.f32 %v3133, %v3134
      %v3166 = vadd.f32 %v3165, %v3135
      %v3167 = vadd.f32 %v3166, %v3136
      %v3168 = vadd.f32 %v3167, %v3137
      %v3169 = vadd.f32 %v3168, %v3138
      %v3170 = vadd.f32 %v3169, %v3139
      %v3171 = vadd.f32 %v3170, %v3140
      %v3172 = vadd.f32 %v3171, %v3141
      %v3173 = vadd.f32 %v3172, %v3142
      %v3174 = vadd.f32 %v3173, %v3143
      %v3175 = vadd.f32 %v3174, %v3144
      %v3176 = vadd.f32 %v3175, %v3145
      %v3177 = vadd.f32 %v3176, %v3146
      %v3178 = vadd.f32 %v3177, %v3147
      %v3179 = vadd.f32 %v3178, %v3148
      %v3180 = vadd.f32 %v3179, %v3149
      %v3181 = vadd.f32 %v3180, %v3150
      %v3182 = vadd.f32 %v3181, %v3151
      %v3183 = vadd.f32 %v3182, %v3152
      %v3184 = vadd.f32 %v3183, %v3153
      %v3185 = vadd.f32 %v3184, %v3154
      %v3186 = vadd.f32 %v3185, %v3155
      %v3187 = vadd.f32 %v3186, %v3156
      %v3188 = vadd.f32 %v3187, %v3157
      %v3189 = vadd.f32 %v3188, %v3158
      %v3190 = vadd.f32 %v3189, %v3159
      %v3191 = vadd.f32 %v3190, %v3160
      %v3192 = vadd.f32 %v3191, %v3161
      %v3193 = vadd.f32 %v3192, %v3162
      %v3194 = vadd.f32 %v3193, %v3163
      %v3195 = vadd.f32 %v3194, %v3164
      %v3196 = vrot.slane %v3195, 4
      %v3197 = vadd.f32 %v3195, %v3196
      %v3198 = vrot.slane %v3197, 2
      %v3199 = vadd.f32 %v3197, %v3198
      %v3200 = vrot.slane %v3199, 1
      %v3201 = vadd.f32 %v3199, %v3200
      %3202 = vst [vmem:[%s282] sm:$0x1] %v3201
      %s3203 = smul.u32 16, %s22
      %p3204 = scmp.lt.s32.totalorder %s21, 1
      %s3205 = scalar_select %p3204, %s21, 1
      %p3206 = scmp.lt.s32.totalorder %s3203, 15
      %s3207 = scalar_select %p3206, %s3203, 15
      %s3208 = smul.addr %s3207, 2
      %s3209 = smul.addr %s3205, 32
      %s3210 = sadd.s32 %s3208, %s3209
      %s3211 = smul.addr %s3210, 4
      %s3212 = scalar_lea.vmem %s3, %s3211
      %p3213 = scmp.lt.s32.totalorder %s21, 1
      %s3214 = scalar_select %p3213, %s21, 1
      %p3215 = scmp.lt.s32.totalorder %s22, 0
      %s3216 = scalar_select %p3215, %s22, 0
      %s3217 = sadd.s32 %s3216, %s3214
      %s3218 = scalar_lea.vmem %s4, %s3217
      %p3219 = scmp.lt.s32.totalorder %s21, 1
      %s3220 = scalar_select %p3219, %s21, 1
      %p3221 = scmp.lt.s32.totalorder %s22, 0
      %s3222 = scalar_select %p3221, %s22, 0
      %s3223 = sadd.s32 %s3222, %s3220
      %s3224 = scalar_lea.vmem %s5, %s3223
      // Predicated region
      $region33: #{conv_block_forward.2} parent=31 // pred_check
        %p3225 = pneg %p117
      $region34: #{conv_block_forward.2} parent=31 // pred_check_branch
        %3227 = sbr.rel (%p3225) target = $region36
      $region35: #{conv_block_forward.2} parent=31 // pred_region
        %s3228 = smul.u32 16, %s22
      $region36: #{conv_block_forward.2} parent=31 // pred_fallthru
        _
      // Predicated region
      $region37: #{conv_block_forward.2} parent=31 // pred_check
        %p3229 = pneg %p145
      $region38: #{conv_block_forward.2} parent=31 // pred_check_branch
        %3231 = sbr.rel (%p3229) target = $region40
      $region39: #{conv_block_forward.2} parent=31 // pred_region
        _
      $region40: #{conv_block_forward.2} parent=31 // pred_fallthru
        _
      // Predicated region
      $region41: #{conv_block_forward.2} parent=31 // pred_check
        %p3232 = pneg %p173
      $region42: #{conv_block_forward.2} parent=31 // pred_check_branch
        %3234 = sbr.rel (%p3232) target = $region44
      $region43: #{conv_block_forward.2} parent=31 // pred_region
        _
      $region44: #{conv_block_forward.2} parent=31 // pred_fallthru
        _
    $region32: #{conv_block_forward.2} parent=5 // pred_fallthru
      _
    %p3235 = scmp.le.s32.totalorder 2, %s12
    // Predicated region
    $region45: #{conv_block_forward.2} parent=5 // pred_check
      %p3236 = pneg %p3235
    $region46: #{conv_block_forward.2} parent=5 // pred_check_branch
      %3238 = sbr.rel (%p3236) target = $region48
    $region47: #{conv_block_forward.2} parent=5 // pred_region
      %s3239 = ssub.s32 %s12, 2
      // Predicated region
      $region49: #{conv_block_forward.2} parent=47 // pred_check
        %p3240 = pneg %p123
      $region50: #{conv_block_forward.2} parent=47 // pred_check_branch
        %3242 = sbr.rel (%p3240) target = $region52
      $region51: #{conv_block_forward.2} parent=47 // pred_region
        %s3243 = smul.u32 16, %s24
        %p3244 = scmp.lt.s32.totalorder %s23, 1
        %s3245 = scalar_select %p3244, %s23, 1
        %p3246 = scmp.lt.s32.totalorder %s3243, 15
        %s3247 = scalar_select %p3246, %s3243, 15
        %s3248 = smul.addr %s3247, 2
        %s3249 = smul.addr %s3245, 32
        %s3250 = sadd.s32 %s3248, %s3249
        %s3251 = smul.addr %s3250, 4
        %s3252 = scalar_lea.vmem %s3, %s3251
      $region52: #{conv_block_forward.2} parent=47 // pred_fallthru
        _
      // Predicated region
      $region53: #{conv_block_forward.2} parent=47 // pred_check
        %p3253 = pneg %p151
      $region54: #{conv_block_forward.2} parent=47 // pred_check_branch
        %3255 = sbr.rel (%p3253) target = $region56
      $region55: #{conv_block_forward.2} parent=47 // pred_region
        %p3256 = scmp.lt.s32.totalorder %s23, 1
        %s3257 = scalar_select %p3256, %s23, 1
        %p3258 = scmp.lt.s32.totalorder %s24, 0
        %s3259 = scalar_select %p3258, %s24, 0
        %s3260 = sadd.s32 %s3259, %s3257
        %s3261 = scalar_lea.vmem %s4, %s3260
      $region56: #{conv_block_forward.2} parent=47 // pred_fallthru
        _
      // Predicated region
      $region57: #{conv_block_forward.2} parent=47 // pred_check
        %p3262 = pneg %p179
      $region58: #{conv_block_forward.2} parent=47 // pred_check_branch
        %3264 = sbr.rel (%p3262) target = $region60
      $region59: #{conv_block_forward.2} parent=47 // pred_region
        %p3265 = scmp.lt.s32.totalorder %s23, 1
        %s3266 = scalar_select %p3265, %s23, 1
        %p3267 = scmp.lt.s32.totalorder %s24, 0
        %s3268 = scalar_select %p3267, %s24, 0
        %s3269 = sadd.s32 %s3268, %s3266
        %s3270 = scalar_lea.vmem %s5, %s3269
      $region60: #{conv_block_forward.2} parent=47 // pred_fallthru
        _
    $region48: #{conv_block_forward.2} parent=5 // pred_fallthru
      _
  $region6: #{conv_block_forward.2} parent=0 // loop_footer
    %s16 = sadd.s32 1, %s12
  $region7: #{conv_block_forward.2} parent=0 // loop_footer_branch
    %11 = sbr.rel target = $region3
  $region8: #{conv_block_forward.2} parent=0 // loop_exit
    _

</llo_original>
